<compile_context>
chip_gen: v7x
topology: tpu7x:2x2x1
jax: 0.10.0
libtpu: 0.0.40
codegen_flags: <defaults>
</compile_context>

<pallas_src>
import math

import jax
import jax.numpy as jnp
from jax.experimental import pallas as pl
from jax.experimental.pallas import tpu as pltpu  # noqa: F401  (kept for TPU-specific tuning)

# ------------------------- config (small synthetic BERT) -------------------------
VOCAB = 128
HIDDEN = 64
NUM_LAYERS = 2
NUM_HEADS = 2
HEAD_DIM = HIDDEN // NUM_HEADS
INTERMEDIATE = 128
MAX_POS = 16
MAX_LEN = 8          # seq length == max_len (the reference forward requires this)
MAX_STEP = 2
BATCH = 2
BS = BATCH * MAX_LEN
LN_EPS = 1e-12

# ----- packed (N, 64) parameter-row slab layout (static row indices) -----
R_EMB_LN_G = 0
R_EMB_LN_B = 1
R_TIME = 2                                   # time-embedding row t lives at R_TIME + t
R_LAYER = R_TIME + MAX_STEP                  # per-layer block starts here
ROWS_PER_LAYER = 6                           # bo, ln1_g, ln1_b, b2, ln2_g, ln2_b
R_PRED = R_LAYER + NUM_LAYERS * ROWS_PER_LAYER   # pred_tb, pred_ln_g, pred_ln_b
N_ROWS64 = R_PRED + 3


# ------------------------------ fused Pallas kernel ------------------------------
def _sdpe_fused_kernel(data_ref, labels_ref, qkv_w_ref, qkv_b_ref, wo_ref,
                       w_up_ref, w_down_ref, pred_tw_ref, rows64_ref, rows128_ref,
                       scores_ref, loss_ref):
    f32 = jnp.float32

    def row64(r):                                   # (1, HIDDEN) static row slice
        return rows64_ref[pl.ds(r, 1), :]

    def row128(r):                                  # (1, 128) static row slice
        return rows128_ref[pl.ds(r, 1), :]

    base = data_ref[0]                              # (BS, H)
    xt = data_ref[1]                                # (BS, H)
    target = data_ref[2]                            # (BS, H)
    pred_tw = pred_tw_ref[...]                      # (H, H)
    word_emb_t = w_up_ref[NUM_LAYERS]               # (H, V)  pre-transposed tied decoder weight
    word_emb = w_down_ref[NUM_LAYERS]               # (V, H)

    def gelu(x):
        # TODO(synk): HF BERT uses exact (erf) gelu; tanh approximation kept for TPU lowering safety.
        return 0.5 * x * (1.0 + jnp.tanh(0.7978845608028654 * (x + 0.044715 * x * x * x)))

    def ln(x, g, b):
        mu = jnp.mean(x, axis=-1, keepdims=True)
        xc = x - mu
        var = jnp.mean(xc * xc, axis=-1, keepdims=True)
        return xc * jax.lax.rsqrt(var + LN_EPS) * g + b

    def softmax_approx(s):     # attention softmax: EUP approx reciprocal (off any amplification path)
        m = jnp.max(s, axis=-1, keepdims=True)
        p = jnp.exp(s - m)
        return p * pl.reciprocal(jnp.sum(p, axis=-1, keepdims=True), approx=True)

    def softmax_exact(s):      # denoising softmax feeds a ~1/sqrt(alpha_t)=316x amplification -> exact
        m = jnp.max(s, axis=-1, keepdims=True)
        p = jnp.exp(s - m)
        return p / jnp.sum(p, axis=-1, keepdims=True)

    def cls_head(x):           # (BS, H) -> (BS, V)
        h = gelu(jnp.dot(x, pred_tw, preferred_element_type=f32) + row64(R_PRED + 0))
        h = ln(h, row64(R_PRED + 1), row64(R_PRED + 2))
        return jnp.dot(h, word_emb_t, preferred_element_type=f32) + row128(NUM_LAYERS)

    def encoder(x):            # (BS, H) with batch folded into rows
        for l in range(NUM_LAYERS):
            r = R_LAYER + l * ROWS_PER_LAYER
            attn = row64(r + 0)                                   # output-dense bias, broadcasts
            for h in range(NUM_HEADS):
                i = l * NUM_HEADS + h
                # 1/sqrt(HEAD_DIM) is pre-folded into wq/bq at pack time.
                q = jnp.dot(x, qkv_w_ref[0, i], preferred_element_type=f32) + qkv_b_ref[0, i]
                k = jnp.dot(x, qkv_w_ref[1, i], preferred_element_type=f32) + qkv_b_ref[1, i]
                v = jnp.dot(x, qkv_w_ref[2, i], preferred_element_type=f32) + qkv_b_ref[2, i]
                # leading-dim split (BS, HD) -> (B, S, HD): layout-free, keeps batches separate
                q3 = q.reshape(BATCH, MAX_LEN, HEAD_DIM)
                k3 = k.reshape(BATCH, MAX_LEN, HEAD_DIM)
                v3 = v.reshape(BATCH, MAX_LEN, HEAD_DIM)
                s = jnp.einsum('bqd,bkd->bqk', q3, k3, preferred_element_type=f32)   # (B,S,S)
                p = softmax_approx(s)
                ctx = jnp.einsum('bqk,bkd->bqd', p, v3, preferred_element_type=f32)  # (B,S,HD)
                attn = attn + jnp.dot(ctx.reshape(BS, HEAD_DIM), wo_ref[i],
                                      preferred_element_type=f32)                    # (BS, H)
            x = ln(attn + x, row64(r + 1), row64(r + 2))
            inter = gelu(jnp.dot(x, w_up_ref[l], preferred_element_type=f32) + row128(l))
            ffn = jnp.dot(inter, w_down_ref[l], preferred_element_type=f32) + row64(r + 3)
            x = ln(ffn + x, row64(r + 4), row64(r + 5))
        return x

    loss_x0 = jnp.zeros((1, 1), f32)

    # diffusion loop statically unrolled (MAX_STEP is a small constant)
    for t in range(MAX_STEP - 1, 0, -1):
        x = ln(base + xt + row64(R_TIME + t), row64(R_EMB_LN_G), row64(R_EMB_LN_B))
        x = encoder(x)
        logits = cls_head(x)                                      # (BS, V)
        denoised = jnp.dot(softmax_exact(logits), word_emb,
                           preferred_element_type=f32)            # (BS, H)
        d = denoised - target
        loss_x0 = loss_x0 + jnp.sum(d * d, axis=(0, 1), keepdims=True)

        alpha_tk = 1.0 - math.sqrt(t / MAX_STEP)
        alpha_t = 1.0 - math.sqrt((t + 1) / MAX_STEP) + 1e-05
        noise = (xt - math.sqrt(alpha_t) * denoised) / math.sqrt(1.0 - alpha_t)
        xt = math.sqrt(alpha_tk) * (
            xt / math.sqrt(alpha_t)
            + (math.sqrt((1 - alpha_tk) / alpha_tk)
               - math.sqrt((1 - alpha_t) / alpha_t)) * noise)

    # final prediction scores (lane-dense (B,S,128) -> one unmasked store) + losses
    logits_final = cls_head(xt)                                   # (BS, V)
    scores_ref[...] = logits_final.reshape(BATCH, MAX_LEN, VOCAB)

    d_emb = xt - target
    loss_emb = jnp.sum(d_emb * d_emb, axis=(0, 1), keepdims=True)

    lab = labels_ref[...]                                         # (BS, 1) int32
    m = jnp.max(logits_final, axis=-1, keepdims=True)
    lse = jnp.log(jnp.sum(jnp.exp(logits_final - m), axis=-1, keepdims=True)) + m
    col = jax.lax.broadcasted_iota(jnp.int32, logits_final.shape, 1)
    onehot = (col == lab).astype(f32)
    true_logit = jnp.sum(logits_final * onehot, axis=-1, keepdims=True)
    per_row = lse - true_logit                                    # (BS, 1)
    valid = (lab != 0).astype(f32)                                # ignore_index=0
    ce_sum = jnp.sum(per_row * valid, axis=(0, 1), keepdims=True)
    ce_cnt = jnp.sum(valid, axis=(0, 1), keepdims=True)

    n_elems = float(BS * HIDDEN)
    # TODO(synk): if ALL labels are 0, PyTorch CE returns nan; here the count clamps to 1 (loss 0).
    loss_ref[...] = (loss_x0 / n_elems + loss_emb / n_elems
                     + ce_sum / jnp.maximum(ce_cnt, 1.0))


# ----------------------------- parameters (synthetic) -----------------------------
def init_params(key):
    keys = iter(jax.random.split(key, 64))

    def w(shape, scale=0.02):
        return scale * jax.random.normal(next(keys), shape, jnp.float32)

    p = {
        "word_emb": w((VOCAB, HIDDEN)),
        "pos_emb": w((MAX_POS, HIDDEN)),
        "emb_ln_g": jnp.ones((HIDDEN,), jnp.float32),
        "emb_ln_b": jnp.zeros((HIDDEN,), jnp.float32),
        "time_emb": jnp.zeros((MAX_STEP, HIDDEN), jnp.float32),  # nn.init.constant_(..., 0)
        "pred_tw": w((HIDDEN, HIDDEN)),
        "pred_tb": jnp.zeros((HIDDEN,), jnp.float32),
        "pred_ln_g": jnp.ones((HIDDEN,), jnp.float32),
        "pred_ln_b": jnp.zeros((HIDDEN,), jnp.float32),
        "pred_dec_b": jnp.zeros((VOCAB,), jnp.float32),
        "layers": [],
    }
    for _ in range(NUM_LAYERS):
        p["layers"].append(dict(
            wq=w((HIDDEN, HIDDEN)), bq=jnp.zeros((HIDDEN,), jnp.float32),
            wk=w((HIDDEN, HIDDEN)), bk=jnp.zeros((HIDDEN,), jnp.float32),
            wv=w((HIDDEN, HIDDEN)), bv=jnp.zeros((HIDDEN,), jnp.float32),
            wo=w((HIDDEN, HIDDEN)), bo=jnp.zeros((HIDDEN,), jnp.float32),
            ln1_g=jnp.ones((HIDDEN,), jnp.float32), ln1_b=jnp.zeros((HIDDEN,), jnp.float32),
            wi=w((HIDDEN, INTERMEDIATE)), bi=jnp.zeros((INTERMEDIATE,), jnp.float32),
            w2=w((INTERMEDIATE, HIDDEN)), b2=jnp.zeros((HIDDEN,), jnp.float32),
            ln2_g=jnp.ones((HIDDEN,), jnp.float32), ln2_b=jnp.zeros((HIDDEN,), jnp.float32),
        ))
    return p


def pack_params(p):
    """Kernel-ready layout, computed ONCE outside the hot path:
       - per-head Q/K/V/O weight blocks (attention scale folded into wq/bq),
       - wi / word_emb.T stacked (H->128 mats), w2 / word_emb stacked (128->H mats),
       - all 64-wide bias/LN/time rows in one (N,64) slab, all 128-wide rows in one (N,128) slab."""
    H, I, NH, HD, L, V = HIDDEN, INTERMEDIATE, NUM_HEADS, HEAD_DIM, NUM_LAYERS, VOCAB
    scale = 1.0 / math.sqrt(HD)
    layers = p["layers"]

    def col_heads(w):   # (H, H) -> (NH, H, HD): head h = output columns [h*HD:(h+1)*HD]
        return jnp.transpose(w.reshape(H, NH, HD), (1, 0, 2))

    wq = jnp.concatenate([col_heads(l["wq"]) for l in layers], 0) * scale   # scale pre-folded
    wk = jnp.concatenate([col_heads(l["wk"]) for l in layers], 0)
    wv = jnp.concatenate([col_heads(l["wv"]) for l in layers], 0)
    bq = jnp.concatenate([l["bq"].reshape(NH, 1, HD) for l in layers], 0) * scale
    bk = jnp.concatenate([l["bk"].reshape(NH, 1, HD) for l in layers], 0)
    bv = jnp.concatenate([l["bv"].reshape(NH, 1, HD) for l in layers], 0)

    rows64 = [p["emb_ln_g"].reshape(1, H), p["emb_ln_b"].reshape(1, H), p["time_emb"]]
    for l in layers:
        rows64 += [l["bo"].reshape(1, H), l["ln1_g"].reshape(1, H), l["ln1_b"].reshape(1, H),
                   l["b2"].reshape(1, H), l["ln2_g"].reshape(1, H), l["ln2_b"].reshape(1, H)]
    rows64 += [p["pred_tb"].reshape(1, H), p["pred_ln_g"].reshape(1, H),
               p["pred_ln_b"].reshape(1, H)]
    rows64 = jnp.concatenate(rows64, 0)
    assert rows64.shape == (N_ROWS64, H)

    return dict(
        word_emb=p["word_emb"],                       # wrapper-side gathers only
        pos_emb=p["pos_emb"],
        qkv_w=jnp.stack([wq, wk, wv], 0),             # (3, L*NH, H, HD)
        qkv_b=jnp.stack([bq, bk, bv], 0),             # (3, L*NH, 1, HD)
        wo=jnp.concatenate([l["wo"].reshape(NH, HD, H) for l in layers], 0),  # (L*NH, HD, H)
        w_up=jnp.stack([l["wi"] for l in layers] + [p["word_emb"].T], 0),     # (L+1, H, 128)
        w_down=jnp.stack([l["w2"] for l in layers] + [p["word_emb"]], 0),     # (L+1, 128, H)
        pred_tw=p["pred_tw"],                          # (H, H)
        rows64=rows64,                                 # (N_ROWS64, H)
        rows128=jnp.concatenate([l["bi"].reshape(1, I) for l in layers]
                                + [p["pred_dec_b"].reshape(1, V)], 0),        # (L+1, 128)
    )


def _cost_estimate():
    S, H, I, V, B = MAX_LEN, HIDDEN, INTERMEDIATE, VOCAB, BATCH
    rows = B * S
    per_layer = (2 * rows * (3 * H * H + H * H + 2 * H * I)
                 + NUM_HEADS * B * 2 * 2 * S * S * HEAD_DIM)
    head = 2 * rows * (H * H + H * V)
    per_step = NUM_LAYERS * per_layer + head + 2 * rows * V * H
    flops = (MAX_STEP - 1) * per_step + head
    return pl.CostEstimate(flops=int(flops), transcendentals=int(2e4),
                           bytes_accessed=int(4e5))


# --------------------------------- model forward ---------------------------------
def sdpe_forward(params, input_ids, token_type_ids, attention_mask,
                 labels, labels_token_type_ids, labels_attention_mask, xt0):
    # Faithful to the reference: attention_mask is overridden by ones, token-type
    # embeddings are computed but never added to model_input, and the second
    # positional-embedding term reuses the same position_ids (bug preserved).
    del token_type_ids, attention_mask, labels_token_type_ids, labels_attention_mask
    # TODO(synk): dropout inside the HF BERT encoder is omitted (eval semantics).

    B, S = input_ids.shape
    word_emb = params["word_emb"]
    pos_emb = params["pos_emb"][:S]                              # (S, H)

    # glue: embedding gathers + static additive terms; fold batch into rows
    target_emb = jnp.take(word_emb, labels, axis=0)              # (B, S, H)
    inp_emb = jnp.take(word_emb, input_ids, axis=0)              # (B, S, H)
    base = inp_emb + (pos_emb + pos_emb)[None, :, :]             # pos + xt_pos (bug preserved)
    data = jnp.stack([base.reshape(B * S, HIDDEN),
                      xt0.reshape(B * S, HIDDEN),
                      target_emb.reshape(B * S, HIDDEN)], axis=0)  # (3, B*S, H)
    labels_flat = labels.reshape(B * S, 1).astype(jnp.int32)

    scores, loss = pl.pallas_call(
        _sdpe_fused_kernel,
        out_shape=(jax.ShapeDtypeStruct((B, S, VOCAB), jnp.float32),
                   jax.ShapeDtypeStruct((1, 1), jnp.float32)),
        cost_estimate=_cost_estimate(),
    )(data, labels_flat, params["qkv_w"], params["qkv_b"], params["wo"],
      params["w_up"], params["w_down"], params["pred_tw"],
      params["rows64"], params["rows128"])

    return loss[0, 0], scores, labels


# -------------------------------------- main --------------------------------------
if __name__ == "__main__":
    key = jax.random.PRNGKey(0)
    kp, kids, klab, kxt = jax.random.split(key, 4)

    raw_params = init_params(kp)
    params = pack_params(raw_params)     # packed once, outside the jitted hot path

    input_ids = jax.random.randint(kids, (BATCH, MAX_LEN), 0, VOCAB, dtype=jnp.int32)
    token_type_ids = jnp.zeros((BATCH, MAX_LEN), jnp.int32)
    attention_mask = jnp.ones((BATCH, MAX_LEN), jnp.int32)
    labels = jax.random.randint(klab, (BATCH, MAX_LEN), 0, VOCAB, dtype=jnp.int32)
    labels_token_type_ids = jnp.zeros((BATCH, MAX_LEN), jnp.int32)
    labels_attention_mask = jnp.ones((BATCH, MAX_LEN), jnp.int32)
    # torch.normal(0,1,...) noise, made deterministic and passed in explicitly:
    xt0 = jax.random.normal(kxt, (BATCH, MAX_LEN, HIDDEN), jnp.float32)

    fwd = jax.jit(sdpe_forward)
    loss, scores, labs = fwd(params, input_ids, token_type_ids, attention_mask,
                             labels, labels_token_type_ids, labels_attention_mask, xt0)
    jax.block_until_ready((loss, scores, labs))
    assert scores.shape == (BATCH, MAX_LEN, VOCAB)
    assert loss.shape == ()
    print("KERNEL_OK")
</pallas_src>

<mosaic_0001>
module attributes {stable_mosaic.version = 11 : i64} {
  func.func @_sdpe_fused_kernel(%arg0: memref<3x16x64xf32, #tpu.memory_space<vmem>>, %arg1: memref<16x1xi32, #tpu.memory_space<vmem>>, %arg2: memref<3x4x64x32xf32, #tpu.memory_space<vmem>>, %arg3: memref<3x4x1x32xf32, #tpu.memory_space<vmem>>, %arg4: memref<4x32x64xf32, #tpu.memory_space<vmem>>, %arg5: memref<3x64x128xf32, #tpu.memory_space<vmem>>, %arg6: memref<3x128x64xf32, #tpu.memory_space<vmem>>, %arg7: memref<64x64xf32, #tpu.memory_space<vmem>>, %arg8: memref<19x64xf32, #tpu.memory_space<vmem>>, %arg9: memref<3x128xf32, #tpu.memory_space<vmem>>, %arg10: memref<2x8x128xf32, #tpu.memory_space<vmem>>, %arg11: memref<1x1xf32, #tpu.memory_space<vmem>>) attributes {dimension_semantics = [], scalar_prefetch = 0 : i64, scratch_operands = 0 : i64, tpu.core_type = #tpu.core_type<tc>} {
    %c0 = arith.constant 0 : index
    %c0_0 = arith.constant 0 : index
    %c0_1 = arith.constant 0 : index
    %0 = vector.load %arg0[%c0, %c0_0, %c0_1] : memref<3x16x64xf32, #tpu.memory_space<vmem>>, vector<1x16x64xf32>
    %1 = vector.shape_cast %0 : vector<1x16x64xf32> to vector<16x64xf32>
    %c1 = arith.constant 1 : index
    %c0_2 = arith.constant 0 : index
    %c0_3 = arith.constant 0 : index
    %2 = vector.load %arg0[%c1, %c0_2, %c0_3] : memref<3x16x64xf32, #tpu.memory_space<vmem>>, vector<1x16x64xf32>
    %3 = vector.shape_cast %2 : vector<1x16x64xf32> to vector<16x64xf32>
    %c2 = arith.constant 2 : index
    %c0_4 = arith.constant 0 : index
    %c0_5 = arith.constant 0 : index
    %4 = vector.load %arg0[%c2, %c0_4, %c0_5] : memref<3x16x64xf32, #tpu.memory_space<vmem>>, vector<1x16x64xf32>
    %5 = vector.shape_cast %4 : vector<1x16x64xf32> to vector<16x64xf32>
    %c0_6 = arith.constant 0 : index
    %c0_7 = arith.constant 0 : index
    %6 = vector.load %arg7[%c0_6, %c0_7] : memref<64x64xf32, #tpu.memory_space<vmem>>, vector<64x64xf32>
    %c2_8 = arith.constant 2 : index
    %c0_9 = arith.constant 0 : index
    %c0_10 = arith.constant 0 : index
    %7 = vector.load %arg5[%c2_8, %c0_9, %c0_10] : memref<3x64x128xf32, #tpu.memory_space<vmem>>, vector<1x64x128xf32>
    %8 = vector.shape_cast %7 : vector<1x64x128xf32> to vector<64x128xf32>
    %c2_11 = arith.constant 2 : index
    %c0_12 = arith.constant 0 : index
    %c0_13 = arith.constant 0 : index
    %9 = vector.load %arg6[%c2_11, %c0_12, %c0_13] : memref<3x128x64xf32, #tpu.memory_space<vmem>>, vector<1x128x64xf32>
    %10 = vector.shape_cast %9 : vector<1x128x64xf32> to vector<128x64xf32>
    %cst = arith.constant 0.000000e+00 : f32
    %11 = vector.broadcast %cst : f32 to vector<1x1xf32>
    %12 = arith.addf %1, %3 : vector<16x64xf32>
    %c3 = arith.constant 3 : index
    %c0_14 = arith.constant 0 : index
    %13 = vector.load %arg8[%c3, %c0_14] : memref<19x64xf32, #tpu.memory_space<vmem>>, vector<1x64xf32>
    %14 = vector.broadcast %13 : vector<1x64xf32> to vector<16x64xf32>
    %15 = arith.addf %12, %14 : vector<16x64xf32>
    %c0_15 = arith.constant 0 : index
    %c0_16 = arith.constant 0 : index
    %16 = vector.load %arg8[%c0_15, %c0_16] : memref<19x64xf32, #tpu.memory_space<vmem>>, vector<1x64xf32>
    %c1_17 = arith.constant 1 : index
    %c0_18 = arith.constant 0 : index
    %17 = vector.load %arg8[%c1_17, %c0_18] : memref<19x64xf32, #tpu.memory_space<vmem>>, vector<1x64xf32>
    %cst_19 = arith.constant dense<0.000000e+00> : vector<16xf32>
    %18 = vector.multi_reduction <add>, %15, %cst_19 [1] : vector<16x64xf32> to vector<16xf32>
    %19 = vector.shape_cast %18 : vector<16xf32> to vector<16x1xf32>
    %cst_20 = arith.constant 6.400000e+01 : f32
    %20 = vector.broadcast %cst_20 : f32 to vector<16x1xf32>
    %21 = arith.divf %19, %20 : vector<16x1xf32>
    %22 = vector.broadcast %21 : vector<16x1xf32> to vector<16x64xf32>
    %23 = arith.subf %15, %22 : vector<16x64xf32>
    %24 = arith.mulf %23, %23 : vector<16x64xf32>
    %cst_21 = arith.constant dense<0.000000e+00> : vector<16xf32>
    %25 = vector.multi_reduction <add>, %24, %cst_21 [1] : vector<16x64xf32> to vector<16xf32>
    %26 = vector.shape_cast %25 : vector<16xf32> to vector<16x1xf32>
    %cst_22 = arith.constant 6.400000e+01 : f32
    %27 = vector.broadcast %cst_22 : f32 to vector<16x1xf32>
    %28 = arith.divf %26, %27 : vector<16x1xf32>
    %cst_23 = arith.constant 9.99999996E-13 : f32
    %29 = vector.broadcast %cst_23 : f32 to vector<16x1xf32>
    %30 = arith.addf %28, %29 : vector<16x1xf32>
    %31 = math.rsqrt %30 : vector<16x1xf32>
    %32 = vector.broadcast %31 : vector<16x1xf32> to vector<16x64xf32>
    %33 = arith.mulf %23, %32 : vector<16x64xf32>
    %34 = vector.broadcast %16 : vector<1x64xf32> to vector<16x64xf32>
    %35 = arith.mulf %33, %34 : vector<16x64xf32>
    %36 = vector.broadcast %17 : vector<1x64xf32> to vector<16x64xf32>
    %37 = arith.addf %35, %36 : vector<16x64xf32>
    %c4 = arith.constant 4 : index
    %c0_24 = arith.constant 0 : index
    %38 = vector.load %arg8[%c4, %c0_24] : memref<19x64xf32, #tpu.memory_space<vmem>>, vector<1x64xf32>
    %c0_25 = arith.constant 0 : index
    %c0_26 = arith.constant 0 : index
    %c0_27 = arith.constant 0 : index
    %c0_28 = arith.constant 0 : index
    %39 = vector.load %arg2[%c0_25, %c0_26, %c0_27, %c0_28] : memref<3x4x64x32xf32, #tpu.memory_space<vmem>>, vector<1x1x64x32xf32>
    %40 = vector.shape_cast %39 : vector<1x1x64x32xf32> to vector<64x32xf32>
    %cst_29 = arith.constant dense<0.000000e+00> : vector<16x32xf32>
    %41 = tpu.matmul %37, %40, %cst_29 {dimension_numbers = #tpu.dot_dimension_numbers<[1], [0], [0], [1], [0, 0, 1, 1], [], []>} : vector<16x64xf32>, vector<64x32xf32>, vector<16x32xf32> -> vector<16x32xf32>
    %c0_30 = arith.constant 0 : index
    %c0_31 = arith.constant 0 : index
    %c0_32 = arith.constant 0 : index
    %c0_33 = arith.constant 0 : index
    %42 = vector.load %arg3[%c0_30, %c0_31, %c0_32, %c0_33] : memref<3x4x1x32xf32, #tpu.memory_space<vmem>>, vector<1x1x1x32xf32>
    %43 = vector.shape_cast %42 : vector<1x1x1x32xf32> to vector<1x32xf32>
    %44 = vector.broadcast %43 : vector<1x32xf32> to vector<16x32xf32>
    %45 = arith.addf %41, %44 : vector<16x32xf32>
    %c1_34 = arith.constant 1 : index
    %c0_35 = arith.constant 0 : index
    %c0_36 = arith.constant 0 : index
    %c0_37 = arith.constant 0 : index
    %46 = vector.load %arg2[%c1_34, %c0_35, %c0_36, %c0_37] : memref<3x4x64x32xf32, #tpu.memory_space<vmem>>, vector<1x1x64x32xf32>
    %47 = vector.shape_cast %46 : vector<1x1x64x32xf32> to vector<64x32xf32>
    %cst_38 = arith.constant dense<0.000000e+00> : vector<16x32xf32>
    %48 = tpu.matmul %37, %47, %cst_38 {dimension_numbers = #tpu.dot_dimension_numbers<[1], [0], [0], [1], [0, 0, 1, 1], [], []>} : vector<16x64xf32>, vector<64x32xf32>, vector<16x32xf32> -> vector<16x32xf32>
    %c1_39 = arith.constant 1 : index
    %c0_40 = arith.constant 0 : index
    %c0_41 = arith.constant 0 : index
    %c0_42 = arith.constant 0 : index
    %49 = vector.load %arg3[%c1_39, %c0_40, %c0_41, %c0_42] : memref<3x4x1x32xf32, #tpu.memory_space<vmem>>, vector<1x1x1x32xf32>
    %50 = vector.shape_cast %49 : vector<1x1x1x32xf32> to vector<1x32xf32>
    %51 = vector.broadcast %50 : vector<1x32xf32> to vector<16x32xf32>
    %52 = arith.addf %48, %51 : vector<16x32xf32>
    %c2_43 = arith.constant 2 : index
    %c0_44 = arith.constant 0 : index
    %c0_45 = arith.constant 0 : index
    %c0_46 = arith.constant 0 : index
    %53 = vector.load %arg2[%c2_43, %c0_44, %c0_45, %c0_46] : memref<3x4x64x32xf32, #tpu.memory_space<vmem>>, vector<1x1x64x32xf32>
    %54 = vector.shape_cast %53 : vector<1x1x64x32xf32> to vector<64x32xf32>
    %cst_47 = arith.constant dense<0.000000e+00> : vector<16x32xf32>
    %55 = tpu.matmul %37, %54, %cst_47 {dimension_numbers = #tpu.dot_dimension_numbers<[1], [0], [0], [1], [0, 0, 1, 1], [], []>} : vector<16x64xf32>, vector<64x32xf32>, vector<16x32xf32> -> vector<16x32xf32>
    %c2_48 = arith.constant 2 : index
    %c0_49 = arith.constant 0 : index
    %c0_50 = arith.constant 0 : index
    %c0_51 = arith.constant 0 : index
    %56 = vector.load %arg3[%c2_48, %c0_49, %c0_50, %c0_51] : memref<3x4x1x32xf32, #tpu.memory_space<vmem>>, vector<1x1x1x32xf32>
    %57 = vector.shape_cast %56 : vector<1x1x1x32xf32> to vector<1x32xf32>
    %58 = vector.broadcast %57 : vector<1x32xf32> to vector<16x32xf32>
    %59 = arith.addf %55, %58 : vector<16x32xf32>
    %60 = vector.shape_cast %45 : vector<16x32xf32> to vector<2x8x32xf32>
    %61 = vector.shape_cast %52 : vector<16x32xf32> to vector<2x8x32xf32>
    %62 = vector.shape_cast %59 : vector<16x32xf32> to vector<2x8x32xf32>
    "tpu.trace_start"() <{level = 10 : i32, message = "bqd,bkd->bqk"}> : () -> ()
    %cst_52 = arith.constant dense<0.000000e+00> : vector<2x8x8xf32>
    %63 = tpu.matmul %60, %61, %cst_52 {dimension_numbers = #tpu.dot_dimension_numbers<[2], [2], [1], [1], [0, 0, 0, 1, 1, 1], [0], [0]>} : vector<2x8x32xf32>, vector<2x8x32xf32>, vector<2x8x8xf32> -> vector<2x8x8xf32>
    "tpu.trace_stop"() : () -> ()
    %cst_53 = arith.constant dense<0xFF800000> : vector<2x8xf32>
    %64 = vector.multi_reduction <maximumf>, %63, %cst_53 [2] : vector<2x8x8xf32> to vector<2x8xf32>
    %65 = vector.shape_cast %64 : vector<2x8xf32> to vector<2x8x1xf32>
    %66 = vector.broadcast %65 : vector<2x8x1xf32> to vector<2x8x8xf32>
    %67 = arith.subf %63, %66 : vector<2x8x8xf32>
    %68 = math.exp %67 : vector<2x8x8xf32>
    %cst_54 = arith.constant dense<0.000000e+00> : vector<2x8xf32>
    %69 = vector.multi_reduction <add>, %68, %cst_54 [2] : vector<2x8x8xf32> to vector<2x8xf32>
    %70 = vector.shape_cast %69 : vector<2x8xf32> to vector<2x8x1xf32>
    %71 = tpu.reciprocal %70 {approx = true} : vector<2x8x1xf32> -> vector<2x8x1xf32>
    %72 = vector.broadcast %71 : vector<2x8x1xf32> to vector<2x8x8xf32>
    %73 = arith.mulf %68, %72 : vector<2x8x8xf32>
    "tpu.trace_start"() <{level = 10 : i32, message = "bqk,bkd->bqd"}> : () -> ()
    %cst_55 = arith.constant dense<0.000000e+00> : vector<2x8x32xf32>
    %74 = tpu.matmul %73, %62, %cst_55 {dimension_numbers = #tpu.dot_dimension_numbers<[2], [1], [1], [2], [0, 0, 0, 1, 1, 2], [0], [0]>} : vector<2x8x8xf32>, vector<2x8x32xf32>, vector<2x8x32xf32> -> vector<2x8x32xf32>
    "tpu.trace_stop"() : () -> ()
    %75 = vector.shape_cast %74 : vector<2x8x32xf32> to vector<16x32xf32>
    %c0_56 = arith.constant 0 : index
    %c0_57 = arith.constant 0 : index
    %c0_58 = arith.constant 0 : index
    %76 = vector.load %arg4[%c0_56, %c0_57, %c0_58] : memref<4x32x64xf32, #tpu.memory_space<vmem>>, vector<1x32x64xf32>
    %77 = vector.shape_cast %76 : vector<1x32x64xf32> to vector<32x64xf32>
    %cst_59 = arith.constant dense<0.000000e+00> : vector<16x64xf32>
    %78 = tpu.matmul %75, %77, %cst_59 {dimension_numbers = #tpu.dot_dimension_numbers<[1], [0], [0], [1], [0, 0, 1, 1], [], []>} : vector<16x32xf32>, vector<32x64xf32>, vector<16x64xf32> -> vector<16x64xf32>
    %79 = vector.broadcast %38 : vector<1x64xf32> to vector<16x64xf32>
    %80 = arith.addf %79, %78 : vector<16x64xf32>
    %c0_60 = arith.constant 0 : index
    %c1_61 = arith.constant 1 : index
    %c0_62 = arith.constant 0 : index
    %c0_63 = arith.constant 0 : index
    %81 = vector.load %arg2[%c0_60, %c1_61, %c0_62, %c0_63] : memref<3x4x64x32xf32, #tpu.memory_space<vmem>>, vector<1x1x64x32xf32>
    %82 = vector.shape_cast %81 : vector<1x1x64x32xf32> to vector<64x32xf32>
    %cst_64 = arith.constant dense<0.000000e+00> : vector<16x32xf32>
    %83 = tpu.matmul %37, %82, %cst_64 {dimension_numbers = #tpu.dot_dimension_numbers<[1], [0], [0], [1], [0, 0, 1, 1], [], []>} : vector<16x64xf32>, vector<64x32xf32>, vector<16x32xf32> -> vector<16x32xf32>
    %c0_65 = arith.constant 0 : index
    %c1_66 = arith.constant 1 : index
    %c0_67 = arith.constant 0 : index
    %c0_68 = arith.constant 0 : index
    %84 = vector.load %arg3[%c0_65, %c1_66, %c0_67, %c0_68] : memref<3x4x1x32xf32, #tpu.memory_space<vmem>>, vector<1x1x1x32xf32>
    %85 = vector.shape_cast %84 : vector<1x1x1x32xf32> to vector<1x32xf32>
    %86 = vector.broadcast %85 : vector<1x32xf32> to vector<16x32xf32>
    %87 = arith.addf %83, %86 : vector<16x32xf32>
    %c1_69 = arith.constant 1 : index
    %c1_70 = arith.constant 1 : index
    %c0_71 = arith.constant 0 : index
    %c0_72 = arith.constant 0 : index
    %88 = vector.load %arg2[%c1_69, %c1_70, %c0_71, %c0_72] : memref<3x4x64x32xf32, #tpu.memory_space<vmem>>, vector<1x1x64x32xf32>
    %89 = vector.shape_cast %88 : vector<1x1x64x32xf32> to vector<64x32xf32>
    %cst_73 = arith.constant dense<0.000000e+00> : vector<16x32xf32>
    %90 = tpu.matmul %37, %89, %cst_73 {dimension_numbers = #tpu.dot_dimension_numbers<[1], [0], [0], [1], [0, 0, 1, 1], [], []>} : vector<16x64xf32>, vector<64x32xf32>, vector<16x32xf32> -> vector<16x32xf32>
    %c1_74 = arith.constant 1 : index
    %c1_75 = arith.constant 1 : index
    %c0_76 = arith.constant 0 : index
    %c0_77 = arith.constant 0 : index
    %91 = vector.load %arg3[%c1_74, %c1_75, %c0_76, %c0_77] : memref<3x4x1x32xf32, #tpu.memory_space<vmem>>, vector<1x1x1x32xf32>
    %92 = vector.shape_cast %91 : vector<1x1x1x32xf32> to vector<1x32xf32>
    %93 = vector.broadcast %92 : vector<1x32xf32> to vector<16x32xf32>
    %94 = arith.addf %90, %93 : vector<16x32xf32>
    %c2_78 = arith.constant 2 : index
    %c1_79 = arith.constant 1 : index
    %c0_80 = arith.constant 0 : index
    %c0_81 = arith.constant 0 : index
    %95 = vector.load %arg2[%c2_78, %c1_79, %c0_80, %c0_81] : memref<3x4x64x32xf32, #tpu.memory_space<vmem>>, vector<1x1x64x32xf32>
    %96 = vector.shape_cast %95 : vector<1x1x64x32xf32> to vector<64x32xf32>
    %cst_82 = arith.constant dense<0.000000e+00> : vector<16x32xf32>
    %97 = tpu.matmul %37, %96, %cst_82 {dimension_numbers = #tpu.dot_dimension_numbers<[1], [0], [0], [1], [0, 0, 1, 1], [], []>} : vector<16x64xf32>, vector<64x32xf32>, vector<16x32xf32> -> vector<16x32xf32>
    %c2_83 = arith.constant 2 : index
    %c1_84 = arith.constant 1 : index
    %c0_85 = arith.constant 0 : index
    %c0_86 = arith.constant 0 : index
    %98 = vector.load %arg3[%c2_83, %c1_84, %c0_85, %c0_86] : memref<3x4x1x32xf32, #tpu.memory_space<vmem>>, vector<1x1x1x32xf32>
    %99 = vector.shape_cast %98 : vector<1x1x1x32xf32> to vector<1x32xf32>
    %100 = vector.broadcast %99 : vector<1x32xf32> to vector<16x32xf32>
    %101 = arith.addf %97, %100 : vector<16x32xf32>
    %102 = vector.shape_cast %87 : vector<16x32xf32> to vector<2x8x32xf32>
    %103 = vector.shape_cast %94 : vector<16x32xf32> to vector<2x8x32xf32>
    %104 = vector.shape_cast %101 : vector<16x32xf32> to vector<2x8x32xf32>
    "tpu.trace_start"() <{level = 10 : i32, message = "bqd,bkd->bqk"}> : () -> ()
    %cst_87 = arith.constant dense<0.000000e+00> : vector<2x8x8xf32>
    %105 = tpu.matmul %102, %103, %cst_87 {dimension_numbers = #tpu.dot_dimension_numbers<[2], [2], [1], [1], [0, 0, 0, 1, 1, 1], [0], [0]>} : vector<2x8x32xf32>, vector<2x8x32xf32>, vector<2x8x8xf32> -> vector<2x8x8xf32>
    "tpu.trace_stop"() : () -> ()
    %cst_88 = arith.constant dense<0xFF800000> : vector<2x8xf32>
    %106 = vector.multi_reduction <maximumf>, %105, %cst_88 [2] : vector<2x8x8xf32> to vector<2x8xf32>
    %107 = vector.shape_cast %106 : vector<2x8xf32> to vector<2x8x1xf32>
    %108 = vector.broadcast %107 : vector<2x8x1xf32> to vector<2x8x8xf32>
    %109 = arith.subf %105, %108 : vector<2x8x8xf32>
    %110 = math.exp %109 : vector<2x8x8xf32>
    %cst_89 = arith.constant dense<0.000000e+00> : vector<2x8xf32>
    %111 = vector.multi_reduction <add>, %110, %cst_89 [2] : vector<2x8x8xf32> to vector<2x8xf32>
    %112 = vector.shape_cast %111 : vector<2x8xf32> to vector<2x8x1xf32>
    %113 = tpu.reciprocal %112 {approx = true} : vector<2x8x1xf32> -> vector<2x8x1xf32>
    %114 = vector.broadcast %113 : vector<2x8x1xf32> to vector<2x8x8xf32>
    %115 = arith.mulf %110, %114 : vector<2x8x8xf32>
    "tpu.trace_start"() <{level = 10 : i32, message = "bqk,bkd->bqd"}> : () -> ()
    %cst_90 = arith.constant dense<0.000000e+00> : vector<2x8x32xf32>
    %116 = tpu.matmul %115, %104, %cst_90 {dimension_numbers = #tpu.dot_dimension_numbers<[2], [1], [1], [2], [0, 0, 0, 1, 1, 2], [0], [0]>} : vector<2x8x8xf32>, vector<2x8x32xf32>, vector<2x8x32xf32> -> vector<2x8x32xf32>
    "tpu.trace_stop"() : () -> ()
    %117 = vector.shape_cast %116 : vector<2x8x32xf32> to vector<16x32xf32>
    %c1_91 = arith.constant 1 : index
    %c0_92 = arith.constant 0 : index
    %c0_93 = arith.constant 0 : index
    %118 = vector.load %arg4[%c1_91, %c0_92, %c0_93] : memref<4x32x64xf32, #tpu.memory_space<vmem>>, vector<1x32x64xf32>
    %119 = vector.shape_cast %118 : vector<1x32x64xf32> to vector<32x64xf32>
    %cst_94 = arith.constant dense<0.000000e+00> : vector<16x64xf32>
    %120 = tpu.matmul %117, %119, %cst_94 {dimension_numbers = #tpu.dot_dimension_numbers<[1], [0], [0], [1], [0, 0, 1, 1], [], []>} : vector<16x32xf32>, vector<32x64xf32>, vector<16x64xf32> -> vector<16x64xf32>
    %121 = arith.addf %80, %120 : vector<16x64xf32>
    %122 = arith.addf %121, %37 : vector<16x64xf32>
    %c5 = arith.constant 5 : index
    %c0_95 = arith.constant 0 : index
    %123 = vector.load %arg8[%c5, %c0_95] : memref<19x64xf32, #tpu.memory_space<vmem>>, vector<1x64xf32>
    %c6 = arith.constant 6 : index
    %c0_96 = arith.constant 0 : index
    %124 = vector.load %arg8[%c6, %c0_96] : memref<19x64xf32, #tpu.memory_space<vmem>>, vector<1x64xf32>
    %cst_97 = arith.constant dense<0.000000e+00> : vector<16xf32>
    %125 = vector.multi_reduction <add>, %122, %cst_97 [1] : vector<16x64xf32> to vector<16xf32>
    %126 = vector.shape_cast %125 : vector<16xf32> to vector<16x1xf32>
    %cst_98 = arith.constant 6.400000e+01 : f32
    %127 = vector.broadcast %cst_98 : f32 to vector<16x1xf32>
    %128 = arith.divf %126, %127 : vector<16x1xf32>
    %129 = vector.broadcast %128 : vector<16x1xf32> to vector<16x64xf32>
    %130 = arith.subf %122, %129 : vector<16x64xf32>
    %131 = arith.mulf %130, %130 : vector<16x64xf32>
    %cst_99 = arith.constant dense<0.000000e+00> : vector<16xf32>
    %132 = vector.multi_reduction <add>, %131, %cst_99 [1] : vector<16x64xf32> to vector<16xf32>
    %133 = vector.shape_cast %132 : vector<16xf32> to vector<16x1xf32>
    %cst_100 = arith.constant 6.400000e+01 : f32
    %134 = vector.broadcast %cst_100 : f32 to vector<16x1xf32>
    %135 = arith.divf %133, %134 : vector<16x1xf32>
    %cst_101 = arith.constant 9.99999996E-13 : f32
    %136 = vector.broadcast %cst_101 : f32 to vector<16x1xf32>
    %137 = arith.addf %135, %136 : vector<16x1xf32>
    %138 = math.rsqrt %137 : vector<16x1xf32>
    %139 = vector.broadcast %138 : vector<16x1xf32> to vector<16x64xf32>
    %140 = arith.mulf %130, %139 : vector<16x64xf32>
    %141 = vector.broadcast %123 : vector<1x64xf32> to vector<16x64xf32>
    %142 = arith.mulf %140, %141 : vector<16x64xf32>
    %143 = vector.broadcast %124 : vector<1x64xf32> to vector<16x64xf32>
    %144 = arith.addf %142, %143 : vector<16x64xf32>
    %c0_102 = arith.constant 0 : index
    %c0_103 = arith.constant 0 : index
    %c0_104 = arith.constant 0 : index
    %145 = vector.load %arg5[%c0_102, %c0_103, %c0_104] : memref<3x64x128xf32, #tpu.memory_space<vmem>>, vector<1x64x128xf32>
    %146 = vector.shape_cast %145 : vector<1x64x128xf32> to vector<64x128xf32>
    %cst_105 = arith.constant dense<0.000000e+00> : vector<16x128xf32>
    %147 = tpu.matmul %144, %146, %cst_105 {dimension_numbers = #tpu.dot_dimension_numbers<[1], [0], [0], [1], [0, 0, 1, 1], [], []>} : vector<16x64xf32>, vector<64x128xf32>, vector<16x128xf32> -> vector<16x128xf32>
    %c0_106 = arith.constant 0 : index
    %c0_107 = arith.constant 0 : index
    %148 = vector.load %arg9[%c0_106, %c0_107] : memref<3x128xf32, #tpu.memory_space<vmem>>, vector<1x128xf32>
    %149 = vector.broadcast %148 : vector<1x128xf32> to vector<16x128xf32>
    %150 = arith.addf %147, %149 : vector<16x128xf32>
    %cst_108 = arith.constant 5.000000e-01 : f32
    %151 = vector.broadcast %cst_108 : f32 to vector<16x128xf32>
    %152 = arith.mulf %151, %150 : vector<16x128xf32>
    %cst_109 = arith.constant 4.471500e-02 : f32
    %153 = vector.broadcast %cst_109 : f32 to vector<16x128xf32>
    %154 = arith.mulf %153, %150 : vector<16x128xf32>
    %155 = arith.mulf %154, %150 : vector<16x128xf32>
    %156 = arith.mulf %155, %150 : vector<16x128xf32>
    %157 = arith.addf %150, %156 : vector<16x128xf32>
    %cst_110 = arith.constant 0.797884583 : f32
    %158 = vector.broadcast %cst_110 : f32 to vector<16x128xf32>
    %159 = arith.mulf %158, %157 : vector<16x128xf32>
    %160 = math.tanh %159 : vector<16x128xf32>
    %cst_111 = arith.constant 1.000000e+00 : f32
    %161 = vector.broadcast %cst_111 : f32 to vector<16x128xf32>
    %162 = arith.addf %161, %160 : vector<16x128xf32>
    %163 = arith.mulf %152, %162 : vector<16x128xf32>
    %c0_112 = arith.constant 0 : index
    %c0_113 = arith.constant 0 : index
    %c0_114 = arith.constant 0 : index
    %164 = vector.load %arg6[%c0_112, %c0_113, %c0_114] : memref<3x128x64xf32, #tpu.memory_space<vmem>>, vector<1x128x64xf32>
    %165 = vector.shape_cast %164 : vector<1x128x64xf32> to vector<128x64xf32>
    %cst_115 = arith.constant dense<0.000000e+00> : vector<16x64xf32>
    %166 = tpu.matmul %163, %165, %cst_115 {dimension_numbers = #tpu.dot_dimension_numbers<[1], [0], [0], [1], [0, 0, 1, 1], [], []>} : vector<16x128xf32>, vector<128x64xf32>, vector<16x64xf32> -> vector<16x64xf32>
    %c7 = arith.constant 7 : index
    %c0_116 = arith.constant 0 : index
    %167 = vector.load %arg8[%c7, %c0_116] : memref<19x64xf32, #tpu.memory_space<vmem>>, vector<1x64xf32>
    %168 = vector.broadcast %167 : vector<1x64xf32> to vector<16x64xf32>
    %169 = arith.addf %166, %168 : vector<16x64xf32>
    %170 = arith.addf %169, %144 : vector<16x64xf32>
    %c8 = arith.constant 8 : index
    %c0_117 = arith.constant 0 : index
    %171 = vector.load %arg8[%c8, %c0_117] : memref<19x64xf32, #tpu.memory_space<vmem>>, vector<1x64xf32>
    %c9 = arith.constant 9 : index
    %c0_118 = arith.constant 0 : index
    %172 = vector.load %arg8[%c9, %c0_118] : memref<19x64xf32, #tpu.memory_space<vmem>>, vector<1x64xf32>
    %cst_119 = arith.constant dense<0.000000e+00> : vector<16xf32>
    %173 = vector.multi_reduction <add>, %170, %cst_119 [1] : vector<16x64xf32> to vector<16xf32>
    %174 = vector.shape_cast %173 : vector<16xf32> to vector<16x1xf32>
    %cst_120 = arith.constant 6.400000e+01 : f32
    %175 = vector.broadcast %cst_120 : f32 to vector<16x1xf32>
    %176 = arith.divf %174, %175 : vector<16x1xf32>
    %177 = vector.broadcast %176 : vector<16x1xf32> to vector<16x64xf32>
    %178 = arith.subf %170, %177 : vector<16x64xf32>
    %179 = arith.mulf %178, %178 : vector<16x64xf32>
    %cst_121 = arith.constant dense<0.000000e+00> : vector<16xf32>
    %180 = vector.multi_reduction <add>, %179, %cst_121 [1] : vector<16x64xf32> to vector<16xf32>
    %181 = vector.shape_cast %180 : vector<16xf32> to vector<16x1xf32>
    %cst_122 = arith.constant 6.400000e+01 : f32
    %182 = vector.broadcast %cst_122 : f32 to vector<16x1xf32>
    %183 = arith.divf %181, %182 : vector<16x1xf32>
    %cst_123 = arith.constant 9.99999996E-13 : f32
    %184 = vector.broadcast %cst_123 : f32 to vector<16x1xf32>
    %185 = arith.addf %183, %184 : vector<16x1xf32>
    %186 = math.rsqrt %185 : vector<16x1xf32>
    %187 = vector.broadcast %186 : vector<16x1xf32> to vector<16x64xf32>
    %188 = arith.mulf %178, %187 : vector<16x64xf32>
    %189 = vector.broadcast %171 : vector<1x64xf32> to vector<16x64xf32>
    %190 = arith.mulf %188, %189 : vector<16x64xf32>
    %191 = vector.broadcast %172 : vector<1x64xf32> to vector<16x64xf32>
    %192 = arith.addf %190, %191 : vector<16x64xf32>
    %c10 = arith.constant 10 : index
    %c0_124 = arith.constant 0 : index
    %193 = vector.load %arg8[%c10, %c0_124] : memref<19x64xf32, #tpu.memory_space<vmem>>, vector<1x64xf32>
    %c0_125 = arith.constant 0 : index
    %c2_126 = arith.constant 2 : index
    %c0_127 = arith.constant 0 : index
    %c0_128 = arith.constant 0 : index
    %194 = vector.load %arg2[%c0_125, %c2_126, %c0_127, %c0_128] : memref<3x4x64x32xf32, #tpu.memory_space<vmem>>, vector<1x1x64x32xf32>
    %195 = vector.shape_cast %194 : vector<1x1x64x32xf32> to vector<64x32xf32>
    %cst_129 = arith.constant dense<0.000000e+00> : vector<16x32xf32>
    %196 = tpu.matmul %192, %195, %cst_129 {dimension_numbers = #tpu.dot_dimension_numbers<[1], [0], [0], [1], [0, 0, 1, 1], [], []>} : vector<16x64xf32>, vector<64x32xf32>, vector<16x32xf32> -> vector<16x32xf32>
    %c0_130 = arith.constant 0 : index
    %c2_131 = arith.constant 2 : index
    %c0_132 = arith.constant 0 : index
    %c0_133 = arith.constant 0 : index
    %197 = vector.load %arg3[%c0_130, %c2_131, %c0_132, %c0_133] : memref<3x4x1x32xf32, #tpu.memory_space<vmem>>, vector<1x1x1x32xf32>
    %198 = vector.shape_cast %197 : vector<1x1x1x32xf32> to vector<1x32xf32>
    %199 = vector.broadcast %198 : vector<1x32xf32> to vector<16x32xf32>
    %200 = arith.addf %196, %199 : vector<16x32xf32>
    %c1_134 = arith.constant 1 : index
    %c2_135 = arith.constant 2 : index
    %c0_136 = arith.constant 0 : index
    %c0_137 = arith.constant 0 : index
    %201 = vector.load %arg2[%c1_134, %c2_135, %c0_136, %c0_137] : memref<3x4x64x32xf32, #tpu.memory_space<vmem>>, vector<1x1x64x32xf32>
    %202 = vector.shape_cast %201 : vector<1x1x64x32xf32> to vector<64x32xf32>
    %cst_138 = arith.constant dense<0.000000e+00> : vector<16x32xf32>
    %203 = tpu.matmul %192, %202, %cst_138 {dimension_numbers = #tpu.dot_dimension_numbers<[1], [0], [0], [1], [0, 0, 1, 1], [], []>} : vector<16x64xf32>, vector<64x32xf32>, vector<16x32xf32> -> vector<16x32xf32>
    %c1_139 = arith.constant 1 : index
    %c2_140 = arith.constant 2 : index
    %c0_141 = arith.constant 0 : index
    %c0_142 = arith.constant 0 : index
    %204 = vector.load %arg3[%c1_139, %c2_140, %c0_141, %c0_142] : memref<3x4x1x32xf32, #tpu.memory_space<vmem>>, vector<1x1x1x32xf32>
    %205 = vector.shape_cast %204 : vector<1x1x1x32xf32> to vector<1x32xf32>
    %206 = vector.broadcast %205 : vector<1x32xf32> to vector<16x32xf32>
    %207 = arith.addf %203, %206 : vector<16x32xf32>
    %c2_143 = arith.constant 2 : index
    %c2_144 = arith.constant 2 : index
    %c0_145 = arith.constant 0 : index
    %c0_146 = arith.constant 0 : index
    %208 = vector.load %arg2[%c2_143, %c2_144, %c0_145, %c0_146] : memref<3x4x64x32xf32, #tpu.memory_space<vmem>>, vector<1x1x64x32xf32>
    %209 = vector.shape_cast %208 : vector<1x1x64x32xf32> to vector<64x32xf32>
    %cst_147 = arith.constant dense<0.000000e+00> : vector<16x32xf32>
    %210 = tpu.matmul %192, %209, %cst_147 {dimension_numbers = #tpu.dot_dimension_numbers<[1], [0], [0], [1], [0, 0, 1, 1], [], []>} : vector<16x64xf32>, vector<64x32xf32>, vector<16x32xf32> -> vector<16x32xf32>
    %c2_148 = arith.constant 2 : index
    %c2_149 = arith.constant 2 : index
    %c0_150 = arith.constant 0 : index
    %c0_151 = arith.constant 0 : index
    %211 = vector.load %arg3[%c2_148, %c2_149, %c0_150, %c0_151] : memref<3x4x1x32xf32, #tpu.memory_space<vmem>>, vector<1x1x1x32xf32>
    %212 = vector.shape_cast %211 : vector<1x1x1x32xf32> to vector<1x32xf32>
    %213 = vector.broadcast %212 : vector<1x32xf32> to vector<16x32xf32>
    %214 = arith.addf %210, %213 : vector<16x32xf32>
    %215 = vector.shape_cast %200 : vector<16x32xf32> to vector<2x8x32xf32>
    %216 = vector.shape_cast %207 : vector<16x32xf32> to vector<2x8x32xf32>
    %217 = vector.shape_cast %214 : vector<16x32xf32> to vector<2x8x32xf32>
    "tpu.trace_start"() <{level = 10 : i32, message = "bqd,bkd->bqk"}> : () -> ()
    %cst_152 = arith.constant dense<0.000000e+00> : vector<2x8x8xf32>
    %218 = tpu.matmul %215, %216, %cst_152 {dimension_numbers = #tpu.dot_dimension_numbers<[2], [2], [1], [1], [0, 0, 0, 1, 1, 1], [0], [0]>} : vector<2x8x32xf32>, vector<2x8x32xf32>, vector<2x8x8xf32> -> vector<2x8x8xf32>
    "tpu.trace_stop"() : () -> ()
    %cst_153 = arith.constant dense<0xFF800000> : vector<2x8xf32>
    %219 = vector.multi_reduction <maximumf>, %218, %cst_153 [2] : vector<2x8x8xf32> to vector<2x8xf32>
    %220 = vector.shape_cast %219 : vector<2x8xf32> to vector<2x8x1xf32>
    %221 = vector.broadcast %220 : vector<2x8x1xf32> to vector<2x8x8xf32>
    %222 = arith.subf %218, %221 : vector<2x8x8xf32>
    %223 = math.exp %222 : vector<2x8x8xf32>
    %cst_154 = arith.constant dense<0.000000e+00> : vector<2x8xf32>
    %224 = vector.multi_reduction <add>, %223, %cst_154 [2] : vector<2x8x8xf32> to vector<2x8xf32>
    %225 = vector.shape_cast %224 : vector<2x8xf32> to vector<2x8x1xf32>
    %226 = tpu.reciprocal %225 {approx = true} : vector<2x8x1xf32> -> vector<2x8x1xf32>
    %227 = vector.broadcast %226 : vector<2x8x1xf32> to vector<2x8x8xf32>
    %228 = arith.mulf %223, %227 : vector<2x8x8xf32>
    "tpu.trace_start"() <{level = 10 : i32, message = "bqk,bkd->bqd"}> : () -> ()
    %cst_155 = arith.constant dense<0.000000e+00> : vector<2x8x32xf32>
    %229 = tpu.matmul %228, %217, %cst_155 {dimension_numbers = #tpu.dot_dimension_numbers<[2], [1], [1], [2], [0, 0, 0, 1, 1, 2], [0], [0]>} : vector<2x8x8xf32>, vector<2x8x32xf32>, vector<2x8x32xf32> -> vector<2x8x32xf32>
    "tpu.trace_stop"() : () -> ()
    %230 = vector.shape_cast %229 : vector<2x8x32xf32> to vector<16x32xf32>
    %c2_156 = arith.constant 2 : index
    %c0_157 = arith.constant 0 : index
    %c0_158 = arith.constant 0 : index
    %231 = vector.load %arg4[%c2_156, %c0_157, %c0_158] : memref<4x32x64xf32, #tpu.memory_space<vmem>>, vector<1x32x64xf32>
    %232 = vector.shape_cast %231 : vector<1x32x64xf32> to vector<32x64xf32>
    %cst_159 = arith.constant dense<0.000000e+00> : vector<16x64xf32>
    %233 = tpu.matmul %230, %232, %cst_159 {dimension_numbers = #tpu.dot_dimension_numbers<[1], [0], [0], [1], [0, 0, 1, 1], [], []>} : vector<16x32xf32>, vector<32x64xf32>, vector<16x64xf32> -> vector<16x64xf32>
    %234 = vector.broadcast %193 : vector<1x64xf32> to vector<16x64xf32>
    %235 = arith.addf %234, %233 : vector<16x64xf32>
    %c0_160 = arith.constant 0 : index
    %c3_161 = arith.constant 3 : index
    %c0_162 = arith.constant 0 : index
    %c0_163 = arith.constant 0 : index
    %236 = vector.load %arg2[%c0_160, %c3_161, %c0_162, %c0_163] : memref<3x4x64x32xf32, #tpu.memory_space<vmem>>, vector<1x1x64x32xf32>
    %237 = vector.shape_cast %236 : vector<1x1x64x32xf32> to vector<64x32xf32>
    %cst_164 = arith.constant dense<0.000000e+00> : vector<16x32xf32>
    %238 = tpu.matmul %192, %237, %cst_164 {dimension_numbers = #tpu.dot_dimension_numbers<[1], [0], [0], [1], [0, 0, 1, 1], [], []>} : vector<16x64xf32>, vector<64x32xf32>, vector<16x32xf32> -> vector<16x32xf32>
    %c0_165 = arith.constant 0 : index
    %c3_166 = arith.constant 3 : index
    %c0_167 = arith.constant 0 : index
    %c0_168 = arith.constant 0 : index
    %239 = vector.load %arg3[%c0_165, %c3_166, %c0_167, %c0_168] : memref<3x4x1x32xf32, #tpu.memory_space<vmem>>, vector<1x1x1x32xf32>
    %240 = vector.shape_cast %239 : vector<1x1x1x32xf32> to vector<1x32xf32>
    %241 = vector.broadcast %240 : vector<1x32xf32> to vector<16x32xf32>
    %242 = arith.addf %238, %241 : vector<16x32xf32>
    %c1_169 = arith.constant 1 : index
    %c3_170 = arith.constant 3 : index
    %c0_171 = arith.constant 0 : index
    %c0_172 = arith.constant 0 : index
    %243 = vector.load %arg2[%c1_169, %c3_170, %c0_171, %c0_172] : memref<3x4x64x32xf32, #tpu.memory_space<vmem>>, vector<1x1x64x32xf32>
    %244 = vector.shape_cast %243 : vector<1x1x64x32xf32> to vector<64x32xf32>
    %cst_173 = arith.constant dense<0.000000e+00> : vector<16x32xf32>
    %245 = tpu.matmul %192, %244, %cst_173 {dimension_numbers = #tpu.dot_dimension_numbers<[1], [0], [0], [1], [0, 0, 1, 1], [], []>} : vector<16x64xf32>, vector<64x32xf32>, vector<16x32xf32> -> vector<16x32xf32>
    %c1_174 = arith.constant 1 : index
    %c3_175 = arith.constant 3 : index
    %c0_176 = arith.constant 0 : index
    %c0_177 = arith.constant 0 : index
    %246 = vector.load %arg3[%c1_174, %c3_175, %c0_176, %c0_177] : memref<3x4x1x32xf32, #tpu.memory_space<vmem>>, vector<1x1x1x32xf32>
    %247 = vector.shape_cast %246 : vector<1x1x1x32xf32> to vector<1x32xf32>
    %248 = vector.broadcast %247 : vector<1x32xf32> to vector<16x32xf32>
    %249 = arith.addf %245, %248 : vector<16x32xf32>
    %c2_178 = arith.constant 2 : index
    %c3_179 = arith.constant 3 : index
    %c0_180 = arith.constant 0 : index
    %c0_181 = arith.constant 0 : index
    %250 = vector.load %arg2[%c2_178, %c3_179, %c0_180, %c0_181] : memref<3x4x64x32xf32, #tpu.memory_space<vmem>>, vector<1x1x64x32xf32>
    %251 = vector.shape_cast %250 : vector<1x1x64x32xf32> to vector<64x32xf32>
    %cst_182 = arith.constant dense<0.000000e+00> : vector<16x32xf32>
    %252 = tpu.matmul %192, %251, %cst_182 {dimension_numbers = #tpu.dot_dimension_numbers<[1], [0], [0], [1], [0, 0, 1, 1], [], []>} : vector<16x64xf32>, vector<64x32xf32>, vector<16x32xf32> -> vector<16x32xf32>
    %c2_183 = arith.constant 2 : index
    %c3_184 = arith.constant 3 : index
    %c0_185 = arith.constant 0 : index
    %c0_186 = arith.constant 0 : index
    %253 = vector.load %arg3[%c2_183, %c3_184, %c0_185, %c0_186] : memref<3x4x1x32xf32, #tpu.memory_space<vmem>>, vector<1x1x1x32xf32>
    %254 = vector.shape_cast %253 : vector<1x1x1x32xf32> to vector<1x32xf32>
    %255 = vector.broadcast %254 : vector<1x32xf32> to vector<16x32xf32>
    %256 = arith.addf %252, %255 : vector<16x32xf32>
    %257 = vector.shape_cast %242 : vector<16x32xf32> to vector<2x8x32xf32>
    %258 = vector.shape_cast %249 : vector<16x32xf32> to vector<2x8x32xf32>
    %259 = vector.shape_cast %256 : vector<16x32xf32> to vector<2x8x32xf32>
    "tpu.trace_start"() <{level = 10 : i32, message = "bqd,bkd->bqk"}> : () -> ()
    %cst_187 = arith.constant dense<0.000000e+00> : vector<2x8x8xf32>
    %260 = tpu.matmul %257, %258, %cst_187 {dimension_numbers = #tpu.dot_dimension_numbers<[2], [2], [1], [1], [0, 0, 0, 1, 1, 1], [0], [0]>} : vector<2x8x32xf32>, vector<2x8x32xf32>, vector<2x8x8xf32> -> vector<2x8x8xf32>
    "tpu.trace_stop"() : () -> ()
    %cst_188 = arith.constant dense<0xFF800000> : vector<2x8xf32>
    %261 = vector.multi_reduction <maximumf>, %260, %cst_188 [2] : vector<2x8x8xf32> to vector<2x8xf32>
    %262 = vector.shape_cast %261 : vector<2x8xf32> to vector<2x8x1xf32>
    %263 = vector.broadcast %262 : vector<2x8x1xf32> to vector<2x8x8xf32>
    %264 = arith.subf %260, %263 : vector<2x8x8xf32>
    %265 = math.exp %264 : vector<2x8x8xf32>
    %cst_189 = arith.constant dense<0.000000e+00> : vector<2x8xf32>
    %266 = vector.multi_reduction <add>, %265, %cst_189 [2] : vector<2x8x8xf32> to vector<2x8xf32>
    %267 = vector.shape_cast %266 : vector<2x8xf32> to vector<2x8x1xf32>
    %268 = tpu.reciprocal %267 {approx = true} : vector<2x8x1xf32> -> vector<2x8x1xf32>
    %269 = vector.broadcast %268 : vector<2x8x1xf32> to vector<2x8x8xf32>
    %270 = arith.mulf %265, %269 : vector<2x8x8xf32>
    "tpu.trace_start"() <{level = 10 : i32, message = "bqk,bkd->bqd"}> : () -> ()
    %cst_190 = arith.constant dense<0.000000e+00> : vector<2x8x32xf32>
    %271 = tpu.matmul %270, %259, %cst_190 {dimension_numbers = #tpu.dot_dimension_numbers<[2], [1], [1], [2], [0, 0, 0, 1, 1, 2], [0], [0]>} : vector<2x8x8xf32>, vector<2x8x32xf32>, vector<2x8x32xf32> -> vector<2x8x32xf32>
    "tpu.trace_stop"() : () -> ()
    %272 = vector.shape_cast %271 : vector<2x8x32xf32> to vector<16x32xf32>
    %c3_191 = arith.constant 3 : index
    %c0_192 = arith.constant 0 : index
    %c0_193 = arith.constant 0 : index
    %273 = vector.load %arg4[%c3_191, %c0_192, %c0_193] : memref<4x32x64xf32, #tpu.memory_space<vmem>>, vector<1x32x64xf32>
    %274 = vector.shape_cast %273 : vector<1x32x64xf32> to vector<32x64xf32>
    %cst_194 = arith.constant dense<0.000000e+00> : vector<16x64xf32>
    %275 = tpu.matmul %272, %274, %cst_194 {dimension_numbers = #tpu.dot_dimension_numbers<[1], [0], [0], [1], [0, 0, 1, 1], [], []>} : vector<16x32xf32>, vector<32x64xf32>, vector<16x64xf32> -> vector<16x64xf32>
    %276 = arith.addf %235, %275 : vector<16x64xf32>
    %277 = arith.addf %276, %192 : vector<16x64xf32>
    %c11 = arith.constant 11 : index
    %c0_195 = arith.constant 0 : index
    %278 = vector.load %arg8[%c11, %c0_195] : memref<19x64xf32, #tpu.memory_space<vmem>>, vector<1x64xf32>
    %c12 = arith.constant 12 : index
    %c0_196 = arith.constant 0 : index
    %279 = vector.load %arg8[%c12, %c0_196] : memref<19x64xf32, #tpu.memory_space<vmem>>, vector<1x64xf32>
    %cst_197 = arith.constant dense<0.000000e+00> : vector<16xf32>
    %280 = vector.multi_reduction <add>, %277, %cst_197 [1] : vector<16x64xf32> to vector<16xf32>
    %281 = vector.shape_cast %280 : vector<16xf32> to vector<16x1xf32>
    %cst_198 = arith.constant 6.400000e+01 : f32
    %282 = vector.broadcast %cst_198 : f32 to vector<16x1xf32>
    %283 = arith.divf %281, %282 : vector<16x1xf32>
    %284 = vector.broadcast %283 : vector<16x1xf32> to vector<16x64xf32>
    %285 = arith.subf %277, %284 : vector<16x64xf32>
    %286 = arith.mulf %285, %285 : vector<16x64xf32>
    %cst_199 = arith.constant dense<0.000000e+00> : vector<16xf32>
    %287 = vector.multi_reduction <add>, %286, %cst_199 [1] : vector<16x64xf32> to vector<16xf32>
    %288 = vector.shape_cast %287 : vector<16xf32> to vector<16x1xf32>
    %cst_200 = arith.constant 6.400000e+01 : f32
    %289 = vector.broadcast %cst_200 : f32 to vector<16x1xf32>
    %290 = arith.divf %288, %289 : vector<16x1xf32>
    %cst_201 = arith.constant 9.99999996E-13 : f32
    %291 = vector.broadcast %cst_201 : f32 to vector<16x1xf32>
    %292 = arith.addf %290, %291 : vector<16x1xf32>
    %293 = math.rsqrt %292 : vector<16x1xf32>
    %294 = vector.broadcast %293 : vector<16x1xf32> to vector<16x64xf32>
    %295 = arith.mulf %285, %294 : vector<16x64xf32>
    %296 = vector.broadcast %278 : vector<1x64xf32> to vector<16x64xf32>
    %297 = arith.mulf %295, %296 : vector<16x64xf32>
    %298 = vector.broadcast %279 : vector<1x64xf32> to vector<16x64xf32>
    %299 = arith.addf %297, %298 : vector<16x64xf32>
    %c1_202 = arith.constant 1 : index
    %c0_203 = arith.constant 0 : index
    %c0_204 = arith.constant 0 : index
    %300 = vector.load %arg5[%c1_202, %c0_203, %c0_204] : memref<3x64x128xf32, #tpu.memory_space<vmem>>, vector<1x64x128xf32>
    %301 = vector.shape_cast %300 : vector<1x64x128xf32> to vector<64x128xf32>
    %cst_205 = arith.constant dense<0.000000e+00> : vector<16x128xf32>
    %302 = tpu.matmul %299, %301, %cst_205 {dimension_numbers = #tpu.dot_dimension_numbers<[1], [0], [0], [1], [0, 0, 1, 1], [], []>} : vector<16x64xf32>, vector<64x128xf32>, vector<16x128xf32> -> vector<16x128xf32>
    %c1_206 = arith.constant 1 : index
    %c0_207 = arith.constant 0 : index
    %303 = vector.load %arg9[%c1_206, %c0_207] : memref<3x128xf32, #tpu.memory_space<vmem>>, vector<1x128xf32>
    %304 = vector.broadcast %303 : vector<1x128xf32> to vector<16x128xf32>
    %305 = arith.addf %302, %304 : vector<16x128xf32>
    %cst_208 = arith.constant 5.000000e-01 : f32
    %306 = vector.broadcast %cst_208 : f32 to vector<16x128xf32>
    %307 = arith.mulf %306, %305 : vector<16x128xf32>
    %cst_209 = arith.constant 4.471500e-02 : f32
    %308 = vector.broadcast %cst_209 : f32 to vector<16x128xf32>
    %309 = arith.mulf %308, %305 : vector<16x128xf32>
    %310 = arith.mulf %309, %305 : vector<16x128xf32>
    %311 = arith.mulf %310, %305 : vector<16x128xf32>
    %312 = arith.addf %305, %311 : vector<16x128xf32>
    %cst_210 = arith.constant 0.797884583 : f32
    %313 = vector.broadcast %cst_210 : f32 to vector<16x128xf32>
    %314 = arith.mulf %313, %312 : vector<16x128xf32>
    %315 = math.tanh %314 : vector<16x128xf32>
    %cst_211 = arith.constant 1.000000e+00 : f32
    %316 = vector.broadcast %cst_211 : f32 to vector<16x128xf32>
    %317 = arith.addf %316, %315 : vector<16x128xf32>
    %318 = arith.mulf %307, %317 : vector<16x128xf32>
    %c1_212 = arith.constant 1 : index
    %c0_213 = arith.constant 0 : index
    %c0_214 = arith.constant 0 : index
    %319 = vector.load %arg6[%c1_212, %c0_213, %c0_214] : memref<3x128x64xf32, #tpu.memory_space<vmem>>, vector<1x128x64xf32>
    %320 = vector.shape_cast %319 : vector<1x128x64xf32> to vector<128x64xf32>
    %cst_215 = arith.constant dense<0.000000e+00> : vector<16x64xf32>
    %321 = tpu.matmul %318, %320, %cst_215 {dimension_numbers = #tpu.dot_dimension_numbers<[1], [0], [0], [1], [0, 0, 1, 1], [], []>} : vector<16x128xf32>, vector<128x64xf32>, vector<16x64xf32> -> vector<16x64xf32>
    %c13 = arith.constant 13 : index
    %c0_216 = arith.constant 0 : index
    %322 = vector.load %arg8[%c13, %c0_216] : memref<19x64xf32, #tpu.memory_space<vmem>>, vector<1x64xf32>
    %323 = vector.broadcast %322 : vector<1x64xf32> to vector<16x64xf32>
    %324 = arith.addf %321, %323 : vector<16x64xf32>
    %325 = arith.addf %324, %299 : vector<16x64xf32>
    %c14 = arith.constant 14 : index
    %c0_217 = arith.constant 0 : index
    %326 = vector.load %arg8[%c14, %c0_217] : memref<19x64xf32, #tpu.memory_space<vmem>>, vector<1x64xf32>
    %c15 = arith.constant 15 : index
    %c0_218 = arith.constant 0 : index
    %327 = vector.load %arg8[%c15, %c0_218] : memref<19x64xf32, #tpu.memory_space<vmem>>, vector<1x64xf32>
    %cst_219 = arith.constant dense<0.000000e+00> : vector<16xf32>
    %328 = vector.multi_reduction <add>, %325, %cst_219 [1] : vector<16x64xf32> to vector<16xf32>
    %329 = vector.shape_cast %328 : vector<16xf32> to vector<16x1xf32>
    %cst_220 = arith.constant 6.400000e+01 : f32
    %330 = vector.broadcast %cst_220 : f32 to vector<16x1xf32>
    %331 = arith.divf %329, %330 : vector<16x1xf32>
    %332 = vector.broadcast %331 : vector<16x1xf32> to vector<16x64xf32>
    %333 = arith.subf %325, %332 : vector<16x64xf32>
    %334 = arith.mulf %333, %333 : vector<16x64xf32>
    %cst_221 = arith.constant dense<0.000000e+00> : vector<16xf32>
    %335 = vector.multi_reduction <add>, %334, %cst_221 [1] : vector<16x64xf32> to vector<16xf32>
    %336 = vector.shape_cast %335 : vector<16xf32> to vector<16x1xf32>
    %cst_222 = arith.constant 6.400000e+01 : f32
    %337 = vector.broadcast %cst_222 : f32 to vector<16x1xf32>
    %338 = arith.divf %336, %337 : vector<16x1xf32>
    %cst_223 = arith.constant 9.99999996E-13 : f32
    %339 = vector.broadcast %cst_223 : f32 to vector<16x1xf32>
    %340 = arith.addf %338, %339 : vector<16x1xf32>
    %341 = math.rsqrt %340 : vector<16x1xf32>
    %342 = vector.broadcast %341 : vector<16x1xf32> to vector<16x64xf32>
    %343 = arith.mulf %333, %342 : vector<16x64xf32>
    %344 = vector.broadcast %326 : vector<1x64xf32> to vector<16x64xf32>
    %345 = arith.mulf %343, %344 : vector<16x64xf32>
    %346 = vector.broadcast %327 : vector<1x64xf32> to vector<16x64xf32>
    %347 = arith.addf %345, %346 : vector<16x64xf32>
    %cst_224 = arith.constant dense<0.000000e+00> : vector<16x64xf32>
    %348 = tpu.matmul %347, %6, %cst_224 {dimension_numbers = #tpu.dot_dimension_numbers<[1], [0], [0], [1], [0, 0, 1, 1], [], []>} : vector<16x64xf32>, vector<64x64xf32>, vector<16x64xf32> -> vector<16x64xf32>
    %c16 = arith.constant 16 : index
    %c0_225 = arith.constant 0 : index
    %349 = vector.load %arg8[%c16, %c0_225] : memref<19x64xf32, #tpu.memory_space<vmem>>, vector<1x64xf32>
    %350 = vector.broadcast %349 : vector<1x64xf32> to vector<16x64xf32>
    %351 = arith.addf %348, %350 : vector<16x64xf32>
    %cst_226 = arith.constant 5.000000e-01 : f32
    %352 = vector.broadcast %cst_226 : f32 to vector<16x64xf32>
    %353 = arith.mulf %352, %351 : vector<16x64xf32>
    %cst_227 = arith.constant 4.471500e-02 : f32
    %354 = vector.broadcast %cst_227 : f32 to vector<16x64xf32>
    %355 = arith.mulf %354, %351 : vector<16x64xf32>
    %356 = arith.mulf %355, %351 : vector<16x64xf32>
    %357 = arith.mulf %356, %351 : vector<16x64xf32>
    %358 = arith.addf %351, %357 : vector<16x64xf32>
    %cst_228 = arith.constant 0.797884583 : f32
    %359 = vector.broadcast %cst_228 : f32 to vector<16x64xf32>
    %360 = arith.mulf %359, %358 : vector<16x64xf32>
    %361 = math.tanh %360 : vector<16x64xf32>
    %cst_229 = arith.constant 1.000000e+00 : f32
    %362 = vector.broadcast %cst_229 : f32 to vector<16x64xf32>
    %363 = arith.addf %362, %361 : vector<16x64xf32>
    %364 = arith.mulf %353, %363 : vector<16x64xf32>
    %c17 = arith.constant 17 : index
    %c0_230 = arith.constant 0 : index
    %365 = vector.load %arg8[%c17, %c0_230] : memref<19x64xf32, #tpu.memory_space<vmem>>, vector<1x64xf32>
    %c18 = arith.constant 18 : index
    %c0_231 = arith.constant 0 : index
    %366 = vector.load %arg8[%c18, %c0_231] : memref<19x64xf32, #tpu.memory_space<vmem>>, vector<1x64xf32>
    %cst_232 = arith.constant dense<0.000000e+00> : vector<16xf32>
    %367 = vector.multi_reduction <add>, %364, %cst_232 [1] : vector<16x64xf32> to vector<16xf32>
    %368 = vector.shape_cast %367 : vector<16xf32> to vector<16x1xf32>
    %cst_233 = arith.constant 6.400000e+01 : f32
    %369 = vector.broadcast %cst_233 : f32 to vector<16x1xf32>
    %370 = arith.divf %368, %369 : vector<16x1xf32>
    %371 = vector.broadcast %370 : vector<16x1xf32> to vector<16x64xf32>
    %372 = arith.subf %364, %371 : vector<16x64xf32>
    %373 = arith.mulf %372, %372 : vector<16x64xf32>
    %cst_234 = arith.constant dense<0.000000e+00> : vector<16xf32>
    %374 = vector.multi_reduction <add>, %373, %cst_234 [1] : vector<16x64xf32> to vector<16xf32>
    %375 = vector.shape_cast %374 : vector<16xf32> to vector<16x1xf32>
    %cst_235 = arith.constant 6.400000e+01 : f32
    %376 = vector.broadcast %cst_235 : f32 to vector<16x1xf32>
    %377 = arith.divf %375, %376 : vector<16x1xf32>
    %cst_236 = arith.constant 9.99999996E-13 : f32
    %378 = vector.broadcast %cst_236 : f32 to vector<16x1xf32>
    %379 = arith.addf %377, %378 : vector<16x1xf32>
    %380 = math.rsqrt %379 : vector<16x1xf32>
    %381 = vector.broadcast %380 : vector<16x1xf32> to vector<16x64xf32>
    %382 = arith.mulf %372, %381 : vector<16x64xf32>
    %383 = vector.broadcast %365 : vector<1x64xf32> to vector<16x64xf32>
    %384 = arith.mulf %382, %383 : vector<16x64xf32>
    %385 = vector.broadcast %366 : vector<1x64xf32> to vector<16x64xf32>
    %386 = arith.addf %384, %385 : vector<16x64xf32>
    %cst_237 = arith.constant dense<0.000000e+00> : vector<16x128xf32>
    %387 = tpu.matmul %386, %8, %cst_237 {dimension_numbers = #tpu.dot_dimension_numbers<[1], [0], [0], [1], [0, 0, 1, 1], [], []>} : vector<16x64xf32>, vector<64x128xf32>, vector<16x128xf32> -> vector<16x128xf32>
    %c2_238 = arith.constant 2 : index
    %c0_239 = arith.constant 0 : index
    %388 = vector.load %arg9[%c2_238, %c0_239] : memref<3x128xf32, #tpu.memory_space<vmem>>, vector<1x128xf32>
    %389 = vector.broadcast %388 : vector<1x128xf32> to vector<16x128xf32>
    %390 = arith.addf %387, %389 : vector<16x128xf32>
    %cst_240 = arith.constant dense<0xFF800000> : vector<16xf32>
    %391 = vector.multi_reduction <maximumf>, %390, %cst_240 [1] : vector<16x128xf32> to vector<16xf32>
    %392 = vector.shape_cast %391 : vector<16xf32> to vector<16x1xf32>
    %393 = vector.broadcast %392 : vector<16x1xf32> to vector<16x128xf32>
    %394 = arith.subf %390, %393 : vector<16x128xf32>
    %395 = math.exp %394 : vector<16x128xf32>
    %cst_241 = arith.constant dense<0.000000e+00> : vector<16xf32>
    %396 = vector.multi_reduction <add>, %395, %cst_241 [1] : vector<16x128xf32> to vector<16xf32>
    %397 = vector.shape_cast %396 : vector<16xf32> to vector<16x1xf32>
    %398 = vector.broadcast %397 : vector<16x1xf32> to vector<16x128xf32>
    %399 = arith.divf %395, %398 : vector<16x128xf32>
    %cst_242 = arith.constant dense<0.000000e+00> : vector<16x64xf32>
    %400 = tpu.matmul %399, %10, %cst_242 {dimension_numbers = #tpu.dot_dimension_numbers<[1], [0], [0], [1], [0, 0, 1, 1], [], []>} : vector<16x128xf32>, vector<128x64xf32>, vector<16x64xf32> -> vector<16x64xf32>
    %401 = arith.subf %400, %5 : vector<16x64xf32>
    %402 = arith.mulf %401, %401 : vector<16x64xf32>
    %403 = vector.shape_cast %402 : vector<16x64xf32> to vector<1x16x64xf32>
    %cst_243 = arith.constant dense<0.000000e+00> : vector<1xf32>
    %404 = vector.multi_reduction <add>, %403, %cst_243 [1, 2] : vector<1x16x64xf32> to vector<1xf32>
    %405 = vector.shape_cast %404 : vector<1xf32> to vector<1x1x1xf32>
    %406 = vector.extract %405[0, 0, 0] : f32 from vector<1x1x1xf32>
    %407 = vector.broadcast %406 : f32 to vector<1x1xf32>
    %408 = arith.addf %11, %407 : vector<1x1xf32>
    %cst_244 = arith.constant 0.00316227763 : f32
    %409 = vector.broadcast %cst_244 : f32 to vector<16x64xf32>
    %410 = arith.mulf %409, %400 : vector<16x64xf32>
    %411 = arith.subf %3, %410 : vector<16x64xf32>
    %cst_245 = arith.constant 0.999994993 : f32
    %412 = vector.broadcast %cst_245 : f32 to vector<16x64xf32>
    %413 = arith.divf %411, %412 : vector<16x64xf32>
    %cst_246 = arith.constant 0.00316227763 : f32
    %414 = vector.broadcast %cst_246 : f32 to vector<16x64xf32>
    %415 = arith.divf %3, %414 : vector<16x64xf32>
    %cst_247 = arith.constant -314.672424 : f32
    %416 = vector.broadcast %cst_247 : f32 to vector<16x64xf32>
    %417 = arith.mulf %416, %413 : vector<16x64xf32>
    %418 = arith.addf %415, %417 : vector<16x64xf32>
    %cst_248 = arith.constant 0.541196108 : f32
    %419 = vector.broadcast %cst_248 : f32 to vector<16x64xf32>
    %420 = arith.mulf %419, %418 : vector<16x64xf32>
    %cst_249 = arith.constant dense<0.000000e+00> : vector<16x64xf32>
    %421 = tpu.matmul %420, %6, %cst_249 {dimension_numbers = #tpu.dot_dimension_numbers<[1], [0], [0], [1], [0, 0, 1, 1], [], []>} : vector<16x64xf32>, vector<64x64xf32>, vector<16x64xf32> -> vector<16x64xf32>
    %c16_250 = arith.constant 16 : index
    %c0_251 = arith.constant 0 : index
    %422 = vector.load %arg8[%c16_250, %c0_251] : memref<19x64xf32, #tpu.memory_space<vmem>>, vector<1x64xf32>
    %423 = vector.broadcast %422 : vector<1x64xf32> to vector<16x64xf32>
    %424 = arith.addf %421, %423 : vector<16x64xf32>
    %cst_252 = arith.constant 5.000000e-01 : f32
    %425 = vector.broadcast %cst_252 : f32 to vector<16x64xf32>
    %426 = arith.mulf %425, %424 : vector<16x64xf32>
    %cst_253 = arith.constant 4.471500e-02 : f32
    %427 = vector.broadcast %cst_253 : f32 to vector<16x64xf32>
    %428 = arith.mulf %427, %424 : vector<16x64xf32>
    %429 = arith.mulf %428, %424 : vector<16x64xf32>
    %430 = arith.mulf %429, %424 : vector<16x64xf32>
    %431 = arith.addf %424, %430 : vector<16x64xf32>
    %cst_254 = arith.constant 0.797884583 : f32
    %432 = vector.broadcast %cst_254 : f32 to vector<16x64xf32>
    %433 = arith.mulf %432, %431 : vector<16x64xf32>
    %434 = math.tanh %433 : vector<16x64xf32>
    %cst_255 = arith.constant 1.000000e+00 : f32
    %435 = vector.broadcast %cst_255 : f32 to vector<16x64xf32>
    %436 = arith.addf %435, %434 : vector<16x64xf32>
    %437 = arith.mulf %426, %436 : vector<16x64xf32>
    %c17_256 = arith.constant 17 : index
    %c0_257 = arith.constant 0 : index
    %438 = vector.load %arg8[%c17_256, %c0_257] : memref<19x64xf32, #tpu.memory_space<vmem>>, vector<1x64xf32>
    %c18_258 = arith.constant 18 : index
    %c0_259 = arith.constant 0 : index
    %439 = vector.load %arg8[%c18_258, %c0_259] : memref<19x64xf32, #tpu.memory_space<vmem>>, vector<1x64xf32>
    %cst_260 = arith.constant dense<0.000000e+00> : vector<16xf32>
    %440 = vector.multi_reduction <add>, %437, %cst_260 [1] : vector<16x64xf32> to vector<16xf32>
    %441 = vector.shape_cast %440 : vector<16xf32> to vector<16x1xf32>
    %cst_261 = arith.constant 6.400000e+01 : f32
    %442 = vector.broadcast %cst_261 : f32 to vector<16x1xf32>
    %443 = arith.divf %441, %442 : vector<16x1xf32>
    %444 = vector.broadcast %443 : vector<16x1xf32> to vector<16x64xf32>
    %445 = arith.subf %437, %444 : vector<16x64xf32>
    %446 = arith.mulf %445, %445 : vector<16x64xf32>
    %cst_262 = arith.constant dense<0.000000e+00> : vector<16xf32>
    %447 = vector.multi_reduction <add>, %446, %cst_262 [1] : vector<16x64xf32> to vector<16xf32>
    %448 = vector.shape_cast %447 : vector<16xf32> to vector<16x1xf32>
    %cst_263 = arith.constant 6.400000e+01 : f32
    %449 = vector.broadcast %cst_263 : f32 to vector<16x1xf32>
    %450 = arith.divf %448, %449 : vector<16x1xf32>
    %cst_264 = arith.constant 9.99999996E-13 : f32
    %451 = vector.broadcast %cst_264 : f32 to vector<16x1xf32>
    %452 = arith.addf %450, %451 : vector<16x1xf32>
    %453 = math.rsqrt %452 : vector<16x1xf32>
    %454 = vector.broadcast %453 : vector<16x1xf32> to vector<16x64xf32>
    %455 = arith.mulf %445, %454 : vector<16x64xf32>
    %456 = vector.broadcast %438 : vector<1x64xf32> to vector<16x64xf32>
    %457 = arith.mulf %455, %456 : vector<16x64xf32>
    %458 = vector.broadcast %439 : vector<1x64xf32> to vector<16x64xf32>
    %459 = arith.addf %457, %458 : vector<16x64xf32>
    %cst_265 = arith.constant dense<0.000000e+00> : vector<16x128xf32>
    %460 = tpu.matmul %459, %8, %cst_265 {dimension_numbers = #tpu.dot_dimension_numbers<[1], [0], [0], [1], [0, 0, 1, 1], [], []>} : vector<16x64xf32>, vector<64x128xf32>, vector<16x128xf32> -> vector<16x128xf32>
    %c2_266 = arith.constant 2 : index
    %c0_267 = arith.constant 0 : index
    %461 = vector.load %arg9[%c2_266, %c0_267] : memref<3x128xf32, #tpu.memory_space<vmem>>, vector<1x128xf32>
    %462 = vector.broadcast %461 : vector<1x128xf32> to vector<16x128xf32>
    %463 = arith.addf %460, %462 : vector<16x128xf32>
    %464 = vector.shape_cast %463 : vector<16x128xf32> to vector<2x8x128xf32>
    %c0_268 = arith.constant 0 : index
    %c0_269 = arith.constant 0 : index
    %c0_270 = arith.constant 0 : index
    %465 = vector.load %arg10[%c0_268, %c0_269, %c0_270] : memref<2x8x128xf32, #tpu.memory_space<vmem>>, vector<2x8x128xf32>
    tpu.vector_store %arg10[%c0_268, %c0_269, %c0_270], %464 {strides = array<i32>} : memref<2x8x128xf32, #tpu.memory_space<vmem>>, vector<2x8x128xf32>,
    %466 = arith.subf %420, %5 : vector<16x64xf32>
    %467 = arith.mulf %466, %466 : vector<16x64xf32>
    %468 = vector.shape_cast %467 : vector<16x64xf32> to vector<1x16x64xf32>
    %cst_271 = arith.constant dense<0.000000e+00> : vector<1xf32>
    %469 = vector.multi_reduction <add>, %468, %cst_271 [1, 2] : vector<1x16x64xf32> to vector<1xf32>
    %470 = vector.shape_cast %469 : vector<1xf32> to vector<1x1x1xf32>
    %471 = vector.extract %470[0, 0, 0] : f32 from vector<1x1x1xf32>
    %472 = vector.broadcast %471 : f32 to vector<1x1xf32>
    %c0_272 = arith.constant 0 : index
    %c0_273 = arith.constant 0 : index
    %473 = vector.load %arg1[%c0_272, %c0_273] : memref<16x1xi32, #tpu.memory_space<vmem>>, vector<16x1xi32>
    %cst_274 = arith.constant dense<0xFF800000> : vector<16xf32>
    %474 = vector.multi_reduction <maximumf>, %463, %cst_274 [1] : vector<16x128xf32> to vector<16xf32>
    %475 = vector.shape_cast %474 : vector<16xf32> to vector<16x1xf32>
    %476 = vector.broadcast %475 : vector<16x1xf32> to vector<16x128xf32>
    %477 = arith.subf %463, %476 : vector<16x128xf32>
    %478 = math.exp %477 : vector<16x128xf32>
    %cst_275 = arith.constant dense<0.000000e+00> : vector<16xf32>
    %479 = vector.multi_reduction <add>, %478, %cst_275 [1] : vector<16x128xf32> to vector<16xf32>
    %480 = vector.shape_cast %479 : vector<16xf32> to vector<16x1xf32>
    %481 = math.log %480 : vector<16x1xf32>
    %482 = arith.addf %481, %475 : vector<16x1xf32>
    %483 = tpu.iota {dimensions = array<i32: 1>} : vector<16x128xi32>
    %484 = vector.broadcast %473 : vector<16x1xi32> to vector<16x128xi32>
    %485 = arith.cmpi eq, %483, %484 : vector<16x128xi32>
    %486 = arith.extui %485 : vector<16x128xi1> to vector<16x128xi32>
    %487 = arith.sitofp %486 : vector<16x128xi32> to vector<16x128xf32>
    %488 = arith.mulf %463, %487 : vector<16x128xf32>
    %cst_276 = arith.constant dense<0.000000e+00> : vector<16xf32>
    %489 = vector.multi_reduction <add>, %488, %cst_276 [1] : vector<16x128xf32> to vector<16xf32>
    %490 = vector.shape_cast %489 : vector<16xf32> to vector<16x1xf32>
    %491 = arith.subf %482, %490 : vector<16x1xf32>
    %c0_i32 = arith.constant 0 : i32
    %492 = vector.broadcast %c0_i32 : i32 to vector<16x1xi32>
    %493 = arith.cmpi ne, %473, %492 : vector<16x1xi32>
    %494 = arith.extui %493 : vector<16x1xi1> to vector<16x1xi32>
    %495 = arith.sitofp %494 : vector<16x1xi32> to vector<16x1xf32>
    %496 = arith.mulf %491, %495 : vector<16x1xf32>
    %497 = vector.shape_cast %496 : vector<16x1xf32> to vector<1x16x1xf32>
    %cst_277 = arith.constant dense<0.000000e+00> : vector<1xf32>
    %498 = vector.multi_reduction <add>, %497, %cst_277 [1, 2] : vector<1x16x1xf32> to vector<1xf32>
    %499 = vector.shape_cast %498 : vector<1xf32> to vector<1x1x1xf32>
    %500 = vector.extract %499[0, 0, 0] : f32 from vector<1x1x1xf32>
    %501 = vector.broadcast %500 : f32 to vector<1x1xf32>
    %502 = vector.shape_cast %495 : vector<16x1xf32> to vector<1x16x1xf32>
    %cst_278 = arith.constant dense<0.000000e+00> : vector<1xf32>
    %503 = vector.multi_reduction <add>, %502, %cst_278 [1, 2] : vector<1x16x1xf32> to vector<1xf32>
    %504 = vector.shape_cast %503 : vector<1xf32> to vector<1x1x1xf32>
    %505 = vector.extract %504[0, 0, 0] : f32 from vector<1x1x1xf32>
    %506 = vector.broadcast %505 : f32 to vector<1x1xf32>
    %cst_279 = arith.constant 1.024000e+03 : f32
    %507 = vector.broadcast %cst_279 : f32 to vector<1x1xf32>
    %508 = arith.divf %408, %507 : vector<1x1xf32>
    %cst_280 = arith.constant 1.024000e+03 : f32
    %509 = vector.broadcast %cst_280 : f32 to vector<1x1xf32>
    %510 = arith.divf %472, %509 : vector<1x1xf32>
    %511 = arith.addf %508, %510 : vector<1x1xf32>
    %cst_281 = arith.constant 1.000000e+00 : f32
    %512 = vector.broadcast %cst_281 : f32 to vector<1x1xf32>
    %513 = arith.maximumf %506, %512 : vector<1x1xf32>
    %514 = arith.divf %501, %513 : vector<1x1xf32>
    %515 = arith.addf %511, %514 : vector<1x1xf32>
    %c0_282 = arith.constant 0 : index
    %c0_283 = arith.constant 0 : index
    %516 = vector.load %arg11[%c0_282, %c0_283] : memref<1x1xf32, #tpu.memory_space<vmem>>, vector<1x1xf32>
    tpu.vector_store %arg11[%c0_282, %c0_283], %515 {strides = array<i32>} : memref<1x1xf32, #tpu.memory_space<vmem>>, vector<1x1xf32>,
    return
  }
}

</mosaic_0001>

<llo_original>
// kernel: sdpe_forward.1
$region0: #{sdpe_forward.1}
  #allocation0 [shape = 'u32[]', space=smem, size = 0x4, offset = 0x4, fixed_abs, tag = 'smem constant byte address 0x4 - core index']
  #allocation1 [shape = 'u32[144,128]{1,0:T(1,128)}', space=vmem, size = 0x12000, scoped, tag = 'internal scratch']
  %s0 = inlined_call_operand.vmem [shape: f32[3,16,64], index: 0, kind: input, shape index: {}]
  %s1 = inlined_call_operand.vmem [shape: s32[16,1], index: 1, kind: input, shape index: {}]
  %s2 = inlined_call_operand.vmem [shape: f32[3,4,64,32], index: 2, kind: input, shape index: {}]
  %s3 = inlined_call_operand.vmem [shape: f32[3,4,1,32], index: 3, kind: input, shape index: {}]
  %s4 = inlined_call_operand.vmem [shape: f32[4,32,64], index: 4, kind: input, shape index: {}]
  %s5 = inlined_call_operand.vmem [shape: f32[3,64,128], index: 5, kind: input, shape index: {}]
  %s6 = inlined_call_operand.vmem [shape: f32[3,128,64], index: 6, kind: input, shape index: {}]
  %s7 = inlined_call_operand.vmem [shape: f32[64,64], index: 7, kind: input, shape index: {}]
  %s8 = inlined_call_operand.vmem [shape: f32[19,64], index: 8, kind: input, shape index: {}]
  %s9 = inlined_call_operand.vmem [shape: f32[3,128], index: 9, kind: input, shape index: {}]
  %s10 = inlined_call_operand.hbm [shape: f32[2,8,128], index: 10, kind: output, shape index: {0}]
  %s11 = inlined_call_operand.hbm [shape: f32[1,1], index: 11, kind: output, shape index: {1}]
  %12 = xla_tuple %s10, %s11
  %s13 = sld [smem:[#allocation0]]
  $region58: #{sdpe_forward.1} parent=0
    _
  %s15 = ssub.s32 1, %s13
  %s16 = scalar_select 0, %s15, %s13
  $region1: #{sdpe_forward.1} parent=0
    #allocation2 [shape = 'u8[8192]{0}', space=vmem, size = 0x2000, scoped, tag = 'output window, operand 0, single buffered']
    #allocation3 [shape = 's32[1]{0}', space=sflag, size = 0x4, scoped, tag = 'scoped memory for sdpe_forward.1']
    #allocation4 [shape = 'u8[512]{0}', space=vmem, size = 0x400, scoped, tag = 'output window, operand 1, single buffered']
    #allocation5 [shape = 's32[1]{0}', space=sflag, size = 0x4, scoped, tag = 'scoped memory for sdpe_forward.1']
    %17 = vsyncpa [#allocation3], 0
    %18 = vsyncpa [#allocation5], 0
    // Predicated region
    $region2: #{sdpe_forward.1} parent=1 // pred_check
      _
    $region3: #{sdpe_forward.1} parent=1 // pred_check_branch
      %20 = sbr.rel (0) target = $region5
    $region4: #{sdpe_forward.1} parent=1 // pred_region
      _
    $region5: #{sdpe_forward.1} parent=1 // pred_fallthru
      _
    // Predicated region
    $region6: #{sdpe_forward.1} parent=1 // pred_check
      _
    $region7: #{sdpe_forward.1} parent=1 // pred_check_branch
      %22 = sbr.rel (0) target = $region9
    $region8: #{sdpe_forward.1} parent=1 // pred_region
      _
    $region9: #{sdpe_forward.1} parent=1 // pred_fallthru
      _
    // Predicated region
    $region10: #{sdpe_forward.1} parent=1 // pred_check
      _
    $region11: #{sdpe_forward.1} parent=1 // pred_check_branch
      %24 = sbr.rel (0) target = $region13
    $region12: #{sdpe_forward.1} parent=1 // pred_region
      _
    $region13: #{sdpe_forward.1} parent=1 // pred_fallthru
      _
    // Predicated region
    $region14: #{sdpe_forward.1} parent=1 // pred_check
      _
    $region15: #{sdpe_forward.1} parent=1 // pred_check_branch
      %26 = sbr.rel (0) target = $region17
    $region16: #{sdpe_forward.1} parent=1 // pred_region
      _
    $region17: #{sdpe_forward.1} parent=1 // pred_fallthru
      _
    // Predicated region
    $region18: #{sdpe_forward.1} parent=1 // pred_check
      _
    $region19: #{sdpe_forward.1} parent=1 // pred_check_branch
      %28 = sbr.rel (0) target = $region21
    $region20: #{sdpe_forward.1} parent=1 // pred_region
      _
    $region21: #{sdpe_forward.1} parent=1 // pred_fallthru
      _
    // Predicated region
    $region22: #{sdpe_forward.1} parent=1 // pred_check
      _
    $region23: #{sdpe_forward.1} parent=1 // pred_check_branch
      %30 = sbr.rel (0) target = $region25
    $region24: #{sdpe_forward.1} parent=1 // pred_region
      _
    $region25: #{sdpe_forward.1} parent=1 // pred_fallthru
      _
    // Predicated region
    $region26: #{sdpe_forward.1} parent=1 // pred_check
      _
    $region27: #{sdpe_forward.1} parent=1 // pred_check_branch
      %32 = sbr.rel (0) target = $region29
    $region28: #{sdpe_forward.1} parent=1 // pred_region
      _
    $region29: #{sdpe_forward.1} parent=1 // pred_fallthru
      _
    // Predicated region
    $region30: #{sdpe_forward.1} parent=1 // pred_check
      _
    $region31: #{sdpe_forward.1} parent=1 // pred_check_branch
      %34 = sbr.rel (0) target = $region33
    $region32: #{sdpe_forward.1} parent=1 // pred_region
      _
    $region33: #{sdpe_forward.1} parent=1 // pred_fallthru
      _
    // Predicated region
    $region34: #{sdpe_forward.1} parent=1 // pred_check
      _
    $region35: #{sdpe_forward.1} parent=1 // pred_check_branch
      %36 = sbr.rel (0) target = $region37
    $region36: #{sdpe_forward.1} parent=1 // pred_region
      _
    $region37: #{sdpe_forward.1} parent=1 // pred_fallthru
      _
    // Predicated region
    $region38: #{sdpe_forward.1} parent=1 // pred_check
      _
    $region39: #{sdpe_forward.1} parent=1 // pred_check_branch
      %38 = sbr.rel (0) target = $region41
    $region40: #{sdpe_forward.1} parent=1 // pred_region
      _
    $region41: #{sdpe_forward.1} parent=1 // pred_fallthru
      _
    %v39 = vld [vmem:[%s0] sm:$0xff]
    %v40 = vld [vmem:[%s0 + $0x8] sm:$0xff]
    %s41 = scalar_lea.vmem %s0, 16
    %v42 = vld [vmem:[%s41] sm:$0xff]
    %v43 = vld [vmem:[%s41 + $0x8] sm:$0xff]
    %s44 = scalar_lea.vmem %s0, 32
    %v45 = vld [vmem:[%s44] sm:$0xff]
    %v46 = vld [vmem:[%s44 + $0x8] sm:$0xff]
    %v47 = vld [vmem:[%s7] sm:$0xff]
    %v48 = vld [vmem:[%s7 + $0x8] sm:$0xff]
    %v49 = vld [vmem:[%s7 + $0x10] sm:$0xff]
    %v50 = vld [vmem:[%s7 + $0x18] sm:$0xff]
    %v51 = vld [vmem:[%s7 + $0x20] sm:$0xff]
    %v52 = vld [vmem:[%s7 + $0x28] sm:$0xff]
    %v53 = vld [vmem:[%s7 + $0x30] sm:$0xff]
    %v54 = vld [vmem:[%s7 + $0x38] sm:$0xff]
    %s55 = scalar_lea.vmem %s5, 128
    %v56 = vld [vmem:[%s55] sm:$0xff]
    %v57 = vld [vmem:[%s55 + $0x8] sm:$0xff]
    %v58 = vld [vmem:[%s55 + $0x10] sm:$0xff]
    %v59 = vld [vmem:[%s55 + $0x18] sm:$0xff]
    %v60 = vld [vmem:[%s55 + $0x20] sm:$0xff]
    %v61 = vld [vmem:[%s55 + $0x28] sm:$0xff]
    %v62 = vld [vmem:[%s55 + $0x30] sm:$0xff]
    %v63 = vld [vmem:[%s55 + $0x38] sm:$0xff]
    %s64 = scalar_lea.vmem %s6, 256
    %v65 = vld [vmem:[%s64] sm:$0xff]
    %v66 = vld [vmem:[%s64 + $0x8] sm:$0xff]
    %v67 = vld [vmem:[%s64 + $0x10] sm:$0xff]
    %v68 = vld [vmem:[%s64 + $0x18] sm:$0xff]
    %v69 = vld [vmem:[%s64 + $0x20] sm:$0xff]
    %v70 = vld [vmem:[%s64 + $0x28] sm:$0xff]
    %v71 = vld [vmem:[%s64 + $0x30] sm:$0xff]
    %v72 = vld [vmem:[%s64 + $0x38] sm:$0xff]
    %v73 = vld [vmem:[%s64 + $0x40] sm:$0xff]
    %v74 = vld [vmem:[%s64 + $0x48] sm:$0xff]
    %v75 = vld [vmem:[%s64 + $0x50] sm:$0xff]
    %v76 = vld [vmem:[%s64 + $0x58] sm:$0xff]
    %v77 = vld [vmem:[%s64 + $0x60] sm:$0xff]
    %v78 = vld [vmem:[%s64 + $0x68] sm:$0xff]
    %v79 = vld [vmem:[%s64 + $0x70] sm:$0xff]
    %v80 = vld [vmem:[%s64 + $0x78] sm:$0xff]
    %v81 = vadd.f32 %v39, %v42
    %v82 = vadd.f32 %v40, %v43
    %v83 = vld [vmem:[%s8 + $0x3] sm:$0x1]
    %v84 = vlaneseq
    %v85 = vshrl.u32 %v84, 7
    %v86 = vsub.s32 0, %v85
    %v87 = vrot.slane %v83, %v86
    %v88 = vadd.f32 %v81, %v87
    %v89 = vadd.f32 %v82, %v87
    %v90 = vld [vmem:[%s8] sm:$0x1]
    %v91 = vld [vmem:[%s8 + $0x1] sm:$0x1]
    %vm92 = vcmask 523264
    %v93 = vsel %vm92, %v88, 0.0
    %94 = vadd.xlane.f32.xlu0 %v93
    %v95 = vpop.xlane.xlu0 %94
    %v96 = vsel %vm92, %v89, 0.0
    %97 = vadd.xlane.f32.xlu0 %v96
    %v98 = vpop.xlane.xlu0 %97
    %v99 = vrcp.pop 64.0
    %v100 = vmul.f32 %v95, %v99
    %v101 = vmul.f32 %v98, %v99
    %v102 = vsub.f32 %v88, %v100
    %v103 = vsub.f32 %v89, %v101
    %v104 = vmul.f32 %v102, %v102
    %v105 = vmul.f32 %v103, %v103
    %v106 = vsel %vm92, %v104, 0.0
    %107 = vadd.xlane.f32.xlu0 %v106
    %v108 = vpop.xlane.xlu0 %107
    %v109 = vsel %vm92, %v105, 0.0
    %110 = vadd.xlane.f32.xlu0 %v109
    %v111 = vpop.xlane.xlu0 %110
    %v112 = vmul.f32 %v108, %v99
    %v113 = vmul.f32 %v111, %v99
    %v114 = vadd.f32 %v112, 1e-12
    %v115 = vadd.f32 %v113, 1e-12
    %v116 = vrsqrt.pop %v114
    %v117 = vrsqrt.pop %v115
    %v118 = vmul.f32 %v102, %v116
    %v119 = vmul.f32 %v103, %v117
    %v120 = vlaneseq
    %v121 = vshrl.u32 %v120, 7
    %v122 = vsub.s32 0, %v121
    %v123 = vrot.slane %v90, %v122
    %v124 = vmul.f32 %v118, %v123
    %v125 = vmul.f32 %v119, %v123
    %v126 = vlaneseq
    %v127 = vshrl.u32 %v126, 7
    %v128 = vsub.s32 0, %v127
    %v129 = vrot.slane %v91, %v128
    %v130 = vadd.f32 %v124, %v129
    %v131 = vadd.f32 %v125, %v129
    %v132 = vld [vmem:[%s8 + $0x4] sm:$0x1]
    %v133 = vld [vmem:[%s2] sm:$0xff]
    %v134 = vld [vmem:[%s2 + $0x8] sm:$0xff]
    %v135 = vld [vmem:[%s2 + $0x10] sm:$0xff]
    %v136 = vld [vmem:[%s2 + $0x18] sm:$0xff]
    %v137 = vld [vmem:[%s2 + $0x20] sm:$0xff]
    %v138 = vld [vmem:[%s2 + $0x28] sm:$0xff]
    %v139 = vld [vmem:[%s2 + $0x30] sm:$0xff]
    %v140 = vld [vmem:[%s2 + $0x38] sm:$0xff]
    %v141 = vld [vmem:[%s3] sm:$0x1]
    %v143 = vlaneseq
    %v144 = vshrl.u32 %v143, 7
    %v145 = vsub.s32 0, %v144
    %v146 = vrot.slane %v141, %v145
    %v149 = vsel %vm92, %v130, 0
    %v152 = vsel %vm92, %v131, 0
    %154 = vmatprep.subr.mxu0 0.0
    %155 = vmatpush1.msra.mxu0 %v133
    %156 = vmatprep.subr.mxu0 0.0
    %157 = vmatpush1.msra.mxu0 %v134
    %158 = vmatprep.subr.mxu0 0.0
    %159 = vmatpush1.msra.mxu0 %v135
    %160 = vmatprep.subr.mxu0 0.0
    %161 = vmatpush1.msra.mxu0 %v136
    %162 = vmatprep.subr.mxu0 0.0
    %163 = vmatpush1.msra.mxu0 %v137
    %164 = vmatprep.subr.mxu0 0.0
    %165 = vmatpush1.msra.mxu0 %v138
    %166 = vmatprep.subr.mxu0 0.0
    %167 = vmatpush1.msra.mxu0 %v139
    %168 = vmatprep.subr.mxu0 0.0
    %169 = vmatpush1.msra.mxu0 %v140
    %170 = vmatprep.subr.mxu0 0.0
    %171 = vmatpush1.msra.mxu0 0.0
    %172 = vmatprep.subr.mxu0 0.0
    %173 = vmatpush1.msra.mxu0 0.0
    %174 = vmatprep.subr.mxu0 0.0
    %175 = vmatpush1.msra.mxu0 0.0
    %176 = vmatprep.subr.mxu0 0.0
    %177 = vmatpush1.msra.mxu0 0.0
    %178 = vmatprep.subr.mxu0 0.0
    %179 = vmatpush1.msra.mxu0 0.0
    %180 = vmatprep.subr.mxu0 0.0
    %181 = vmatpush1.msra.mxu0 0.0
    %182 = vmatprep.subr.mxu0 0.0
    %183 = vmatpush1.msra.mxu0 0.0
    %184 = vmatprep.subr.mxu0 0.0
    %185 = vmatpush1.msra.mxu0 0.0
    %186 = vmatprep.subr.mxu0 0.0
    %187 = vmatpush1.msra.mxu0 0.0
    %188 = vmatprep.subr.mxu0 0.0
    %189 = vmatpush1.msra.mxu0 0.0
    %190 = vmatprep.subr.mxu0 0.0
    %191 = vmatpush1.msra.mxu0 0.0
    %192 = vmatprep.subr.mxu0 0.0
    %193 = vmatpush1.msra.mxu0 0.0
    %194 = vmatprep.subr.mxu0 0.0
    %195 = vmatpush1.msra.mxu0 0.0
    %196 = vmatprep.subr.mxu0 0.0
    %197 = vmatpush1.msra.mxu0 0.0
    %198 = vmatprep.subr.mxu0 0.0
    %199 = vmatpush1.msra.mxu0 0.0
    %200 = vmatprep.subr.mxu0 0.0
    %201 = vmatpush1.msra.mxu0 0.0
    %202 = vmatprep.subr.mxu0 0.0
    %203 = vmatpush1.msra.mxu0 0.0
    %204 = vmatprep.subr.mxu0 0.0
    %205 = vmatpush1.msra.mxu0 0.0
    %206 = vmatprep.subr.mxu0 0.0
    %207 = vmatpush1.msra.mxu0 0.0
    %208 = vmatprep.subr.mxu0 0.0
    %209 = vmatpush1.msra.mxu0 0.0
    %210 = vmatprep.subr.mxu0 0.0
    %211 = vmatpush1.msra.mxu0 0.0
    %212 = vmatprep.subr.mxu0 0.0
    %213 = vmatpush1.msra.mxu0 0.0
    %214 = vmatprep.subr.mxu0 0.0
    %215 = vmatpush1.msra.mxu0 0.0
    %216 = vmatprep.subr.mxu0 0.0
    %217 = vmatpush1.msra.mxu0 0.0
    %218 = vmatprep.mubr.f32.mxu0 0.0
    %219 = vmatmul.mubr.f32.gmra.mrb[0].mxu0 %v149
    %v220 = vpop.f32.mrb[0].mxu0
    %v221 = vadd.f32 %v146, %v220
    %v222 = vpop.f32.mrb[0].mxu0
    %223 = vmatprep.mubr.f32.mxu0 0.0
    %224 = vmatmul.mubr.f32.gmra.mrb[0].mxu0 %v152
    %v225 = vpop.f32.mrb[0].mxu0
    %v226 = vadd.f32 %v146, %v225
    %v227 = vpop.f32.mrb[0].mxu0
    %228 = vdwg.mxu0
    %s229 = scalar_lea.vmem %s2, 256
    %v230 = vld [vmem:[%s229] sm:$0xff]
    %v231 = vld [vmem:[%s229 + $0x8] sm:$0xff]
    %v232 = vld [vmem:[%s229 + $0x10] sm:$0xff]
    %v233 = vld [vmem:[%s229 + $0x18] sm:$0xff]
    %v234 = vld [vmem:[%s229 + $0x20] sm:$0xff]
    %v235 = vld [vmem:[%s229 + $0x28] sm:$0xff]
    %v236 = vld [vmem:[%s229 + $0x30] sm:$0xff]
    %v237 = vld [vmem:[%s229 + $0x38] sm:$0xff]
    %s238 = scalar_lea.vmem %s3, 4
    %v239 = vld [vmem:[%s238] sm:$0x1]
    %v241 = vlaneseq
    %v242 = vshrl.u32 %v241, 7
    %v243 = vsub.s32 0, %v242
    %v244 = vrot.slane %v239, %v243
    %246 = vmatprep.subr.mxu0 0.0
    %247 = vmatpush1.msra.mxu0 %v230
    %248 = vmatprep.subr.mxu0 0.0
    %249 = vmatpush1.msra.mxu0 %v231
    %250 = vmatprep.subr.mxu0 0.0
    %251 = vmatpush1.msra.mxu0 %v232
    %252 = vmatprep.subr.mxu0 0.0
    %253 = vmatpush1.msra.mxu0 %v233
    %254 = vmatprep.subr.mxu0 0.0
    %255 = vmatpush1.msra.mxu0 %v234
    %256 = vmatprep.subr.mxu0 0.0
    %257 = vmatpush1.msra.mxu0 %v235
    %258 = vmatprep.subr.mxu0 0.0
    %259 = vmatpush1.msra.mxu0 %v236
    %260 = vmatprep.subr.mxu0 0.0
    %261 = vmatpush1.msra.mxu0 %v237
    %262 = vmatprep.subr.mxu0 0.0
    %263 = vmatpush1.msra.mxu0 0.0
    %264 = vmatprep.subr.mxu0 0.0
    %265 = vmatpush1.msra.mxu0 0.0
    %266 = vmatprep.subr.mxu0 0.0
    %267 = vmatpush1.msra.mxu0 0.0
    %268 = vmatprep.subr.mxu0 0.0
    %269 = vmatpush1.msra.mxu0 0.0
    %270 = vmatprep.subr.mxu0 0.0
    %271 = vmatpush1.msra.mxu0 0.0
    %272 = vmatprep.subr.mxu0 0.0
    %273 = vmatpush1.msra.mxu0 0.0
    %274 = vmatprep.subr.mxu0 0.0
    %275 = vmatpush1.msra.mxu0 0.0
    %276 = vmatprep.subr.mxu0 0.0
    %277 = vmatpush1.msra.mxu0 0.0
    %278 = vmatprep.subr.mxu0 0.0
    %279 = vmatpush1.msra.mxu0 0.0
    %280 = vmatprep.subr.mxu0 0.0
    %281 = vmatpush1.msra.mxu0 0.0
    %282 = vmatprep.subr.mxu0 0.0
    %283 = vmatpush1.msra.mxu0 0.0
    %284 = vmatprep.subr.mxu0 0.0
    %285 = vmatpush1.msra.mxu0 0.0
    %286 = vmatprep.subr.mxu0 0.0
    %287 = vmatpush1.msra.mxu0 0.0
    %288 = vmatprep.subr.mxu0 0.0
    %289 = vmatpush1.msra.mxu0 0.0
    %290 = vmatprep.subr.mxu0 0.0
    %291 = vmatpush1.msra.mxu0 0.0
    %292 = vmatprep.subr.mxu0 0.0
    %293 = vmatpush1.msra.mxu0 0.0
    %294 = vmatprep.subr.mxu0 0.0
    %295 = vmatpush1.msra.mxu0 0.0
    %296 = vmatprep.subr.mxu0 0.0
    %297 = vmatpush1.msra.mxu0 0.0
    %298 = vmatprep.subr.mxu0 0.0
    %299 = vmatpush1.msra.mxu0 0.0
    %300 = vmatprep.subr.mxu0 0.0
    %301 = vmatpush1.msra.mxu0 0.0
    %302 = vmatprep.subr.mxu0 0.0
    %303 = vmatpush1.msra.mxu0 0.0
    %304 = vmatprep.subr.mxu0 0.0
    %305 = vmatpush1.msra.mxu0 0.0
    %306 = vmatprep.subr.mxu0 0.0
    %307 = vmatpush1.msra.mxu0 0.0
    %308 = vmatprep.subr.mxu0 0.0
    %309 = vmatpush1.msra.mxu0 0.0
    %310 = vmatprep.mubr.f32.mxu0 0.0
    %311 = vmatmul.mubr.f32.gmra.mrb[0].mxu0 %v149
    %v312 = vpop.f32.mrb[0].mxu0
    %v313 = vadd.f32 %v244, %v312
    %v314 = vpop.f32.mrb[0].mxu0
    %315 = vmatprep.mubr.f32.mxu0 0.0
    %316 = vmatmul.mubr.f32.gmra.mrb[0].mxu0 %v152
    %v317 = vpop.f32.mrb[0].mxu0
    %v318 = vadd.f32 %v244, %v317
    %v319 = vpop.f32.mrb[0].mxu0
    %320 = vdwg.mxu0
    %s321 = scalar_lea.vmem %s2, 512
    %v322 = vld [vmem:[%s321] sm:$0xff]
    %v323 = vld [vmem:[%s321 + $0x8] sm:$0xff]
    %v324 = vld [vmem:[%s321 + $0x10] sm:$0xff]
    %v325 = vld [vmem:[%s321 + $0x18] sm:$0xff]
    %v326 = vld [vmem:[%s321 + $0x20] sm:$0xff]
    %v327 = vld [vmem:[%s321 + $0x28] sm:$0xff]
    %v328 = vld [vmem:[%s321 + $0x30] sm:$0xff]
    %v329 = vld [vmem:[%s321 + $0x38] sm:$0xff]
    %s330 = scalar_lea.vmem %s3, 8
    %v331 = vld [vmem:[%s330] sm:$0x1]
    %v333 = vlaneseq
    %v334 = vshrl.u32 %v333, 7
    %v335 = vsub.s32 0, %v334
    %v336 = vrot.slane %v331, %v335
    %338 = vmatprep.subr.mxu0 0.0
    %339 = vmatpush1.msra.mxu0 %v322
    %340 = vmatprep.subr.mxu0 0.0
    %341 = vmatpush1.msra.mxu0 %v323
    %342 = vmatprep.subr.mxu0 0.0
    %343 = vmatpush1.msra.mxu0 %v324
    %344 = vmatprep.subr.mxu0 0.0
    %345 = vmatpush1.msra.mxu0 %v325
    %346 = vmatprep.subr.mxu0 0.0
    %347 = vmatpush1.msra.mxu0 %v326
    %348 = vmatprep.subr.mxu0 0.0
    %349 = vmatpush1.msra.mxu0 %v327
    %350 = vmatprep.subr.mxu0 0.0
    %351 = vmatpush1.msra.mxu0 %v328
    %352 = vmatprep.subr.mxu0 0.0
    %353 = vmatpush1.msra.mxu0 %v329
    %354 = vmatprep.subr.mxu0 0.0
    %355 = vmatpush1.msra.mxu0 0.0
    %356 = vmatprep.subr.mxu0 0.0
    %357 = vmatpush1.msra.mxu0 0.0
    %358 = vmatprep.subr.mxu0 0.0
    %359 = vmatpush1.msra.mxu0 0.0
    %360 = vmatprep.subr.mxu0 0.0
    %361 = vmatpush1.msra.mxu0 0.0
    %362 = vmatprep.subr.mxu0 0.0
    %363 = vmatpush1.msra.mxu0 0.0
    %364 = vmatprep.subr.mxu0 0.0
    %365 = vmatpush1.msra.mxu0 0.0
    %366 = vmatprep.subr.mxu0 0.0
    %367 = vmatpush1.msra.mxu0 0.0
    %368 = vmatprep.subr.mxu0 0.0
    %369 = vmatpush1.msra.mxu0 0.0
    %370 = vmatprep.subr.mxu0 0.0
    %371 = vmatpush1.msra.mxu0 0.0
    %372 = vmatprep.subr.mxu0 0.0
    %373 = vmatpush1.msra.mxu0 0.0
    %374 = vmatprep.subr.mxu0 0.0
    %375 = vmatpush1.msra.mxu0 0.0
    %376 = vmatprep.subr.mxu0 0.0
    %377 = vmatpush1.msra.mxu0 0.0
    %378 = vmatprep.subr.mxu0 0.0
    %379 = vmatpush1.msra.mxu0 0.0
    %380 = vmatprep.subr.mxu0 0.0
    %381 = vmatpush1.msra.mxu0 0.0
    %382 = vmatprep.subr.mxu0 0.0
    %383 = vmatpush1.msra.mxu0 0.0
    %384 = vmatprep.subr.mxu0 0.0
    %385 = vmatpush1.msra.mxu0 0.0
    %386 = vmatprep.subr.mxu0 0.0
    %387 = vmatpush1.msra.mxu0 0.0
    %388 = vmatprep.subr.mxu0 0.0
    %389 = vmatpush1.msra.mxu0 0.0
    %390 = vmatprep.subr.mxu0 0.0
    %391 = vmatpush1.msra.mxu0 0.0
    %392 = vmatprep.subr.mxu0 0.0
    %393 = vmatpush1.msra.mxu0 0.0
    %394 = vmatprep.subr.mxu0 0.0
    %395 = vmatpush1.msra.mxu0 0.0
    %396 = vmatprep.subr.mxu0 0.0
    %397 = vmatpush1.msra.mxu0 0.0
    %398 = vmatprep.subr.mxu0 0.0
    %399 = vmatpush1.msra.mxu0 0.0
    %400 = vmatprep.subr.mxu0 0.0
    %401 = vmatpush1.msra.mxu0 0.0
    %402 = vmatprep.mubr.f32.mxu0 0.0
    %403 = vmatmul.mubr.f32.gmra.mrb[0].mxu0 %v149
    %v404 = vpop.f32.mrb[0].mxu0
    %v405 = vadd.f32 %v336, %v404
    %v406 = vpop.f32.mrb[0].mxu0
    %407 = vmatprep.mubr.f32.mxu0 0.0
    %408 = vmatmul.mubr.f32.gmra.mrb[0].mxu0 %v152
    %v409 = vpop.f32.mrb[0].mxu0
    %v410 = vadd.f32 %v336, %v409
    %v411 = vpop.f32.mrb[0].mxu0
    %412 = vdwg.mxu0
    %vm413 = vcmask 261120
    %v415 = vsel %vm413, %v221, 0
    %v418 = vsel %vm413, %v313, 0
    %420 = vmatprep.subr.mxu0 0.0
    %421 = vmatpush1.xpose.msra.mxu0 %v418
    %422 = vmatprep.subr.mxu0 0.0
    %423 = vmatpush1.xpose.msra.mxu0 0.0
    %424 = vmatprep.subr.mxu0 0.0
    %425 = vmatpush1.xpose.msra.mxu0 0.0
    %426 = vmatprep.subr.mxu0 0.0
    %427 = vmatpush1.xpose.msra.mxu0 0.0
    %428 = vmatprep.subr.mxu0 0.0
    %429 = vmatpush1.xpose.msra.mxu0 0.0
    %430 = vmatprep.subr.mxu0 0.0
    %431 = vmatpush1.xpose.msra.mxu0 0.0
    %432 = vmatprep.subr.mxu0 0.0
    %433 = vmatpush1.xpose.msra.mxu0 0.0
    %434 = vmatprep.subr.mxu0 0.0
    %435 = vmatpush1.xpose.msra.mxu0 0.0
    %436 = vmatprep.subr.mxu0 0.0
    %437 = vmatpush1.xpose.msra.mxu0 0.0
    %438 = vmatprep.subr.mxu0 0.0
    %439 = vmatpush1.xpose.msra.mxu0 0.0
    %440 = vmatprep.subr.mxu0 0.0
    %441 = vmatpush1.xpose.msra.mxu0 0.0
    %442 = vmatprep.subr.mxu0 0.0
    %443 = vmatpush1.xpose.msra.mxu0 0.0
    %444 = vmatprep.subr.mxu0 0.0
    %445 = vmatpush1.xpose.msra.mxu0 0.0
    %446 = vmatprep.subr.mxu0 0.0
    %447 = vmatpush1.xpose.msra.mxu0 0.0
    %448 = vmatprep.subr.mxu0 0.0
    %449 = vmatpush1.xpose.msra.mxu0 0.0
    %450 = vmatprep.subr.mxu0 0.0
    %451 = vmatpush1.xpose.msra.mxu0 0.0
    %452 = vmatprep.subr.mxu0 0.0
    %453 = vmatpush1.xpose.msra.mxu0 0.0
    %454 = vmatprep.subr.mxu0 0.0
    %455 = vmatpush1.xpose.msra.mxu0 0.0
    %456 = vmatprep.subr.mxu0 0.0
    %457 = vmatpush1.xpose.msra.mxu0 0.0
    %458 = vmatprep.subr.mxu0 0.0
    %459 = vmatpush1.xpose.msra.mxu0 0.0
    %460 = vmatprep.subr.mxu0 0.0
    %461 = vmatpush1.xpose.msra.mxu0 0.0
    %462 = vmatprep.subr.mxu0 0.0
    %463 = vmatpush1.xpose.msra.mxu0 0.0
    %464 = vmatprep.subr.mxu0 0.0
    %465 = vmatpush1.xpose.msra.mxu0 0.0
    %466 = vmatprep.subr.mxu0 0.0
    %467 = vmatpush1.xpose.msra.mxu0 0.0
    %468 = vmatprep.subr.mxu0 0.0
    %469 = vmatpush1.xpose.msra.mxu0 0.0
    %470 = vmatprep.subr.mxu0 0.0
    %471 = vmatpush1.xpose.msra.mxu0 0.0
    %472 = vmatprep.subr.mxu0 0.0
    %473 = vmatpush1.xpose.msra.mxu0 0.0
    %474 = vmatprep.subr.mxu0 0.0
    %475 = vmatpush1.xpose.msra.mxu0 0.0
    %476 = vmatprep.subr.mxu0 0.0
    %477 = vmatpush1.xpose.msra.mxu0 0.0
    %478 = vmatprep.subr.mxu0 0.0
    %479 = vmatpush1.xpose.msra.mxu0 0.0
    %480 = vmatprep.subr.mxu0 0.0
    %481 = vmatpush1.xpose.msra.mxu0 0.0
    %482 = vmatprep.subr.mxu0 0.0
    %483 = vmatpush1.xpose.msra.mxu0 0.0
    %484 = vmatprep.mubr.f32.mxu0 0.0
    %485 = vmatmul.mubr.f32.gmra.mrb[0].mxu0 %v415
    %v486 = vpop.f32.mrb[0].mxu0
    %v487 = vadd.f32 0.0, %v486
    %v488 = vpop.f32.mrb[0].mxu0
    %489 = vdwg.mxu0
    %v491 = vsel %vm413, %v226, 0
    %v494 = vsel %vm413, %v318, 0
    %496 = vmatprep.subr.mxu0 0.0
    %497 = vmatpush1.xpose.msra.mxu0 %v494
    %498 = vmatprep.subr.mxu0 0.0
    %499 = vmatpush1.xpose.msra.mxu0 0.0
    %500 = vmatprep.subr.mxu0 0.0
    %501 = vmatpush1.xpose.msra.mxu0 0.0
    %502 = vmatprep.subr.mxu0 0.0
    %503 = vmatpush1.xpose.msra.mxu0 0.0
    %504 = vmatprep.subr.mxu0 0.0
    %505 = vmatpush1.xpose.msra.mxu0 0.0
    %506 = vmatprep.subr.mxu0 0.0
    %507 = vmatpush1.xpose.msra.mxu0 0.0
    %508 = vmatprep.subr.mxu0 0.0
    %509 = vmatpush1.xpose.msra.mxu0 0.0
    %510 = vmatprep.subr.mxu0 0.0
    %511 = vmatpush1.xpose.msra.mxu0 0.0
    %512 = vmatprep.subr.mxu0 0.0
    %513 = vmatpush1.xpose.msra.mxu0 0.0
    %514 = vmatprep.subr.mxu0 0.0
    %515 = vmatpush1.xpose.msra.mxu0 0.0
    %516 = vmatprep.subr.mxu0 0.0
    %517 = vmatpush1.xpose.msra.mxu0 0.0
    %518 = vmatprep.subr.mxu0 0.0
    %519 = vmatpush1.xpose.msra.mxu0 0.0
    %520 = vmatprep.subr.mxu0 0.0
    %521 = vmatpush1.xpose.msra.mxu0 0.0
    %522 = vmatprep.subr.mxu0 0.0
    %523 = vmatpush1.xpose.msra.mxu0 0.0
    %524 = vmatprep.subr.mxu0 0.0
    %525 = vmatpush1.xpose.msra.mxu0 0.0
    %526 = vmatprep.subr.mxu0 0.0
    %527 = vmatpush1.xpose.msra.mxu0 0.0
    %528 = vmatprep.subr.mxu0 0.0
    %529 = vmatpush1.xpose.msra.mxu0 0.0
    %530 = vmatprep.subr.mxu0 0.0
    %531 = vmatpush1.xpose.msra.mxu0 0.0
    %532 = vmatprep.subr.mxu0 0.0
    %533 = vmatpush1.xpose.msra.mxu0 0.0
    %534 = vmatprep.subr.mxu0 0.0
    %535 = vmatpush1.xpose.msra.mxu0 0.0
    %536 = vmatprep.subr.mxu0 0.0
    %537 = vmatpush1.xpose.msra.mxu0 0.0
    %538 = vmatprep.subr.mxu0 0.0
    %539 = vmatpush1.xpose.msra.mxu0 0.0
    %540 = vmatprep.subr.mxu0 0.0
    %541 = vmatpush1.xpose.msra.mxu0 0.0
    %542 = vmatprep.subr.mxu0 0.0
    %543 = vmatpush1.xpose.msra.mxu0 0.0
    %544 = vmatprep.subr.mxu0 0.0
    %545 = vmatpush1.xpose.msra.mxu0 0.0
    %546 = vmatprep.subr.mxu0 0.0
    %547 = vmatpush1.xpose.msra.mxu0 0.0
    %548 = vmatprep.subr.mxu0 0.0
    %549 = vmatpush1.xpose.msra.mxu0 0.0
    %550 = vmatprep.subr.mxu0 0.0
    %551 = vmatpush1.xpose.msra.mxu0 0.0
    %552 = vmatprep.subr.mxu0 0.0
    %553 = vmatpush1.xpose.msra.mxu0 0.0
    %554 = vmatprep.subr.mxu0 0.0
    %555 = vmatpush1.xpose.msra.mxu0 0.0
    %556 = vmatprep.subr.mxu0 0.0
    %557 = vmatpush1.xpose.msra.mxu0 0.0
    %558 = vmatprep.subr.mxu0 0.0
    %559 = vmatpush1.xpose.msra.mxu0 0.0
    %560 = vmatprep.mubr.f32.mxu0 0.0
    %561 = vmatmul.mubr.f32.gmra.mrb[0].mxu0 %v491
    %v562 = vpop.f32.mrb[0].mxu0
    %v563 = vadd.f32 0.0, %v562
    %v564 = vpop.f32.mrb[0].mxu0
    %565 = vdwg.mxu0
    %vm566 = vcmask 64512
    %v567 = vsel %vm566, %v487, -inf
    %568 = vmax.xlane.f32.xlu0 %v567
    %v569 = vpop.xlane.xlu0 %568
    %v570 = vsel %vm566, %v563, -inf
    %571 = vmax.xlane.f32.xlu0 %v570
    %v572 = vpop.xlane.xlu0 %571
    %v573 = vsub.f32 %v487, %v569
    %v574 = vsub.f32 %v563, %v572
    %v575 = vmul.f32 %v573, 1.442695
    %v576 = vpow.pop %v575
    %v577 = vmul.f32 %v574, 1.442695
    %v578 = vpow.pop %v577
    %v579 = vsel %vm566, %v576, 0.0
    %580 = vadd.xlane.f32.xlu0 %v579
    %v581 = vpop.xlane.xlu0 %580
    %v582 = vsel %vm566, %v578, 0.0
    %583 = vadd.xlane.f32.xlu0 %v582
    %v584 = vpop.xlane.xlu0 %583
    %v585 = vrcp.pop %v581
    %v586 = vrcp.pop %v584
    %v587 = vmul.f32 %v576, %v585
    %v588 = vmul.f32 %v578, %v586
    %v590 = vsel %vm566, %v587, 0
    %592 = vmatprep.subr.mxu0 0.0
    %593 = vmatpush1.msra.mxu0 %v405
    %594 = vmatprep.subr.mxu0 0.0
    %595 = vmatpush1.msra.mxu0 0.0
    %596 = vmatprep.subr.mxu0 0.0
    %597 = vmatpush1.msra.mxu0 0.0
    %598 = vmatprep.subr.mxu0 0.0
    %599 = vmatpush1.msra.mxu0 0.0
    %600 = vmatprep.subr.mxu0 0.0
    %601 = vmatpush1.msra.mxu0 0.0
    %602 = vmatprep.subr.mxu0 0.0
    %603 = vmatpush1.msra.mxu0 0.0
    %604 = vmatprep.subr.mxu0 0.0
    %605 = vmatpush1.msra.mxu0 0.0
    %606 = vmatprep.subr.mxu0 0.0
    %607 = vmatpush1.msra.mxu0 0.0
    %608 = vmatprep.subr.mxu0 0.0
    %609 = vmatpush1.msra.mxu0 0.0
    %610 = vmatprep.subr.mxu0 0.0
    %611 = vmatpush1.msra.mxu0 0.0
    %612 = vmatprep.subr.mxu0 0.0
    %613 = vmatpush1.msra.mxu0 0.0
    %614 = vmatprep.subr.mxu0 0.0
    %615 = vmatpush1.msra.mxu0 0.0
    %616 = vmatprep.subr.mxu0 0.0
    %617 = vmatpush1.msra.mxu0 0.0
    %618 = vmatprep.subr.mxu0 0.0
    %619 = vmatpush1.msra.mxu0 0.0
    %620 = vmatprep.subr.mxu0 0.0
    %621 = vmatpush1.msra.mxu0 0.0
    %622 = vmatprep.subr.mxu0 0.0
    %623 = vmatpush1.msra.mxu0 0.0
    %624 = vmatprep.subr.mxu0 0.0
    %625 = vmatpush1.msra.mxu0 0.0
    %626 = vmatprep.subr.mxu0 0.0
    %627 = vmatpush1.msra.mxu0 0.0
    %628 = vmatprep.subr.mxu0 0.0
    %629 = vmatpush1.msra.mxu0 0.0
    %630 = vmatprep.subr.mxu0 0.0
    %631 = vmatpush1.msra.mxu0 0.0
    %632 = vmatprep.subr.mxu0 0.0
    %633 = vmatpush1.msra.mxu0 0.0
    %634 = vmatprep.subr.mxu0 0.0
    %635 = vmatpush1.msra.mxu0 0.0
    %636 = vmatprep.subr.mxu0 0.0
    %637 = vmatpush1.msra.mxu0 0.0
    %638 = vmatprep.subr.mxu0 0.0
    %639 = vmatpush1.msra.mxu0 0.0
    %640 = vmatprep.subr.mxu0 0.0
    %641 = vmatpush1.msra.mxu0 0.0
    %642 = vmatprep.subr.mxu0 0.0
    %643 = vmatpush1.msra.mxu0 0.0
    %644 = vmatprep.subr.mxu0 0.0
    %645 = vmatpush1.msra.mxu0 0.0
    %646 = vmatprep.subr.mxu0 0.0
    %647 = vmatpush1.msra.mxu0 0.0
    %648 = vmatprep.subr.mxu0 0.0
    %649 = vmatpush1.msra.mxu0 0.0
    %650 = vmatprep.subr.mxu0 0.0
    %651 = vmatpush1.msra.mxu0 0.0
    %652 = vmatprep.subr.mxu0 0.0
    %653 = vmatpush1.msra.mxu0 0.0
    %654 = vmatprep.subr.mxu0 0.0
    %655 = vmatpush1.msra.mxu0 0.0
    %656 = vmatprep.mubr.f32.mxu0 0.0
    %657 = vmatmul.mubr.f32.gmra.mrb[0].mxu0 %v590
    %v658 = vpop.f32.mrb[0].mxu0
    %v659 = vadd.f32 0.0, %v658
    %v660 = vpop.f32.mrb[0].mxu0
    %661 = vdwg.mxu0
    %v663 = vsel %vm566, %v588, 0
    %665 = vmatprep.subr.mxu0 0.0
    %666 = vmatpush1.msra.mxu0 %v410
    %667 = vmatprep.subr.mxu0 0.0
    %668 = vmatpush1.msra.mxu0 0.0
    %669 = vmatprep.subr.mxu0 0.0
    %670 = vmatpush1.msra.mxu0 0.0
    %671 = vmatprep.subr.mxu0 0.0
    %672 = vmatpush1.msra.mxu0 0.0
    %673 = vmatprep.subr.mxu0 0.0
    %674 = vmatpush1.msra.mxu0 0.0
    %675 = vmatprep.subr.mxu0 0.0
    %676 = vmatpush1.msra.mxu0 0.0
    %677 = vmatprep.subr.mxu0 0.0
    %678 = vmatpush1.msra.mxu0 0.0
    %679 = vmatprep.subr.mxu0 0.0
    %680 = vmatpush1.msra.mxu0 0.0
    %681 = vmatprep.subr.mxu0 0.0
    %682 = vmatpush1.msra.mxu0 0.0
    %683 = vmatprep.subr.mxu0 0.0
    %684 = vmatpush1.msra.mxu0 0.0
    %685 = vmatprep.subr.mxu0 0.0
    %686 = vmatpush1.msra.mxu0 0.0
    %687 = vmatprep.subr.mxu0 0.0
    %688 = vmatpush1.msra.mxu0 0.0
    %689 = vmatprep.subr.mxu0 0.0
    %690 = vmatpush1.msra.mxu0 0.0
    %691 = vmatprep.subr.mxu0 0.0
    %692 = vmatpush1.msra.mxu0 0.0
    %693 = vmatprep.subr.mxu0 0.0
    %694 = vmatpush1.msra.mxu0 0.0
    %695 = vmatprep.subr.mxu0 0.0
    %696 = vmatpush1.msra.mxu0 0.0
    %697 = vmatprep.subr.mxu0 0.0
    %698 = vmatpush1.msra.mxu0 0.0
    %699 = vmatprep.subr.mxu0 0.0
    %700 = vmatpush1.msra.mxu0 0.0
    %701 = vmatprep.subr.mxu0 0.0
    %702 = vmatpush1.msra.mxu0 0.0
    %703 = vmatprep.subr.mxu0 0.0
    %704 = vmatpush1.msra.mxu0 0.0
    %705 = vmatprep.subr.mxu0 0.0
    %706 = vmatpush1.msra.mxu0 0.0
    %707 = vmatprep.subr.mxu0 0.0
    %708 = vmatpush1.msra.mxu0 0.0
    %709 = vmatprep.subr.mxu0 0.0
    %710 = vmatpush1.msra.mxu0 0.0
    %711 = vmatprep.subr.mxu0 0.0
    %712 = vmatpush1.msra.mxu0 0.0
    %713 = vmatprep.subr.mxu0 0.0
    %714 = vmatpush1.msra.mxu0 0.0
    %715 = vmatprep.subr.mxu0 0.0
    %716 = vmatpush1.msra.mxu0 0.0
    %717 = vmatprep.subr.mxu0 0.0
    %718 = vmatpush1.msra.mxu0 0.0
    %719 = vmatprep.subr.mxu0 0.0
    %720 = vmatpush1.msra.mxu0 0.0
    %721 = vmatprep.subr.mxu0 0.0
    %722 = vmatpush1.msra.mxu0 0.0
    %723 = vmatprep.subr.mxu0 0.0
    %724 = vmatpush1.msra.mxu0 0.0
    %725 = vmatprep.subr.mxu0 0.0
    %726 = vmatpush1.msra.mxu0 0.0
    %727 = vmatprep.subr.mxu0 0.0
    %728 = vmatpush1.msra.mxu0 0.0
    %729 = vmatprep.mubr.f32.mxu0 0.0
    %730 = vmatmul.mubr.f32.gmra.mrb[0].mxu0 %v663
    %v731 = vpop.f32.mrb[0].mxu0
    %v732 = vadd.f32 0.0, %v731
    %v733 = vpop.f32.mrb[0].mxu0
    %734 = vdwg.mxu0
    %v735 = vld [vmem:[%s4] sm:$0xff]
    %v736 = vld [vmem:[%s4 + $0x8] sm:$0xff]
    %v737 = vld [vmem:[%s4 + $0x10] sm:$0xff]
    %v738 = vld [vmem:[%s4 + $0x18] sm:$0xff]
    %v740 = vsel %vm413, %v659, 0
    %v743 = vsel %vm413, %v732, 0
    %745 = vmatprep.subr.mxu0 0.0
    %746 = vmatpush1.msra.mxu0 %v735
    %747 = vmatprep.subr.mxu0 0.0
    %748 = vmatpush1.msra.mxu0 %v736
    %749 = vmatprep.subr.mxu0 0.0
    %750 = vmatpush1.msra.mxu0 %v737
    %751 = vmatprep.subr.mxu0 0.0
    %752 = vmatpush1.msra.mxu0 %v738
    %753 = vmatprep.subr.mxu0 0.0
    %754 = vmatpush1.msra.mxu0 0.0
    %755 = vmatprep.subr.mxu0 0.0
    %756 = vmatpush1.msra.mxu0 0.0
    %757 = vmatprep.subr.mxu0 0.0
    %758 = vmatpush1.msra.mxu0 0.0
    %759 = vmatprep.subr.mxu0 0.0
    %760 = vmatpush1.msra.mxu0 0.0
    %761 = vmatprep.subr.mxu0 0.0
    %762 = vmatpush1.msra.mxu0 0.0
    %763 = vmatprep.subr.mxu0 0.0
    %764 = vmatpush1.msra.mxu0 0.0
    %765 = vmatprep.subr.mxu0 0.0
    %766 = vmatpush1.msra.mxu0 0.0
    %767 = vmatprep.subr.mxu0 0.0
    %768 = vmatpush1.msra.mxu0 0.0
    %769 = vmatprep.subr.mxu0 0.0
    %770 = vmatpush1.msra.mxu0 0.0
    %771 = vmatprep.subr.mxu0 0.0
    %772 = vmatpush1.msra.mxu0 0.0
    %773 = vmatprep.subr.mxu0 0.0
    %774 = vmatpush1.msra.mxu0 0.0
    %775 = vmatprep.subr.mxu0 0.0
    %776 = vmatpush1.msra.mxu0 0.0
    %777 = vmatprep.subr.mxu0 0.0
    %778 = vmatpush1.msra.mxu0 0.0
    %779 = vmatprep.subr.mxu0 0.0
    %780 = vmatpush1.msra.mxu0 0.0
    %781 = vmatprep.subr.mxu0 0.0
    %782 = vmatpush1.msra.mxu0 0.0
    %783 = vmatprep.subr.mxu0 0.0
    %784 = vmatpush1.msra.mxu0 0.0
    %785 = vmatprep.subr.mxu0 0.0
    %786 = vmatpush1.msra.mxu0 0.0
    %787 = vmatprep.subr.mxu0 0.0
    %788 = vmatpush1.msra.mxu0 0.0
    %789 = vmatprep.subr.mxu0 0.0
    %790 = vmatpush1.msra.mxu0 0.0
    %791 = vmatprep.subr.mxu0 0.0
    %792 = vmatpush1.msra.mxu0 0.0
    %793 = vmatprep.subr.mxu0 0.0
    %794 = vmatpush1.msra.mxu0 0.0
    %795 = vmatprep.subr.mxu0 0.0
    %796 = vmatpush1.msra.mxu0 0.0
    %797 = vmatprep.subr.mxu0 0.0
    %798 = vmatpush1.msra.mxu0 0.0
    %799 = vmatprep.subr.mxu0 0.0
    %800 = vmatpush1.msra.mxu0 0.0
    %801 = vmatprep.subr.mxu0 0.0
    %802 = vmatpush1.msra.mxu0 0.0
    %803 = vmatprep.subr.mxu0 0.0
    %804 = vmatpush1.msra.mxu0 0.0
    %805 = vmatprep.subr.mxu0 0.0
    %806 = vmatpush1.msra.mxu0 0.0
    %807 = vmatprep.subr.mxu0 0.0
    %808 = vmatpush1.msra.mxu0 0.0
    %809 = vmatprep.mubr.f32.mxu0 0.0
    %810 = vmatmul.mubr.f32.gmra.mrb[0].mxu0 %v740
    %v811 = vpop.f32.mrb[0].mxu0
    %v812 = vadd.f32 0.0, %v811
    %v813 = vpop.f32.mrb[0].mxu0
    %814 = vmatprep.mubr.f32.mxu0 0.0
    %815 = vmatmul.mubr.f32.gmra.mrb[0].mxu0 %v743
    %v816 = vpop.f32.mrb[0].mxu0
    %v817 = vadd.f32 0.0, %v816
    %v818 = vpop.f32.mrb[0].mxu0
    %819 = vdwg.mxu0
    %v820 = vlaneseq
    %v821 = vshrl.u32 %v820, 7
    %v822 = vsub.s32 0, %v821
    %v823 = vrot.slane %v132, %v822
    %v824 = vadd.f32 %v823, %v812
    %v825 = vadd.f32 %v823, %v817
    %s826 = scalar_lea.vmem %s2, 64
    %v827 = vld [vmem:[%s826] sm:$0xff]
    %v828 = vld [vmem:[%s826 + $0x8] sm:$0xff]
    %v829 = vld [vmem:[%s826 + $0x10] sm:$0xff]
    %v830 = vld [vmem:[%s826 + $0x18] sm:$0xff]
    %v831 = vld [vmem:[%s826 + $0x20] sm:$0xff]
    %v832 = vld [vmem:[%s826 + $0x28] sm:$0xff]
    %v833 = vld [vmem:[%s826 + $0x30] sm:$0xff]
    %v834 = vld [vmem:[%s826 + $0x38] sm:$0xff]
    %s835 = scalar_lea.vmem %s3, 1
    %v836 = vld [vmem:[%s835] sm:$0x1]
    %v838 = vlaneseq
    %v839 = vshrl.u32 %v838, 7
    %v840 = vsub.s32 0, %v839
    %v841 = vrot.slane %v836, %v840
    %843 = vmatprep.subr.mxu0 0.0
    %844 = vmatpush1.msra.mxu0 %v827
    %845 = vmatprep.subr.mxu0 0.0
    %846 = vmatpush1.msra.mxu0 %v828
    %847 = vmatprep.subr.mxu0 0.0
    %848 = vmatpush1.msra.mxu0 %v829
    %849 = vmatprep.subr.mxu0 0.0
    %850 = vmatpush1.msra.mxu0 %v830
    %851 = vmatprep.subr.mxu0 0.0
    %852 = vmatpush1.msra.mxu0 %v831
    %853 = vmatprep.subr.mxu0 0.0
    %854 = vmatpush1.msra.mxu0 %v832
    %855 = vmatprep.subr.mxu0 0.0
    %856 = vmatpush1.msra.mxu0 %v833
    %857 = vmatprep.subr.mxu0 0.0
    %858 = vmatpush1.msra.mxu0 %v834
    %859 = vmatprep.subr.mxu0 0.0
    %860 = vmatpush1.msra.mxu0 0.0
    %861 = vmatprep.subr.mxu0 0.0
    %862 = vmatpush1.msra.mxu0 0.0
    %863 = vmatprep.subr.mxu0 0.0
    %864 = vmatpush1.msra.mxu0 0.0
    %865 = vmatprep.subr.mxu0 0.0
    %866 = vmatpush1.msra.mxu0 0.0
    %867 = vmatprep.subr.mxu0 0.0
    %868 = vmatpush1.msra.mxu0 0.0
    %869 = vmatprep.subr.mxu0 0.0
    %870 = vmatpush1.msra.mxu0 0.0
    %871 = vmatprep.subr.mxu0 0.0
    %872 = vmatpush1.msra.mxu0 0.0
    %873 = vmatprep.subr.mxu0 0.0
    %874 = vmatpush1.msra.mxu0 0.0
    %875 = vmatprep.subr.mxu0 0.0
    %876 = vmatpush1.msra.mxu0 0.0
    %877 = vmatprep.subr.mxu0 0.0
    %878 = vmatpush1.msra.mxu0 0.0
    %879 = vmatprep.subr.mxu0 0.0
    %880 = vmatpush1.msra.mxu0 0.0
    %881 = vmatprep.subr.mxu0 0.0
    %882 = vmatpush1.msra.mxu0 0.0
    %883 = vmatprep.subr.mxu0 0.0
    %884 = vmatpush1.msra.mxu0 0.0
    %885 = vmatprep.subr.mxu0 0.0
    %886 = vmatpush1.msra.mxu0 0.0
    %887 = vmatprep.subr.mxu0 0.0
    %888 = vmatpush1.msra.mxu0 0.0
    %889 = vmatprep.subr.mxu0 0.0
    %890 = vmatpush1.msra.mxu0 0.0
    %891 = vmatprep.subr.mxu0 0.0
    %892 = vmatpush1.msra.mxu0 0.0
    %893 = vmatprep.subr.mxu0 0.0
    %894 = vmatpush1.msra.mxu0 0.0
    %895 = vmatprep.subr.mxu0 0.0
    %896 = vmatpush1.msra.mxu0 0.0
    %897 = vmatprep.subr.mxu0 0.0
    %898 = vmatpush1.msra.mxu0 0.0
    %899 = vmatprep.subr.mxu0 0.0
    %900 = vmatpush1.msra.mxu0 0.0
    %901 = vmatprep.subr.mxu0 0.0
    %902 = vmatpush1.msra.mxu0 0.0
    %903 = vmatprep.subr.mxu0 0.0
    %904 = vmatpush1.msra.mxu0 0.0
    %905 = vmatprep.subr.mxu0 0.0
    %906 = vmatpush1.msra.mxu0 0.0
    %907 = vmatprep.mubr.f32.mxu0 0.0
    %908 = vmatmul.mubr.f32.gmra.mrb[0].mxu0 %v149
    %v909 = vpop.f32.mrb[0].mxu0
    %v910 = vadd.f32 %v841, %v909
    %v911 = vpop.f32.mrb[0].mxu0
    %912 = vmatprep.mubr.f32.mxu0 0.0
    %913 = vmatmul.mubr.f32.gmra.mrb[0].mxu0 %v152
    %v914 = vpop.f32.mrb[0].mxu0
    %v915 = vadd.f32 %v841, %v914
    %v916 = vpop.f32.mrb[0].mxu0
    %917 = vdwg.mxu0
    %s918 = scalar_lea.vmem %s2, 320
    %v919 = vld [vmem:[%s918] sm:$0xff]
    %v920 = vld [vmem:[%s918 + $0x8] sm:$0xff]
    %v921 = vld [vmem:[%s918 + $0x10] sm:$0xff]
    %v922 = vld [vmem:[%s918 + $0x18] sm:$0xff]
    %v923 = vld [vmem:[%s918 + $0x20] sm:$0xff]
    %v924 = vld [vmem:[%s918 + $0x28] sm:$0xff]
    %v925 = vld [vmem:[%s918 + $0x30] sm:$0xff]
    %v926 = vld [vmem:[%s918 + $0x38] sm:$0xff]
    %s927 = scalar_lea.vmem %s3, 5
    %v928 = vld [vmem:[%s927] sm:$0x1]
    %v930 = vlaneseq
    %v931 = vshrl.u32 %v930, 7
    %v932 = vsub.s32 0, %v931
    %v933 = vrot.slane %v928, %v932
    %935 = vmatprep.subr.mxu0 0.0
    %936 = vmatpush1.msra.mxu0 %v919
    %937 = vmatprep.subr.mxu0 0.0
    %938 = vmatpush1.msra.mxu0 %v920
    %939 = vmatprep.subr.mxu0 0.0
    %940 = vmatpush1.msra.mxu0 %v921
    %941 = vmatprep.subr.mxu0 0.0
    %942 = vmatpush1.msra.mxu0 %v922
    %943 = vmatprep.subr.mxu0 0.0
    %944 = vmatpush1.msra.mxu0 %v923
    %945 = vmatprep.subr.mxu0 0.0
    %946 = vmatpush1.msra.mxu0 %v924
    %947 = vmatprep.subr.mxu0 0.0
    %948 = vmatpush1.msra.mxu0 %v925
    %949 = vmatprep.subr.mxu0 0.0
    %950 = vmatpush1.msra.mxu0 %v926
    %951 = vmatprep.subr.mxu0 0.0
    %952 = vmatpush1.msra.mxu0 0.0
    %953 = vmatprep.subr.mxu0 0.0
    %954 = vmatpush1.msra.mxu0 0.0
    %955 = vmatprep.subr.mxu0 0.0
    %956 = vmatpush1.msra.mxu0 0.0
    %957 = vmatprep.subr.mxu0 0.0
    %958 = vmatpush1.msra.mxu0 0.0
    %959 = vmatprep.subr.mxu0 0.0
    %960 = vmatpush1.msra.mxu0 0.0
    %961 = vmatprep.subr.mxu0 0.0
    %962 = vmatpush1.msra.mxu0 0.0
    %963 = vmatprep.subr.mxu0 0.0
    %964 = vmatpush1.msra.mxu0 0.0
    %965 = vmatprep.subr.mxu0 0.0
    %966 = vmatpush1.msra.mxu0 0.0
    %967 = vmatprep.subr.mxu0 0.0
    %968 = vmatpush1.msra.mxu0 0.0
    %969 = vmatprep.subr.mxu0 0.0
    %970 = vmatpush1.msra.mxu0 0.0
    %971 = vmatprep.subr.mxu0 0.0
    %972 = vmatpush1.msra.mxu0 0.0
    %973 = vmatprep.subr.mxu0 0.0
    %974 = vmatpush1.msra.mxu0 0.0
    %975 = vmatprep.subr.mxu0 0.0
    %976 = vmatpush1.msra.mxu0 0.0
    %977 = vmatprep.subr.mxu0 0.0
    %978 = vmatpush1.msra.mxu0 0.0
    %979 = vmatprep.subr.mxu0 0.0
    %980 = vmatpush1.msra.mxu0 0.0
    %981 = vmatprep.subr.mxu0 0.0
    %982 = vmatpush1.msra.mxu0 0.0
    %983 = vmatprep.subr.mxu0 0.0
    %984 = vmatpush1.msra.mxu0 0.0
    %985 = vmatprep.subr.mxu0 0.0
    %986 = vmatpush1.msra.mxu0 0.0
    %987 = vmatprep.subr.mxu0 0.0
    %988 = vmatpush1.msra.mxu0 0.0
    %989 = vmatprep.subr.mxu0 0.0
    %990 = vmatpush1.msra.mxu0 0.0
    %991 = vmatprep.subr.mxu0 0.0
    %992 = vmatpush1.msra.mxu0 0.0
    %993 = vmatprep.subr.mxu0 0.0
    %994 = vmatpush1.msra.mxu0 0.0
    %995 = vmatprep.subr.mxu0 0.0
    %996 = vmatpush1.msra.mxu0 0.0
    %997 = vmatprep.subr.mxu0 0.0
    %998 = vmatpush1.msra.mxu0 0.0
    %999 = vmatprep.mubr.f32.mxu0 0.0
    %1000 = vmatmul.mubr.f32.gmra.mrb[0].mxu0 %v149
    %v1001 = vpop.f32.mrb[0].mxu0
    %v1002 = vadd.f32 %v933, %v1001
    %v1003 = vpop.f32.mrb[0].mxu0
    %1004 = vmatprep.mubr.f32.mxu0 0.0
    %1005 = vmatmul.mubr.f32.gmra.mrb[0].mxu0 %v152
    %v1006 = vpop.f32.mrb[0].mxu0
    %v1007 = vadd.f32 %v933, %v1006
    %v1008 = vpop.f32.mrb[0].mxu0
    %1009 = vdwg.mxu0
    %s1010 = scalar_lea.vmem %s2, 576
    %v1011 = vld [vmem:[%s1010] sm:$0xff]
    %v1012 = vld [vmem:[%s1010 + $0x8] sm:$0xff]
    %v1013 = vld [vmem:[%s1010 + $0x10] sm:$0xff]
    %v1014 = vld [vmem:[%s1010 + $0x18] sm:$0xff]
    %v1015 = vld [vmem:[%s1010 + $0x20] sm:$0xff]
    %v1016 = vld [vmem:[%s1010 + $0x28] sm:$0xff]
    %v1017 = vld [vmem:[%s1010 + $0x30] sm:$0xff]
    %v1018 = vld [vmem:[%s1010 + $0x38] sm:$0xff]
    %s1019 = scalar_lea.vmem %s3, 9
    %v1020 = vld [vmem:[%s1019] sm:$0x1]
    %v1022 = vlaneseq
    %v1023 = vshrl.u32 %v1022, 7
    %v1024 = vsub.s32 0, %v1023
    %v1025 = vrot.slane %v1020, %v1024
    %1027 = vmatprep.subr.mxu0 0.0
    %1028 = vmatpush1.msra.mxu0 %v1011
    %1029 = vmatprep.subr.mxu0 0.0
    %1030 = vmatpush1.msra.mxu0 %v1012
    %1031 = vmatprep.subr.mxu0 0.0
    %1032 = vmatpush1.msra.mxu0 %v1013
    %1033 = vmatprep.subr.mxu0 0.0
    %1034 = vmatpush1.msra.mxu0 %v1014
    %1035 = vmatprep.subr.mxu0 0.0
    %1036 = vmatpush1.msra.mxu0 %v1015
    %1037 = vmatprep.subr.mxu0 0.0
    %1038 = vmatpush1.msra.mxu0 %v1016
    %1039 = vmatprep.subr.mxu0 0.0
    %1040 = vmatpush1.msra.mxu0 %v1017
    %1041 = vmatprep.subr.mxu0 0.0
    %1042 = vmatpush1.msra.mxu0 %v1018
    %1043 = vmatprep.subr.mxu0 0.0
    %1044 = vmatpush1.msra.mxu0 0.0
    %1045 = vmatprep.subr.mxu0 0.0
    %1046 = vmatpush1.msra.mxu0 0.0
    %1047 = vmatprep.subr.mxu0 0.0
    %1048 = vmatpush1.msra.mxu0 0.0
    %1049 = vmatprep.subr.mxu0 0.0
    %1050 = vmatpush1.msra.mxu0 0.0
    %1051 = vmatprep.subr.mxu0 0.0
    %1052 = vmatpush1.msra.mxu0 0.0
    %1053 = vmatprep.subr.mxu0 0.0
    %1054 = vmatpush1.msra.mxu0 0.0
    %1055 = vmatprep.subr.mxu0 0.0
    %1056 = vmatpush1.msra.mxu0 0.0
    %1057 = vmatprep.subr.mxu0 0.0
    %1058 = vmatpush1.msra.mxu0 0.0
    %1059 = vmatprep.subr.mxu0 0.0
    %1060 = vmatpush1.msra.mxu0 0.0
    %1061 = vmatprep.subr.mxu0 0.0
    %1062 = vmatpush1.msra.mxu0 0.0
    %1063 = vmatprep.subr.mxu0 0.0
    %1064 = vmatpush1.msra.mxu0 0.0
    %1065 = vmatprep.subr.mxu0 0.0
    %1066 = vmatpush1.msra.mxu0 0.0
    %1067 = vmatprep.subr.mxu0 0.0
    %1068 = vmatpush1.msra.mxu0 0.0
    %1069 = vmatprep.subr.mxu0 0.0
    %1070 = vmatpush1.msra.mxu0 0.0
    %1071 = vmatprep.subr.mxu0 0.0
    %1072 = vmatpush1.msra.mxu0 0.0
    %1073 = vmatprep.subr.mxu0 0.0
    %1074 = vmatpush1.msra.mxu0 0.0
    %1075 = vmatprep.subr.mxu0 0.0
    %1076 = vmatpush1.msra.mxu0 0.0
    %1077 = vmatprep.subr.mxu0 0.0
    %1078 = vmatpush1.msra.mxu0 0.0
    %1079 = vmatprep.subr.mxu0 0.0
    %1080 = vmatpush1.msra.mxu0 0.0
    %1081 = vmatprep.subr.mxu0 0.0
    %1082 = vmatpush1.msra.mxu0 0.0
    %1083 = vmatprep.subr.mxu0 0.0
    %1084 = vmatpush1.msra.mxu0 0.0
    %1085 = vmatprep.subr.mxu0 0.0
    %1086 = vmatpush1.msra.mxu0 0.0
    %1087 = vmatprep.subr.mxu0 0.0
    %1088 = vmatpush1.msra.mxu0 0.0
    %1089 = vmatprep.subr.mxu0 0.0
    %1090 = vmatpush1.msra.mxu0 0.0
    %1091 = vmatprep.mubr.f32.mxu0 0.0
    %1092 = vmatmul.mubr.f32.gmra.mrb[0].mxu0 %v149
    %v1093 = vpop.f32.mrb[0].mxu0
    %v1094 = vadd.f32 %v1025, %v1093
    %v1095 = vpop.f32.mrb[0].mxu0
    %1096 = vmatprep.mubr.f32.mxu0 0.0
    %1097 = vmatmul.mubr.f32.gmra.mrb[0].mxu0 %v152
    %v1098 = vpop.f32.mrb[0].mxu0
    %v1099 = vadd.f32 %v1025, %v1098
    %v1100 = vpop.f32.mrb[0].mxu0
    %1101 = vdwg.mxu0
    %v1103 = vsel %vm413, %v910, 0
    %v1106 = vsel %vm413, %v1002, 0
    %1108 = vmatprep.subr.mxu0 0.0
    %1109 = vmatpush1.xpose.msra.mxu0 %v1106
    %1110 = vmatprep.subr.mxu0 0.0
    %1111 = vmatpush1.xpose.msra.mxu0 0.0
    %1112 = vmatprep.subr.mxu0 0.0
    %1113 = vmatpush1.xpose.msra.mxu0 0.0
    %1114 = vmatprep.subr.mxu0 0.0
    %1115 = vmatpush1.xpose.msra.mxu0 0.0
    %1116 = vmatprep.subr.mxu0 0.0
    %1117 = vmatpush1.xpose.msra.mxu0 0.0
    %1118 = vmatprep.subr.mxu0 0.0
    %1119 = vmatpush1.xpose.msra.mxu0 0.0
    %1120 = vmatprep.subr.mxu0 0.0
    %1121 = vmatpush1.xpose.msra.mxu0 0.0
    %1122 = vmatprep.subr.mxu0 0.0
    %1123 = vmatpush1.xpose.msra.mxu0 0.0
    %1124 = vmatprep.subr.mxu0 0.0
    %1125 = vmatpush1.xpose.msra.mxu0 0.0
    %1126 = vmatprep.subr.mxu0 0.0
    %1127 = vmatpush1.xpose.msra.mxu0 0.0
    %1128 = vmatprep.subr.mxu0 0.0
    %1129 = vmatpush1.xpose.msra.mxu0 0.0
    %1130 = vmatprep.subr.mxu0 0.0
    %1131 = vmatpush1.xpose.msra.mxu0 0.0
    %1132 = vmatprep.subr.mxu0 0.0
    %1133 = vmatpush1.xpose.msra.mxu0 0.0
    %1134 = vmatprep.subr.mxu0 0.0
    %1135 = vmatpush1.xpose.msra.mxu0 0.0
    %1136 = vmatprep.subr.mxu0 0.0
    %1137 = vmatpush1.xpose.msra.mxu0 0.0
    %1138 = vmatprep.subr.mxu0 0.0
    %1139 = vmatpush1.xpose.msra.mxu0 0.0
    %1140 = vmatprep.subr.mxu0 0.0
    %1141 = vmatpush1.xpose.msra.mxu0 0.0
    %1142 = vmatprep.subr.mxu0 0.0
    %1143 = vmatpush1.xpose.msra.mxu0 0.0
    %1144 = vmatprep.subr.mxu0 0.0
    %1145 = vmatpush1.xpose.msra.mxu0 0.0
    %1146 = vmatprep.subr.mxu0 0.0
    %1147 = vmatpush1.xpose.msra.mxu0 0.0
    %1148 = vmatprep.subr.mxu0 0.0
    %1149 = vmatpush1.xpose.msra.mxu0 0.0
    %1150 = vmatprep.subr.mxu0 0.0
    %1151 = vmatpush1.xpose.msra.mxu0 0.0
    %1152 = vmatprep.subr.mxu0 0.0
    %1153 = vmatpush1.xpose.msra.mxu0 0.0
    %1154 = vmatprep.subr.mxu0 0.0
    %1155 = vmatpush1.xpose.msra.mxu0 0.0
    %1156 = vmatprep.subr.mxu0 0.0
    %1157 = vmatpush1.xpose.msra.mxu0 0.0
    %1158 = vmatprep.subr.mxu0 0.0
    %1159 = vmatpush1.xpose.msra.mxu0 0.0
    %1160 = vmatprep.subr.mxu0 0.0
    %1161 = vmatpush1.xpose.msra.mxu0 0.0
    %1162 = vmatprep.subr.mxu0 0.0
    %1163 = vmatpush1.xpose.msra.mxu0 0.0
    %1164 = vmatprep.subr.mxu0 0.0
    %1165 = vmatpush1.xpose.msra.mxu0 0.0
    %1166 = vmatprep.subr.mxu0 0.0
    %1167 = vmatpush1.xpose.msra.mxu0 0.0
    %1168 = vmatprep.subr.mxu0 0.0
    %1169 = vmatpush1.xpose.msra.mxu0 0.0
    %1170 = vmatprep.subr.mxu0 0.0
    %1171 = vmatpush1.xpose.msra.mxu0 0.0
    %1172 = vmatprep.mubr.f32.mxu0 0.0
    %1173 = vmatmul.mubr.f32.gmra.mrb[0].mxu0 %v1103
    %v1174 = vpop.f32.mrb[0].mxu0
    %v1175 = vadd.f32 0.0, %v1174
    %v1176 = vpop.f32.mrb[0].mxu0
    %1177 = vdwg.mxu0
    %v1179 = vsel %vm413, %v915, 0
    %v1182 = vsel %vm413, %v1007, 0
    %1184 = vmatprep.subr.mxu0 0.0
    %1185 = vmatpush1.xpose.msra.mxu0 %v1182
    %1186 = vmatprep.subr.mxu0 0.0
    %1187 = vmatpush1.xpose.msra.mxu0 0.0
    %1188 = vmatprep.subr.mxu0 0.0
    %1189 = vmatpush1.xpose.msra.mxu0 0.0
    %1190 = vmatprep.subr.mxu0 0.0
    %1191 = vmatpush1.xpose.msra.mxu0 0.0
    %1192 = vmatprep.subr.mxu0 0.0
    %1193 = vmatpush1.xpose.msra.mxu0 0.0
    %1194 = vmatprep.subr.mxu0 0.0
    %1195 = vmatpush1.xpose.msra.mxu0 0.0
    %1196 = vmatprep.subr.mxu0 0.0
    %1197 = vmatpush1.xpose.msra.mxu0 0.0
    %1198 = vmatprep.subr.mxu0 0.0
    %1199 = vmatpush1.xpose.msra.mxu0 0.0
    %1200 = vmatprep.subr.mxu0 0.0
    %1201 = vmatpush1.xpose.msra.mxu0 0.0
    %1202 = vmatprep.subr.mxu0 0.0
    %1203 = vmatpush1.xpose.msra.mxu0 0.0
    %1204 = vmatprep.subr.mxu0 0.0
    %1205 = vmatpush1.xpose.msra.mxu0 0.0
    %1206 = vmatprep.subr.mxu0 0.0
    %1207 = vmatpush1.xpose.msra.mxu0 0.0
    %1208 = vmatprep.subr.mxu0 0.0
    %1209 = vmatpush1.xpose.msra.mxu0 0.0
    %1210 = vmatprep.subr.mxu0 0.0
    %1211 = vmatpush1.xpose.msra.mxu0 0.0
    %1212 = vmatprep.subr.mxu0 0.0
    %1213 = vmatpush1.xpose.msra.mxu0 0.0
    %1214 = vmatprep.subr.mxu0 0.0
    %1215 = vmatpush1.xpose.msra.mxu0 0.0
    %1216 = vmatprep.subr.mxu0 0.0
    %1217 = vmatpush1.xpose.msra.mxu0 0.0
    %1218 = vmatprep.subr.mxu0 0.0
    %1219 = vmatpush1.xpose.msra.mxu0 0.0
    %1220 = vmatprep.subr.mxu0 0.0
    %1221 = vmatpush1.xpose.msra.mxu0 0.0
    %1222 = vmatprep.subr.mxu0 0.0
    %1223 = vmatpush1.xpose.msra.mxu0 0.0
    %1224 = vmatprep.subr.mxu0 0.0
    %1225 = vmatpush1.xpose.msra.mxu0 0.0
    %1226 = vmatprep.subr.mxu0 0.0
    %1227 = vmatpush1.xpose.msra.mxu0 0.0
    %1228 = vmatprep.subr.mxu0 0.0
    %1229 = vmatpush1.xpose.msra.mxu0 0.0
    %1230 = vmatprep.subr.mxu0 0.0
    %1231 = vmatpush1.xpose.msra.mxu0 0.0
    %1232 = vmatprep.subr.mxu0 0.0
    %1233 = vmatpush1.xpose.msra.mxu0 0.0
    %1234 = vmatprep.subr.mxu0 0.0
    %1235 = vmatpush1.xpose.msra.mxu0 0.0
    %1236 = vmatprep.subr.mxu0 0.0
    %1237 = vmatpush1.xpose.msra.mxu0 0.0
    %1238 = vmatprep.subr.mxu0 0.0
    %1239 = vmatpush1.xpose.msra.mxu0 0.0
    %1240 = vmatprep.subr.mxu0 0.0
    %1241 = vmatpush1.xpose.msra.mxu0 0.0
    %1242 = vmatprep.subr.mxu0 0.0
    %1243 = vmatpush1.xpose.msra.mxu0 0.0
    %1244 = vmatprep.subr.mxu0 0.0
    %1245 = vmatpush1.xpose.msra.mxu0 0.0
    %1246 = vmatprep.subr.mxu0 0.0
    %1247 = vmatpush1.xpose.msra.mxu0 0.0
    %1248 = vmatprep.mubr.f32.mxu0 0.0
    %1249 = vmatmul.mubr.f32.gmra.mrb[0].mxu0 %v1179
    %v1250 = vpop.f32.mrb[0].mxu0
    %v1251 = vadd.f32 0.0, %v1250
    %v1252 = vpop.f32.mrb[0].mxu0
    %1253 = vdwg.mxu0
    %v1254 = vsel %vm566, %v1175, -inf
    %1255 = vmax.xlane.f32.xlu0 %v1254
    %v1256 = vpop.xlane.xlu0 %1255
    %v1257 = vsel %vm566, %v1251, -inf
    %1258 = vmax.xlane.f32.xlu0 %v1257
    %v1259 = vpop.xlane.xlu0 %1258
    %v1260 = vsub.f32 %v1175, %v1256
    %v1261 = vsub.f32 %v1251, %v1259
    %v1262 = vmul.f32 %v1260, 1.442695
    %v1263 = vpow.pop %v1262
    %v1264 = vmul.f32 %v1261, 1.442695
    %v1265 = vpow.pop %v1264
    %v1266 = vsel %vm566, %v1263, 0.0
    %1267 = vadd.xlane.f32.xlu0 %v1266
    %v1268 = vpop.xlane.xlu0 %1267
    %v1269 = vsel %vm566, %v1265, 0.0
    %1270 = vadd.xlane.f32.xlu0 %v1269
    %v1271 = vpop.xlane.xlu0 %1270
    %v1272 = vrcp.pop %v1268
    %v1273 = vrcp.pop %v1271
    %v1274 = vmul.f32 %v1263, %v1272
    %v1275 = vmul.f32 %v1265, %v1273
    %v1277 = vsel %vm566, %v1274, 0
    %1279 = vmatprep.subr.mxu0 0.0
    %1280 = vmatpush1.msra.mxu0 %v1094
    %1281 = vmatprep.subr.mxu0 0.0
    %1282 = vmatpush1.msra.mxu0 0.0
    %1283 = vmatprep.subr.mxu0 0.0
    %1284 = vmatpush1.msra.mxu0 0.0
    %1285 = vmatprep.subr.mxu0 0.0
    %1286 = vmatpush1.msra.mxu0 0.0
    %1287 = vmatprep.subr.mxu0 0.0
    %1288 = vmatpush1.msra.mxu0 0.0
    %1289 = vmatprep.subr.mxu0 0.0
    %1290 = vmatpush1.msra.mxu0 0.0
    %1291 = vmatprep.subr.mxu0 0.0
    %1292 = vmatpush1.msra.mxu0 0.0
    %1293 = vmatprep.subr.mxu0 0.0
    %1294 = vmatpush1.msra.mxu0 0.0
    %1295 = vmatprep.subr.mxu0 0.0
    %1296 = vmatpush1.msra.mxu0 0.0
    %1297 = vmatprep.subr.mxu0 0.0
    %1298 = vmatpush1.msra.mxu0 0.0
    %1299 = vmatprep.subr.mxu0 0.0
    %1300 = vmatpush1.msra.mxu0 0.0
    %1301 = vmatprep.subr.mxu0 0.0
    %1302 = vmatpush1.msra.mxu0 0.0
    %1303 = vmatprep.subr.mxu0 0.0
    %1304 = vmatpush1.msra.mxu0 0.0
    %1305 = vmatprep.subr.mxu0 0.0
    %1306 = vmatpush1.msra.mxu0 0.0
    %1307 = vmatprep.subr.mxu0 0.0
    %1308 = vmatpush1.msra.mxu0 0.0
    %1309 = vmatprep.subr.mxu0 0.0
    %1310 = vmatpush1.msra.mxu0 0.0
    %1311 = vmatprep.subr.mxu0 0.0
    %1312 = vmatpush1.msra.mxu0 0.0
    %1313 = vmatprep.subr.mxu0 0.0
    %1314 = vmatpush1.msra.mxu0 0.0
    %1315 = vmatprep.subr.mxu0 0.0
    %1316 = vmatpush1.msra.mxu0 0.0
    %1317 = vmatprep.subr.mxu0 0.0
    %1318 = vmatpush1.msra.mxu0 0.0
    %1319 = vmatprep.subr.mxu0 0.0
    %1320 = vmatpush1.msra.mxu0 0.0
    %1321 = vmatprep.subr.mxu0 0.0
    %1322 = vmatpush1.msra.mxu0 0.0
    %1323 = vmatprep.subr.mxu0 0.0
    %1324 = vmatpush1.msra.mxu0 0.0
    %1325 = vmatprep.subr.mxu0 0.0
    %1326 = vmatpush1.msra.mxu0 0.0
    %1327 = vmatprep.subr.mxu0 0.0
    %1328 = vmatpush1.msra.mxu0 0.0
    %1329 = vmatprep.subr.mxu0 0.0
    %1330 = vmatpush1.msra.mxu0 0.0
    %1331 = vmatprep.subr.mxu0 0.0
    %1332 = vmatpush1.msra.mxu0 0.0
    %1333 = vmatprep.subr.mxu0 0.0
    %1334 = vmatpush1.msra.mxu0 0.0
    %1335 = vmatprep.subr.mxu0 0.0
    %1336 = vmatpush1.msra.mxu0 0.0
    %1337 = vmatprep.subr.mxu0 0.0
    %1338 = vmatpush1.msra.mxu0 0.0
    %1339 = vmatprep.subr.mxu0 0.0
    %1340 = vmatpush1.msra.mxu0 0.0
    %1341 = vmatprep.subr.mxu0 0.0
    %1342 = vmatpush1.msra.mxu0 0.0
    %1343 = vmatprep.mubr.f32.mxu0 0.0
    %1344 = vmatmul.mubr.f32.gmra.mrb[0].mxu0 %v1277
    %v1345 = vpop.f32.mrb[0].mxu0
    %v1346 = vadd.f32 0.0, %v1345
    %v1347 = vpop.f32.mrb[0].mxu0
    %1348 = vdwg.mxu0
    %v1350 = vsel %vm566, %v1275, 0
    %1352 = vmatprep.subr.mxu0 0.0
    %1353 = vmatpush1.msra.mxu0 %v1099
    %1354 = vmatprep.subr.mxu0 0.0
    %1355 = vmatpush1.msra.mxu0 0.0
    %1356 = vmatprep.subr.mxu0 0.0
    %1357 = vmatpush1.msra.mxu0 0.0
    %1358 = vmatprep.subr.mxu0 0.0
    %1359 = vmatpush1.msra.mxu0 0.0
    %1360 = vmatprep.subr.mxu0 0.0
    %1361 = vmatpush1.msra.mxu0 0.0
    %1362 = vmatprep.subr.mxu0 0.0
    %1363 = vmatpush1.msra.mxu0 0.0
    %1364 = vmatprep.subr.mxu0 0.0
    %1365 = vmatpush1.msra.mxu0 0.0
    %1366 = vmatprep.subr.mxu0 0.0
    %1367 = vmatpush1.msra.mxu0 0.0
    %1368 = vmatprep.subr.mxu0 0.0
    %1369 = vmatpush1.msra.mxu0 0.0
    %1370 = vmatprep.subr.mxu0 0.0
    %1371 = vmatpush1.msra.mxu0 0.0
    %1372 = vmatprep.subr.mxu0 0.0
    %1373 = vmatpush1.msra.mxu0 0.0
    %1374 = vmatprep.subr.mxu0 0.0
    %1375 = vmatpush1.msra.mxu0 0.0
    %1376 = vmatprep.subr.mxu0 0.0
    %1377 = vmatpush1.msra.mxu0 0.0
    %1378 = vmatprep.subr.mxu0 0.0
    %1379 = vmatpush1.msra.mxu0 0.0
    %1380 = vmatprep.subr.mxu0 0.0
    %1381 = vmatpush1.msra.mxu0 0.0
    %1382 = vmatprep.subr.mxu0 0.0
    %1383 = vmatpush1.msra.mxu0 0.0
    %1384 = vmatprep.subr.mxu0 0.0
    %1385 = vmatpush1.msra.mxu0 0.0
    %1386 = vmatprep.subr.mxu0 0.0
    %1387 = vmatpush1.msra.mxu0 0.0
    %1388 = vmatprep.subr.mxu0 0.0
    %1389 = vmatpush1.msra.mxu0 0.0
    %1390 = vmatprep.subr.mxu0 0.0
    %1391 = vmatpush1.msra.mxu0 0.0
    %1392 = vmatprep.subr.mxu0 0.0
    %1393 = vmatpush1.msra.mxu0 0.0
    %1394 = vmatprep.subr.mxu0 0.0
    %1395 = vmatpush1.msra.mxu0 0.0
    %1396 = vmatprep.subr.mxu0 0.0
    %1397 = vmatpush1.msra.mxu0 0.0
    %1398 = vmatprep.subr.mxu0 0.0
    %1399 = vmatpush1.msra.mxu0 0.0
    %1400 = vmatprep.subr.mxu0 0.0
    %1401 = vmatpush1.msra.mxu0 0.0
    %1402 = vmatprep.subr.mxu0 0.0
    %1403 = vmatpush1.msra.mxu0 0.0
    %1404 = vmatprep.subr.mxu0 0.0
    %1405 = vmatpush1.msra.mxu0 0.0
    %1406 = vmatprep.subr.mxu0 0.0
    %1407 = vmatpush1.msra.mxu0 0.0
    %1408 = vmatprep.subr.mxu0 0.0
    %1409 = vmatpush1.msra.mxu0 0.0
    %1410 = vmatprep.subr.mxu0 0.0
    %1411 = vmatpush1.msra.mxu0 0.0
    %1412 = vmatprep.subr.mxu0 0.0
    %1413 = vmatpush1.msra.mxu0 0.0
    %1414 = vmatprep.subr.mxu0 0.0
    %1415 = vmatpush1.msra.mxu0 0.0
    %1416 = vmatprep.mubr.f32.mxu0 0.0
    %1417 = vmatmul.mubr.f32.gmra.mrb[0].mxu0 %v1350
    %v1418 = vpop.f32.mrb[0].mxu0
    %v1419 = vadd.f32 0.0, %v1418
    %v1420 = vpop.f32.mrb[0].mxu0
    %1421 = vdwg.mxu0
    %s1422 = scalar_lea.vmem %s4, 32
    %v1423 = vld [vmem:[%s1422] sm:$0xff]
    %v1424 = vld [vmem:[%s1422 + $0x8] sm:$0xff]
    %v1425 = vld [vmem:[%s1422 + $0x10] sm:$0xff]
    %v1426 = vld [vmem:[%s1422 + $0x18] sm:$0xff]
    %v1428 = vsel %vm413, %v1346, 0
    %v1431 = vsel %vm413, %v1419, 0
    %1433 = vmatprep.subr.mxu0 0.0
    %1434 = vmatpush1.msra.mxu0 %v1423
    %1435 = vmatprep.subr.mxu0 0.0
    %1436 = vmatpush1.msra.mxu0 %v1424
    %1437 = vmatprep.subr.mxu0 0.0
    %1438 = vmatpush1.msra.mxu0 %v1425
    %1439 = vmatprep.subr.mxu0 0.0
    %1440 = vmatpush1.msra.mxu0 %v1426
    %1441 = vmatprep.subr.mxu0 0.0
    %1442 = vmatpush1.msra.mxu0 0.0
    %1443 = vmatprep.subr.mxu0 0.0
    %1444 = vmatpush1.msra.mxu0 0.0
    %1445 = vmatprep.subr.mxu0 0.0
    %1446 = vmatpush1.msra.mxu0 0.0
    %1447 = vmatprep.subr.mxu0 0.0
    %1448 = vmatpush1.msra.mxu0 0.0
    %1449 = vmatprep.subr.mxu0 0.0
    %1450 = vmatpush1.msra.mxu0 0.0
    %1451 = vmatprep.subr.mxu0 0.0
    %1452 = vmatpush1.msra.mxu0 0.0
    %1453 = vmatprep.subr.mxu0 0.0
    %1454 = vmatpush1.msra.mxu0 0.0
    %1455 = vmatprep.subr.mxu0 0.0
    %1456 = vmatpush1.msra.mxu0 0.0
    %1457 = vmatprep.subr.mxu0 0.0
    %1458 = vmatpush1.msra.mxu0 0.0
    %1459 = vmatprep.subr.mxu0 0.0
    %1460 = vmatpush1.msra.mxu0 0.0
    %1461 = vmatprep.subr.mxu0 0.0
    %1462 = vmatpush1.msra.mxu0 0.0
    %1463 = vmatprep.subr.mxu0 0.0
    %1464 = vmatpush1.msra.mxu0 0.0
    %1465 = vmatprep.subr.mxu0 0.0
    %1466 = vmatpush1.msra.mxu0 0.0
    %1467 = vmatprep.subr.mxu0 0.0
    %1468 = vmatpush1.msra.mxu0 0.0
    %1469 = vmatprep.subr.mxu0 0.0
    %1470 = vmatpush1.msra.mxu0 0.0
    %1471 = vmatprep.subr.mxu0 0.0
    %1472 = vmatpush1.msra.mxu0 0.0
    %1473 = vmatprep.subr.mxu0 0.0
    %1474 = vmatpush1.msra.mxu0 0.0
    %1475 = vmatprep.subr.mxu0 0.0
    %1476 = vmatpush1.msra.mxu0 0.0
    %1477 = vmatprep.subr.mxu0 0.0
    %1478 = vmatpush1.msra.mxu0 0.0
    %1479 = vmatprep.subr.mxu0 0.0
    %1480 = vmatpush1.msra.mxu0 0.0
    %1481 = vmatprep.subr.mxu0 0.0
    %1482 = vmatpush1.msra.mxu0 0.0
    %1483 = vmatprep.subr.mxu0 0.0
    %1484 = vmatpush1.msra.mxu0 0.0
    %1485 = vmatprep.subr.mxu0 0.0
    %1486 = vmatpush1.msra.mxu0 0.0
    %1487 = vmatprep.subr.mxu0 0.0
    %1488 = vmatpush1.msra.mxu0 0.0
    %1489 = vmatprep.subr.mxu0 0.0
    %1490 = vmatpush1.msra.mxu0 0.0
    %1491 = vmatprep.subr.mxu0 0.0
    %1492 = vmatpush1.msra.mxu0 0.0
    %1493 = vmatprep.subr.mxu0 0.0
    %1494 = vmatpush1.msra.mxu0 0.0
    %1495 = vmatprep.subr.mxu0 0.0
    %1496 = vmatpush1.msra.mxu0 0.0
    %1497 = vmatprep.mubr.f32.mxu0 0.0
    %1498 = vmatmul.mubr.f32.gmra.mrb[0].mxu0 %v1428
    %v1499 = vpop.f32.mrb[0].mxu0
    %v1500 = vadd.f32 0.0, %v1499
    %v1501 = vpop.f32.mrb[0].mxu0
    %1502 = vmatprep.mubr.f32.mxu0 0.0
    %1503 = vmatmul.mubr.f32.gmra.mrb[0].mxu0 %v1431
    %v1504 = vpop.f32.mrb[0].mxu0
    %v1505 = vadd.f32 0.0, %v1504
    %v1506 = vpop.f32.mrb[0].mxu0
    %1507 = vdwg.mxu0
    %v1508 = vadd.f32 %v824, %v1500
    %v1509 = vadd.f32 %v825, %v1505
    %v1510 = vadd.f32 %v1508, %v130
    %v1511 = vadd.f32 %v1509, %v131
    %v1512 = vld [vmem:[%s8 + $0x5] sm:$0x1]
    %v1513 = vld [vmem:[%s8 + $0x6] sm:$0x1]
    %v1514 = vsel %vm92, %v1510, 0.0
    %1515 = vadd.xlane.f32.xlu0 %v1514
    %v1516 = vpop.xlane.xlu0 %1515
    %v1517 = vsel %vm92, %v1511, 0.0
    %1518 = vadd.xlane.f32.xlu0 %v1517
    %v1519 = vpop.xlane.xlu0 %1518
    %v1520 = vmul.f32 %v1516, %v99
    %v1521 = vmul.f32 %v1519, %v99
    %v1522 = vsub.f32 %v1510, %v1520
    %v1523 = vsub.f32 %v1511, %v1521
    %v1524 = vmul.f32 %v1522, %v1522
    %v1525 = vmul.f32 %v1523, %v1523
    %v1526 = vsel %vm92, %v1524, 0.0
    %1527 = vadd.xlane.f32.xlu0 %v1526
    %v1528 = vpop.xlane.xlu0 %1527
    %v1529 = vsel %vm92, %v1525, 0.0
    %1530 = vadd.xlane.f32.xlu0 %v1529
    %v1531 = vpop.xlane.xlu0 %1530
    %v1532 = vmul.f32 %v1528, %v99
    %v1533 = vmul.f32 %v1531, %v99
    %v1534 = vadd.f32 %v1532, 1e-12
    %v1535 = vadd.f32 %v1533, 1e-12
    %v1536 = vrsqrt.pop %v1534
    %v1537 = vrsqrt.pop %v1535
    %v1538 = vmul.f32 %v1522, %v1536
    %v1539 = vmul.f32 %v1523, %v1537
    %v1540 = vlaneseq
    %v1541 = vshrl.u32 %v1540, 7
    %v1542 = vsub.s32 0, %v1541
    %v1543 = vrot.slane %v1512, %v1542
    %v1544 = vmul.f32 %v1538, %v1543
    %v1545 = vmul.f32 %v1539, %v1543
    %v1546 = vlaneseq
    %v1547 = vshrl.u32 %v1546, 7
    %v1548 = vsub.s32 0, %v1547
    %v1549 = vrot.slane %v1513, %v1548
    %v1550 = vadd.f32 %v1544, %v1549
    %v1551 = vadd.f32 %v1545, %v1549
    %v1552 = vld [vmem:[%s5] sm:$0xff]
    %v1553 = vld [vmem:[%s5 + $0x8] sm:$0xff]
    %v1554 = vld [vmem:[%s5 + $0x10] sm:$0xff]
    %v1555 = vld [vmem:[%s5 + $0x18] sm:$0xff]
    %v1556 = vld [vmem:[%s5 + $0x20] sm:$0xff]
    %v1557 = vld [vmem:[%s5 + $0x28] sm:$0xff]
    %v1558 = vld [vmem:[%s5 + $0x30] sm:$0xff]
    %v1559 = vld [vmem:[%s5 + $0x38] sm:$0xff]
    %v1560 = vld [vmem:[%s9] sm:$0x1]
    %v1561 = vlaneseq
    %v1562 = vshrl.u32 %v1561, 7
    %v1563 = vsub.s32 0, %v1562
    %v1564 = vrot.slane %v1560, %v1563
    %v1566 = vsel %vm92, %v1550, 0
    %v1569 = vsel %vm92, %v1551, 0
    %1571 = vmatprep.subr.mxu0 0.0
    %1572 = vmatpush1.msra.mxu0 %v1552
    %1573 = vmatprep.subr.mxu0 0.0
    %1574 = vmatpush1.msra.mxu0 %v1553
    %1575 = vmatprep.subr.mxu0 0.0
    %1576 = vmatpush1.msra.mxu0 %v1554
    %1577 = vmatprep.subr.mxu0 0.0
    %1578 = vmatpush1.msra.mxu0 %v1555
    %1579 = vmatprep.subr.mxu0 0.0
    %1580 = vmatpush1.msra.mxu0 %v1556
    %1581 = vmatprep.subr.mxu0 0.0
    %1582 = vmatpush1.msra.mxu0 %v1557
    %1583 = vmatprep.subr.mxu0 0.0
    %1584 = vmatpush1.msra.mxu0 %v1558
    %1585 = vmatprep.subr.mxu0 0.0
    %1586 = vmatpush1.msra.mxu0 %v1559
    %1587 = vmatprep.subr.mxu0 0.0
    %1588 = vmatpush1.msra.mxu0 0.0
    %1589 = vmatprep.subr.mxu0 0.0
    %1590 = vmatpush1.msra.mxu0 0.0
    %1591 = vmatprep.subr.mxu0 0.0
    %1592 = vmatpush1.msra.mxu0 0.0
    %1593 = vmatprep.subr.mxu0 0.0
    %1594 = vmatpush1.msra.mxu0 0.0
    %1595 = vmatprep.subr.mxu0 0.0
    %1596 = vmatpush1.msra.mxu0 0.0
    %1597 = vmatprep.subr.mxu0 0.0
    %1598 = vmatpush1.msra.mxu0 0.0
    %1599 = vmatprep.subr.mxu0 0.0
    %1600 = vmatpush1.msra.mxu0 0.0
    %1601 = vmatprep.subr.mxu0 0.0
    %1602 = vmatpush1.msra.mxu0 0.0
    %1603 = vmatprep.subr.mxu0 0.0
    %1604 = vmatpush1.msra.mxu0 0.0
    %1605 = vmatprep.subr.mxu0 0.0
    %1606 = vmatpush1.msra.mxu0 0.0
    %1607 = vmatprep.subr.mxu0 0.0
    %1608 = vmatpush1.msra.mxu0 0.0
    %1609 = vmatprep.subr.mxu0 0.0
    %1610 = vmatpush1.msra.mxu0 0.0
    %1611 = vmatprep.subr.mxu0 0.0
    %1612 = vmatpush1.msra.mxu0 0.0
    %1613 = vmatprep.subr.mxu0 0.0
    %1614 = vmatpush1.msra.mxu0 0.0
    %1615 = vmatprep.subr.mxu0 0.0
    %1616 = vmatpush1.msra.mxu0 0.0
    %1617 = vmatprep.subr.mxu0 0.0
    %1618 = vmatpush1.msra.mxu0 0.0
    %1619 = vmatprep.subr.mxu0 0.0
    %1620 = vmatpush1.msra.mxu0 0.0
    %1621 = vmatprep.subr.mxu0 0.0
    %1622 = vmatpush1.msra.mxu0 0.0
    %1623 = vmatprep.subr.mxu0 0.0
    %1624 = vmatpush1.msra.mxu0 0.0
    %1625 = vmatprep.subr.mxu0 0.0
    %1626 = vmatpush1.msra.mxu0 0.0
    %1627 = vmatprep.subr.mxu0 0.0
    %1628 = vmatpush1.msra.mxu0 0.0
    %1629 = vmatprep.subr.mxu0 0.0
    %1630 = vmatpush1.msra.mxu0 0.0
    %1631 = vmatprep.subr.mxu0 0.0
    %1632 = vmatpush1.msra.mxu0 0.0
    %1633 = vmatprep.subr.mxu0 0.0
    %1634 = vmatpush1.msra.mxu0 0.0
    %1635 = vmatprep.mubr.f32.mxu0 0.0
    %1636 = vmatmul.mubr.f32.gmra.mrb[0].mxu0 %v1566
    %v1637 = vpop.f32.mrb[0].mxu0
    %v1638 = vadd.f32 %v1564, %v1637
    %v1639 = vpop.f32.mrb[0].mxu0
    %1640 = vmatprep.mubr.f32.mxu0 0.0
    %1641 = vmatmul.mubr.f32.gmra.mrb[0].mxu0 %v1569
    %v1642 = vpop.f32.mrb[0].mxu0
    %v1643 = vadd.f32 %v1564, %v1642
    %v1644 = vpop.f32.mrb[0].mxu0
    %1645 = vdwg.mxu0
    %v1646 = vmul.f32 %v1638, 0.5
    %v1647 = vmul.f32 %v1643, 0.5
    %v1648 = vmul.f32 %v1638, 0.044715
    %v1649 = vmul.f32 %v1643, 0.044715
    %v1650 = vmul.f32 %v1648, %v1638
    %v1651 = vmul.f32 %v1649, %v1643
    %v1652 = vmul.f32 %v1650, %v1638
    %v1653 = vmul.f32 %v1651, %v1643
    %v1654 = vadd.f32 %v1638, %v1652
    %v1655 = vadd.f32 %v1643, %v1653
    %v1656 = vmul.f32 %v1654, 0.7978846
    %v1657 = vmul.f32 %v1655, 0.7978846
    %v1658 = vtanh.pop %v1656
    %v1659 = vtanh.pop %v1657
    %v1660 = vadd.f32 %v1658, 1.0
    %v1661 = vadd.f32 %v1659, 1.0
    %v1662 = vmul.f32 %v1646, %v1660
    %v1663 = vmul.f32 %v1647, %v1661
    %v1664 = vld [vmem:[%s6] sm:$0xff]
    %v1665 = vld [vmem:[%s6 + $0x8] sm:$0xff]
    %v1666 = vld [vmem:[%s6 + $0x10] sm:$0xff]
    %v1667 = vld [vmem:[%s6 + $0x18] sm:$0xff]
    %v1668 = vld [vmem:[%s6 + $0x20] sm:$0xff]
    %v1669 = vld [vmem:[%s6 + $0x28] sm:$0xff]
    %v1670 = vld [vmem:[%s6 + $0x30] sm:$0xff]
    %v1671 = vld [vmem:[%s6 + $0x38] sm:$0xff]
    %v1672 = vld [vmem:[%s6 + $0x40] sm:$0xff]
    %v1673 = vld [vmem:[%s6 + $0x48] sm:$0xff]
    %v1674 = vld [vmem:[%s6 + $0x50] sm:$0xff]
    %v1675 = vld [vmem:[%s6 + $0x58] sm:$0xff]
    %v1676 = vld [vmem:[%s6 + $0x60] sm:$0xff]
    %v1677 = vld [vmem:[%s6 + $0x68] sm:$0xff]
    %v1678 = vld [vmem:[%s6 + $0x70] sm:$0xff]
    %v1679 = vld [vmem:[%s6 + $0x78] sm:$0xff]
    %v1680 = vld [vmem:[%s8 + $0x7] sm:$0x1]
    %v1681 = vlaneseq
    %v1682 = vshrl.u32 %v1681, 7
    %v1683 = vsub.s32 0, %v1682
    %v1684 = vrot.slane %v1680, %v1683
    %1685 = vmatprep.subr.mxu0 0.0
    %1686 = vmatpush1.msra.mxu0 %v1664
    %1687 = vmatprep.subr.mxu0 0.0
    %1688 = vmatpush1.msra.mxu0 %v1665
    %1689 = vmatprep.subr.mxu0 0.0
    %1690 = vmatpush1.msra.mxu0 %v1666
    %1691 = vmatprep.subr.mxu0 0.0
    %1692 = vmatpush1.msra.mxu0 %v1667
    %1693 = vmatprep.subr.mxu0 0.0
    %1694 = vmatpush1.msra.mxu0 %v1668
    %1695 = vmatprep.subr.mxu0 0.0
    %1696 = vmatpush1.msra.mxu0 %v1669
    %1697 = vmatprep.subr.mxu0 0.0
    %1698 = vmatpush1.msra.mxu0 %v1670
    %1699 = vmatprep.subr.mxu0 0.0
    %1700 = vmatpush1.msra.mxu0 %v1671
    %1701 = vmatprep.subr.mxu0 0.0
    %1702 = vmatpush1.msra.mxu0 %v1672
    %1703 = vmatprep.subr.mxu0 0.0
    %1704 = vmatpush1.msra.mxu0 %v1673
    %1705 = vmatprep.subr.mxu0 0.0
    %1706 = vmatpush1.msra.mxu0 %v1674
    %1707 = vmatprep.subr.mxu0 0.0
    %1708 = vmatpush1.msra.mxu0 %v1675
    %1709 = vmatprep.subr.mxu0 0.0
    %1710 = vmatpush1.msra.mxu0 %v1676
    %1711 = vmatprep.subr.mxu0 0.0
    %1712 = vmatpush1.msra.mxu0 %v1677
    %1713 = vmatprep.subr.mxu0 0.0
    %1714 = vmatpush1.msra.mxu0 %v1678
    %1715 = vmatprep.subr.mxu0 0.0
    %1716 = vmatpush1.msra.mxu0 %v1679
    %1717 = vmatprep.subr.mxu0 0.0
    %1718 = vmatpush1.msra.mxu0 0.0
    %1719 = vmatprep.subr.mxu0 0.0
    %1720 = vmatpush1.msra.mxu0 0.0
    %1721 = vmatprep.subr.mxu0 0.0
    %1722 = vmatpush1.msra.mxu0 0.0
    %1723 = vmatprep.subr.mxu0 0.0
    %1724 = vmatpush1.msra.mxu0 0.0
    %1725 = vmatprep.subr.mxu0 0.0
    %1726 = vmatpush1.msra.mxu0 0.0
    %1727 = vmatprep.subr.mxu0 0.0
    %1728 = vmatpush1.msra.mxu0 0.0
    %1729 = vmatprep.subr.mxu0 0.0
    %1730 = vmatpush1.msra.mxu0 0.0
    %1731 = vmatprep.subr.mxu0 0.0
    %1732 = vmatpush1.msra.mxu0 0.0
    %1733 = vmatprep.subr.mxu0 0.0
    %1734 = vmatpush1.msra.mxu0 0.0
    %1735 = vmatprep.subr.mxu0 0.0
    %1736 = vmatpush1.msra.mxu0 0.0
    %1737 = vmatprep.subr.mxu0 0.0
    %1738 = vmatpush1.msra.mxu0 0.0
    %1739 = vmatprep.subr.mxu0 0.0
    %1740 = vmatpush1.msra.mxu0 0.0
    %1741 = vmatprep.subr.mxu0 0.0
    %1742 = vmatpush1.msra.mxu0 0.0
    %1743 = vmatprep.subr.mxu0 0.0
    %1744 = vmatpush1.msra.mxu0 0.0
    %1745 = vmatprep.subr.mxu0 0.0
    %1746 = vmatpush1.msra.mxu0 0.0
    %1747 = vmatprep.subr.mxu0 0.0
    %1748 = vmatpush1.msra.mxu0 0.0
    %1749 = vmatprep.mubr.f32.mxu0 0.0
    %1750 = vmatmul.mubr.f32.gmra.mrb[0].mxu0 %v1662
    %v1751 = vpop.f32.mrb[0].mxu0
    %v1752 = vadd.f32 %v1684, %v1751
    %v1753 = vpop.f32.mrb[0].mxu0
    %1754 = vmatprep.mubr.f32.mxu0 0.0
    %1755 = vmatmul.mubr.f32.gmra.mrb[0].mxu0 %v1663
    %v1756 = vpop.f32.mrb[0].mxu0
    %v1757 = vadd.f32 %v1684, %v1756
    %v1758 = vpop.f32.mrb[0].mxu0
    %1759 = vdwg.mxu0
    %v1760 = vadd.f32 %v1752, %v1550
    %v1761 = vadd.f32 %v1757, %v1551
    %v1762 = vld [vmem:[%s8 + $0x8] sm:$0x1]
    %v1763 = vld [vmem:[%s8 + $0x9] sm:$0x1]
    %v1764 = vsel %vm92, %v1760, 0.0
    %1765 = vadd.xlane.f32.xlu0 %v1764
    %v1766 = vpop.xlane.xlu0 %1765
    %v1767 = vsel %vm92, %v1761, 0.0
    %1768 = vadd.xlane.f32.xlu0 %v1767
    %v1769 = vpop.xlane.xlu0 %1768
    %v1770 = vmul.f32 %v1766, %v99
    %v1771 = vmul.f32 %v1769, %v99
    %v1772 = vsub.f32 %v1760, %v1770
    %v1773 = vsub.f32 %v1761, %v1771
    %v1774 = vmul.f32 %v1772, %v1772
    %v1775 = vmul.f32 %v1773, %v1773
    %v1776 = vsel %vm92, %v1774, 0.0
    %1777 = vadd.xlane.f32.xlu0 %v1776
    %v1778 = vpop.xlane.xlu0 %1777
    %v1779 = vsel %vm92, %v1775, 0.0
    %1780 = vadd.xlane.f32.xlu0 %v1779
    %v1781 = vpop.xlane.xlu0 %1780
    %v1782 = vmul.f32 %v1778, %v99
    %v1783 = vmul.f32 %v1781, %v99
    %v1784 = vadd.f32 %v1782, 1e-12
    %v1785 = vadd.f32 %v1783, 1e-12
    %v1786 = vrsqrt.pop %v1784
    %v1787 = vrsqrt.pop %v1785
    %v1788 = vmul.f32 %v1772, %v1786
    %v1789 = vmul.f32 %v1773, %v1787
    %v1790 = vlaneseq
    %v1791 = vshrl.u32 %v1790, 7
    %v1792 = vsub.s32 0, %v1791
    %v1793 = vrot.slane %v1762, %v1792
    %v1794 = vmul.f32 %v1788, %v1793
    %v1795 = vmul.f32 %v1789, %v1793
    %v1796 = vlaneseq
    %v1797 = vshrl.u32 %v1796, 7
    %v1798 = vsub.s32 0, %v1797
    %v1799 = vrot.slane %v1763, %v1798
    %v1800 = vadd.f32 %v1794, %v1799
    %v1801 = vadd.f32 %v1795, %v1799
    %v1802 = vld [vmem:[%s8 + $0xa] sm:$0x1]
    %s1803 = scalar_lea.vmem %s2, 128
    %v1804 = vld [vmem:[%s1803] sm:$0xff]
    %v1805 = vld [vmem:[%s1803 + $0x8] sm:$0xff]
    %v1806 = vld [vmem:[%s1803 + $0x10] sm:$0xff]
    %v1807 = vld [vmem:[%s1803 + $0x18] sm:$0xff]
    %v1808 = vld [vmem:[%s1803 + $0x20] sm:$0xff]
    %v1809 = vld [vmem:[%s1803 + $0x28] sm:$0xff]
    %v1810 = vld [vmem:[%s1803 + $0x30] sm:$0xff]
    %v1811 = vld [vmem:[%s1803 + $0x38] sm:$0xff]
    %s1812 = scalar_lea.vmem %s3, 2
    %v1813 = vld [vmem:[%s1812] sm:$0x1]
    %v1815 = vlaneseq
    %v1816 = vshrl.u32 %v1815, 7
    %v1817 = vsub.s32 0, %v1816
    %v1818 = vrot.slane %v1813, %v1817
    %v1821 = vsel %vm92, %v1800, 0
    %v1824 = vsel %vm92, %v1801, 0
    %1826 = vmatprep.subr.mxu0 0.0
    %1827 = vmatpush1.msra.mxu0 %v1804
    %1828 = vmatprep.subr.mxu0 0.0
    %1829 = vmatpush1.msra.mxu0 %v1805
    %1830 = vmatprep.subr.mxu0 0.0
    %1831 = vmatpush1.msra.mxu0 %v1806
    %1832 = vmatprep.subr.mxu0 0.0
    %1833 = vmatpush1.msra.mxu0 %v1807
    %1834 = vmatprep.subr.mxu0 0.0
    %1835 = vmatpush1.msra.mxu0 %v1808
    %1836 = vmatprep.subr.mxu0 0.0
    %1837 = vmatpush1.msra.mxu0 %v1809
    %1838 = vmatprep.subr.mxu0 0.0
    %1839 = vmatpush1.msra.mxu0 %v1810
    %1840 = vmatprep.subr.mxu0 0.0
    %1841 = vmatpush1.msra.mxu0 %v1811
    %1842 = vmatprep.subr.mxu0 0.0
    %1843 = vmatpush1.msra.mxu0 0.0
    %1844 = vmatprep.subr.mxu0 0.0
    %1845 = vmatpush1.msra.mxu0 0.0
    %1846 = vmatprep.subr.mxu0 0.0
    %1847 = vmatpush1.msra.mxu0 0.0
    %1848 = vmatprep.subr.mxu0 0.0
    %1849 = vmatpush1.msra.mxu0 0.0
    %1850 = vmatprep.subr.mxu0 0.0
    %1851 = vmatpush1.msra.mxu0 0.0
    %1852 = vmatprep.subr.mxu0 0.0
    %1853 = vmatpush1.msra.mxu0 0.0
    %1854 = vmatprep.subr.mxu0 0.0
    %1855 = vmatpush1.msra.mxu0 0.0
    %1856 = vmatprep.subr.mxu0 0.0
    %1857 = vmatpush1.msra.mxu0 0.0
    %1858 = vmatprep.subr.mxu0 0.0
    %1859 = vmatpush1.msra.mxu0 0.0
    %1860 = vmatprep.subr.mxu0 0.0
    %1861 = vmatpush1.msra.mxu0 0.0
    %1862 = vmatprep.subr.mxu0 0.0
    %1863 = vmatpush1.msra.mxu0 0.0
    %1864 = vmatprep.subr.mxu0 0.0
    %1865 = vmatpush1.msra.mxu0 0.0
    %1866 = vmatprep.subr.mxu0 0.0
    %1867 = vmatpush1.msra.mxu0 0.0
    %1868 = vmatprep.subr.mxu0 0.0
    %1869 = vmatpush1.msra.mxu0 0.0
    %1870 = vmatprep.subr.mxu0 0.0
    %1871 = vmatpush1.msra.mxu0 0.0
    %1872 = vmatprep.subr.mxu0 0.0
    %1873 = vmatpush1.msra.mxu0 0.0
    %1874 = vmatprep.subr.mxu0 0.0
    %1875 = vmatpush1.msra.mxu0 0.0
    %1876 = vmatprep.subr.mxu0 0.0
    %1877 = vmatpush1.msra.mxu0 0.0
    %1878 = vmatprep.subr.mxu0 0.0
    %1879 = vmatpush1.msra.mxu0 0.0
    %1880 = vmatprep.subr.mxu0 0.0
    %1881 = vmatpush1.msra.mxu0 0.0
    %1882 = vmatprep.subr.mxu0 0.0
    %1883 = vmatpush1.msra.mxu0 0.0
    %1884 = vmatprep.subr.mxu0 0.0
    %1885 = vmatpush1.msra.mxu0 0.0
    %1886 = vmatprep.subr.mxu0 0.0
    %1887 = vmatpush1.msra.mxu0 0.0
    %1888 = vmatprep.subr.mxu0 0.0
    %1889 = vmatpush1.msra.mxu0 0.0
    %1890 = vmatprep.mubr.f32.mxu0 0.0
    %1891 = vmatmul.mubr.f32.gmra.mrb[0].mxu0 %v1821
    %v1892 = vpop.f32.mrb[0].mxu0
    %v1893 = vadd.f32 %v1818, %v1892
    %v1894 = vpop.f32.mrb[0].mxu0
    %1895 = vmatprep.mubr.f32.mxu0 0.0
    %1896 = vmatmul.mubr.f32.gmra.mrb[0].mxu0 %v1824
    %v1897 = vpop.f32.mrb[0].mxu0
    %v1898 = vadd.f32 %v1818, %v1897
    %v1899 = vpop.f32.mrb[0].mxu0
    %1900 = vdwg.mxu0
    %s1901 = scalar_lea.vmem %s2, 384
    %v1902 = vld [vmem:[%s1901] sm:$0xff]
    %v1903 = vld [vmem:[%s1901 + $0x8] sm:$0xff]
    %v1904 = vld [vmem:[%s1901 + $0x10] sm:$0xff]
    %v1905 = vld [vmem:[%s1901 + $0x18] sm:$0xff]
    %v1906 = vld [vmem:[%s1901 + $0x20] sm:$0xff]
    %v1907 = vld [vmem:[%s1901 + $0x28] sm:$0xff]
    %v1908 = vld [vmem:[%s1901 + $0x30] sm:$0xff]
    %v1909 = vld [vmem:[%s1901 + $0x38] sm:$0xff]
    %s1910 = scalar_lea.vmem %s3, 6
    %v1911 = vld [vmem:[%s1910] sm:$0x1]
    %v1913 = vlaneseq
    %v1914 = vshrl.u32 %v1913, 7
    %v1915 = vsub.s32 0, %v1914
    %v1916 = vrot.slane %v1911, %v1915
    %1918 = vmatprep.subr.mxu0 0.0
    %1919 = vmatpush1.msra.mxu0 %v1902
    %1920 = vmatprep.subr.mxu0 0.0
    %1921 = vmatpush1.msra.mxu0 %v1903
    %1922 = vmatprep.subr.mxu0 0.0
    %1923 = vmatpush1.msra.mxu0 %v1904
    %1924 = vmatprep.subr.mxu0 0.0
    %1925 = vmatpush1.msra.mxu0 %v1905
    %1926 = vmatprep.subr.mxu0 0.0
    %1927 = vmatpush1.msra.mxu0 %v1906
    %1928 = vmatprep.subr.mxu0 0.0
    %1929 = vmatpush1.msra.mxu0 %v1907
    %1930 = vmatprep.subr.mxu0 0.0
    %1931 = vmatpush1.msra.mxu0 %v1908
    %1932 = vmatprep.subr.mxu0 0.0
    %1933 = vmatpush1.msra.mxu0 %v1909
    %1934 = vmatprep.subr.mxu0 0.0
    %1935 = vmatpush1.msra.mxu0 0.0
    %1936 = vmatprep.subr.mxu0 0.0
    %1937 = vmatpush1.msra.mxu0 0.0
    %1938 = vmatprep.subr.mxu0 0.0
    %1939 = vmatpush1.msra.mxu0 0.0
    %1940 = vmatprep.subr.mxu0 0.0
    %1941 = vmatpush1.msra.mxu0 0.0
    %1942 = vmatprep.subr.mxu0 0.0
    %1943 = vmatpush1.msra.mxu0 0.0
    %1944 = vmatprep.subr.mxu0 0.0
    %1945 = vmatpush1.msra.mxu0 0.0
    %1946 = vmatprep.subr.mxu0 0.0
    %1947 = vmatpush1.msra.mxu0 0.0
    %1948 = vmatprep.subr.mxu0 0.0
    %1949 = vmatpush1.msra.mxu0 0.0
    %1950 = vmatprep.subr.mxu0 0.0
    %1951 = vmatpush1.msra.mxu0 0.0
    %1952 = vmatprep.subr.mxu0 0.0
    %1953 = vmatpush1.msra.mxu0 0.0
    %1954 = vmatprep.subr.mxu0 0.0
    %1955 = vmatpush1.msra.mxu0 0.0
    %1956 = vmatprep.subr.mxu0 0.0
    %1957 = vmatpush1.msra.mxu0 0.0
    %1958 = vmatprep.subr.mxu0 0.0
    %1959 = vmatpush1.msra.mxu0 0.0
    %1960 = vmatprep.subr.mxu0 0.0
    %1961 = vmatpush1.msra.mxu0 0.0
    %1962 = vmatprep.subr.mxu0 0.0
    %1963 = vmatpush1.msra.mxu0 0.0
    %1964 = vmatprep.subr.mxu0 0.0
    %1965 = vmatpush1.msra.mxu0 0.0
    %1966 = vmatprep.subr.mxu0 0.0
    %1967 = vmatpush1.msra.mxu0 0.0
    %1968 = vmatprep.subr.mxu0 0.0
    %1969 = vmatpush1.msra.mxu0 0.0
    %1970 = vmatprep.subr.mxu0 0.0
    %1971 = vmatpush1.msra.mxu0 0.0
    %1972 = vmatprep.subr.mxu0 0.0
    %1973 = vmatpush1.msra.mxu0 0.0
    %1974 = vmatprep.subr.mxu0 0.0
    %1975 = vmatpush1.msra.mxu0 0.0
    %1976 = vmatprep.subr.mxu0 0.0
    %1977 = vmatpush1.msra.mxu0 0.0
    %1978 = vmatprep.subr.mxu0 0.0
    %1979 = vmatpush1.msra.mxu0 0.0
    %1980 = vmatprep.subr.mxu0 0.0
    %1981 = vmatpush1.msra.mxu0 0.0
    %1982 = vmatprep.mubr.f32.mxu0 0.0
    %1983 = vmatmul.mubr.f32.gmra.mrb[0].mxu0 %v1821
    %v1984 = vpop.f32.mrb[0].mxu0
    %v1985 = vadd.f32 %v1916, %v1984
    %v1986 = vpop.f32.mrb[0].mxu0
    %1987 = vmatprep.mubr.f32.mxu0 0.0
    %1988 = vmatmul.mubr.f32.gmra.mrb[0].mxu0 %v1824
    %v1989 = vpop.f32.mrb[0].mxu0
    %v1990 = vadd.f32 %v1916, %v1989
    %v1991 = vpop.f32.mrb[0].mxu0
    %1992 = vdwg.mxu0
    %s1993 = scalar_lea.vmem %s2, 640
    %v1994 = vld [vmem:[%s1993] sm:$0xff]
    %v1995 = vld [vmem:[%s1993 + $0x8] sm:$0xff]
    %v1996 = vld [vmem:[%s1993 + $0x10] sm:$0xff]
    %v1997 = vld [vmem:[%s1993 + $0x18] sm:$0xff]
    %v1998 = vld [vmem:[%s1993 + $0x20] sm:$0xff]
    %v1999 = vld [vmem:[%s1993 + $0x28] sm:$0xff]
    %v2000 = vld [vmem:[%s1993 + $0x30] sm:$0xff]
    %v2001 = vld [vmem:[%s1993 + $0x38] sm:$0xff]
    %s2002 = scalar_lea.vmem %s3, 10
    %v2003 = vld [vmem:[%s2002] sm:$0x1]
    %v2005 = vlaneseq
    %v2006 = vshrl.u32 %v2005, 7
    %v2007 = vsub.s32 0, %v2006
    %v2008 = vrot.slane %v2003, %v2007
    %2010 = vmatprep.subr.mxu0 0.0
    %2011 = vmatpush1.msra.mxu0 %v1994
    %2012 = vmatprep.subr.mxu0 0.0
    %2013 = vmatpush1.msra.mxu0 %v1995
    %2014 = vmatprep.subr.mxu0 0.0
    %2015 = vmatpush1.msra.mxu0 %v1996
    %2016 = vmatprep.subr.mxu0 0.0
    %2017 = vmatpush1.msra.mxu0 %v1997
    %2018 = vmatprep.subr.mxu0 0.0
    %2019 = vmatpush1.msra.mxu0 %v1998
    %2020 = vmatprep.subr.mxu0 0.0
    %2021 = vmatpush1.msra.mxu0 %v1999
    %2022 = vmatprep.subr.mxu0 0.0
    %2023 = vmatpush1.msra.mxu0 %v2000
    %2024 = vmatprep.subr.mxu0 0.0
    %2025 = vmatpush1.msra.mxu0 %v2001
    %2026 = vmatprep.subr.mxu0 0.0
    %2027 = vmatpush1.msra.mxu0 0.0
    %2028 = vmatprep.subr.mxu0 0.0
    %2029 = vmatpush1.msra.mxu0 0.0
    %2030 = vmatprep.subr.mxu0 0.0
    %2031 = vmatpush1.msra.mxu0 0.0
    %2032 = vmatprep.subr.mxu0 0.0
    %2033 = vmatpush1.msra.mxu0 0.0
    %2034 = vmatprep.subr.mxu0 0.0
    %2035 = vmatpush1.msra.mxu0 0.0
    %2036 = vmatprep.subr.mxu0 0.0
    %2037 = vmatpush1.msra.mxu0 0.0
    %2038 = vmatprep.subr.mxu0 0.0
    %2039 = vmatpush1.msra.mxu0 0.0
    %2040 = vmatprep.subr.mxu0 0.0
    %2041 = vmatpush1.msra.mxu0 0.0
    %2042 = vmatprep.subr.mxu0 0.0
    %2043 = vmatpush1.msra.mxu0 0.0
    %2044 = vmatprep.subr.mxu0 0.0
    %2045 = vmatpush1.msra.mxu0 0.0
    %2046 = vmatprep.subr.mxu0 0.0
    %2047 = vmatpush1.msra.mxu0 0.0
    %2048 = vmatprep.subr.mxu0 0.0
    %2049 = vmatpush1.msra.mxu0 0.0
    %2050 = vmatprep.subr.mxu0 0.0
    %2051 = vmatpush1.msra.mxu0 0.0
    %2052 = vmatprep.subr.mxu0 0.0
    %2053 = vmatpush1.msra.mxu0 0.0
    %2054 = vmatprep.subr.mxu0 0.0
    %2055 = vmatpush1.msra.mxu0 0.0
    %2056 = vmatprep.subr.mxu0 0.0
    %2057 = vmatpush1.msra.mxu0 0.0
    %2058 = vmatprep.subr.mxu0 0.0
    %2059 = vmatpush1.msra.mxu0 0.0
    %2060 = vmatprep.subr.mxu0 0.0
    %2061 = vmatpush1.msra.mxu0 0.0
    %2062 = vmatprep.subr.mxu0 0.0
    %2063 = vmatpush1.msra.mxu0 0.0
    %2064 = vmatprep.subr.mxu0 0.0
    %2065 = vmatpush1.msra.mxu0 0.0
    %2066 = vmatprep.subr.mxu0 0.0
    %2067 = vmatpush1.msra.mxu0 0.0
    %2068 = vmatprep.subr.mxu0 0.0
    %2069 = vmatpush1.msra.mxu0 0.0
    %2070 = vmatprep.subr.mxu0 0.0
    %2071 = vmatpush1.msra.mxu0 0.0
    %2072 = vmatprep.subr.mxu0 0.0
    %2073 = vmatpush1.msra.mxu0 0.0
    %2074 = vmatprep.mubr.f32.mxu0 0.0
    %2075 = vmatmul.mubr.f32.gmra.mrb[0].mxu0 %v1821
    %v2076 = vpop.f32.mrb[0].mxu0
    %v2077 = vadd.f32 %v2008, %v2076
    %v2078 = vpop.f32.mrb[0].mxu0
    %2079 = vmatprep.mubr.f32.mxu0 0.0
    %2080 = vmatmul.mubr.f32.gmra.mrb[0].mxu0 %v1824
    %v2081 = vpop.f32.mrb[0].mxu0
    %v2082 = vadd.f32 %v2008, %v2081
    %v2083 = vpop.f32.mrb[0].mxu0
    %2084 = vdwg.mxu0
    %v2086 = vsel %vm413, %v1893, 0
    %v2089 = vsel %vm413, %v1985, 0
    %2091 = vmatprep.subr.mxu0 0.0
    %2092 = vmatpush1.xpose.msra.mxu0 %v2089
    %2093 = vmatprep.subr.mxu0 0.0
    %2094 = vmatpush1.xpose.msra.mxu0 0.0
    %2095 = vmatprep.subr.mxu0 0.0
    %2096 = vmatpush1.xpose.msra.mxu0 0.0
    %2097 = vmatprep.subr.mxu0 0.0
    %2098 = vmatpush1.xpose.msra.mxu0 0.0
    %2099 = vmatprep.subr.mxu0 0.0
    %2100 = vmatpush1.xpose.msra.mxu0 0.0
    %2101 = vmatprep.subr.mxu0 0.0
    %2102 = vmatpush1.xpose.msra.mxu0 0.0
    %2103 = vmatprep.subr.mxu0 0.0
    %2104 = vmatpush1.xpose.msra.mxu0 0.0
    %2105 = vmatprep.subr.mxu0 0.0
    %2106 = vmatpush1.xpose.msra.mxu0 0.0
    %2107 = vmatprep.subr.mxu0 0.0
    %2108 = vmatpush1.xpose.msra.mxu0 0.0
    %2109 = vmatprep.subr.mxu0 0.0
    %2110 = vmatpush1.xpose.msra.mxu0 0.0
    %2111 = vmatprep.subr.mxu0 0.0
    %2112 = vmatpush1.xpose.msra.mxu0 0.0
    %2113 = vmatprep.subr.mxu0 0.0
    %2114 = vmatpush1.xpose.msra.mxu0 0.0
    %2115 = vmatprep.subr.mxu0 0.0
    %2116 = vmatpush1.xpose.msra.mxu0 0.0
    %2117 = vmatprep.subr.mxu0 0.0
    %2118 = vmatpush1.xpose.msra.mxu0 0.0
    %2119 = vmatprep.subr.mxu0 0.0
    %2120 = vmatpush1.xpose.msra.mxu0 0.0
    %2121 = vmatprep.subr.mxu0 0.0
    %2122 = vmatpush1.xpose.msra.mxu0 0.0
    %2123 = vmatprep.subr.mxu0 0.0
    %2124 = vmatpush1.xpose.msra.mxu0 0.0
    %2125 = vmatprep.subr.mxu0 0.0
    %2126 = vmatpush1.xpose.msra.mxu0 0.0
    %2127 = vmatprep.subr.mxu0 0.0
    %2128 = vmatpush1.xpose.msra.mxu0 0.0
    %2129 = vmatprep.subr.mxu0 0.0
    %2130 = vmatpush1.xpose.msra.mxu0 0.0
    %2131 = vmatprep.subr.mxu0 0.0
    %2132 = vmatpush1.xpose.msra.mxu0 0.0
    %2133 = vmatprep.subr.mxu0 0.0
    %2134 = vmatpush1.xpose.msra.mxu0 0.0
    %2135 = vmatprep.subr.mxu0 0.0
    %2136 = vmatpush1.xpose.msra.mxu0 0.0
    %2137 = vmatprep.subr.mxu0 0.0
    %2138 = vmatpush1.xpose.msra.mxu0 0.0
    %2139 = vmatprep.subr.mxu0 0.0
    %2140 = vmatpush1.xpose.msra.mxu0 0.0
    %2141 = vmatprep.subr.mxu0 0.0
    %2142 = vmatpush1.xpose.msra.mxu0 0.0
    %2143 = vmatprep.subr.mxu0 0.0
    %2144 = vmatpush1.xpose.msra.mxu0 0.0
    %2145 = vmatprep.subr.mxu0 0.0
    %2146 = vmatpush1.xpose.msra.mxu0 0.0
    %2147 = vmatprep.subr.mxu0 0.0
    %2148 = vmatpush1.xpose.msra.mxu0 0.0
    %2149 = vmatprep.subr.mxu0 0.0
    %2150 = vmatpush1.xpose.msra.mxu0 0.0
    %2151 = vmatprep.subr.mxu0 0.0
    %2152 = vmatpush1.xpose.msra.mxu0 0.0
    %2153 = vmatprep.subr.mxu0 0.0
    %2154 = vmatpush1.xpose.msra.mxu0 0.0
    %2155 = vmatprep.mubr.f32.mxu0 0.0
    %2156 = vmatmul.mubr.f32.gmra.mrb[0].mxu0 %v2086
    %v2157 = vpop.f32.mrb[0].mxu0
    %v2158 = vadd.f32 0.0, %v2157
    %v2159 = vpop.f32.mrb[0].mxu0
    %2160 = vdwg.mxu0
    %v2162 = vsel %vm413, %v1898, 0
    %v2165 = vsel %vm413, %v1990, 0
    %2167 = vmatprep.subr.mxu0 0.0
    %2168 = vmatpush1.xpose.msra.mxu0 %v2165
    %2169 = vmatprep.subr.mxu0 0.0
    %2170 = vmatpush1.xpose.msra.mxu0 0.0
    %2171 = vmatprep.subr.mxu0 0.0
    %2172 = vmatpush1.xpose.msra.mxu0 0.0
    %2173 = vmatprep.subr.mxu0 0.0
    %2174 = vmatpush1.xpose.msra.mxu0 0.0
    %2175 = vmatprep.subr.mxu0 0.0
    %2176 = vmatpush1.xpose.msra.mxu0 0.0
    %2177 = vmatprep.subr.mxu0 0.0
    %2178 = vmatpush1.xpose.msra.mxu0 0.0
    %2179 = vmatprep.subr.mxu0 0.0
    %2180 = vmatpush1.xpose.msra.mxu0 0.0
    %2181 = vmatprep.subr.mxu0 0.0
    %2182 = vmatpush1.xpose.msra.mxu0 0.0
    %2183 = vmatprep.subr.mxu0 0.0
    %2184 = vmatpush1.xpose.msra.mxu0 0.0
    %2185 = vmatprep.subr.mxu0 0.0
    %2186 = vmatpush1.xpose.msra.mxu0 0.0
    %2187 = vmatprep.subr.mxu0 0.0
    %2188 = vmatpush1.xpose.msra.mxu0 0.0
    %2189 = vmatprep.subr.mxu0 0.0
    %2190 = vmatpush1.xpose.msra.mxu0 0.0
    %2191 = vmatprep.subr.mxu0 0.0
    %2192 = vmatpush1.xpose.msra.mxu0 0.0
    %2193 = vmatprep.subr.mxu0 0.0
    %2194 = vmatpush1.xpose.msra.mxu0 0.0
    %2195 = vmatprep.subr.mxu0 0.0
    %2196 = vmatpush1.xpose.msra.mxu0 0.0
    %2197 = vmatprep.subr.mxu0 0.0
    %2198 = vmatpush1.xpose.msra.mxu0 0.0
    %2199 = vmatprep.subr.mxu0 0.0
    %2200 = vmatpush1.xpose.msra.mxu0 0.0
    %2201 = vmatprep.subr.mxu0 0.0
    %2202 = vmatpush1.xpose.msra.mxu0 0.0
    %2203 = vmatprep.subr.mxu0 0.0
    %2204 = vmatpush1.xpose.msra.mxu0 0.0
    %2205 = vmatprep.subr.mxu0 0.0
    %2206 = vmatpush1.xpose.msra.mxu0 0.0
    %2207 = vmatprep.subr.mxu0 0.0
    %2208 = vmatpush1.xpose.msra.mxu0 0.0
    %2209 = vmatprep.subr.mxu0 0.0
    %2210 = vmatpush1.xpose.msra.mxu0 0.0
    %2211 = vmatprep.subr.mxu0 0.0
    %2212 = vmatpush1.xpose.msra.mxu0 0.0
    %2213 = vmatprep.subr.mxu0 0.0
    %2214 = vmatpush1.xpose.msra.mxu0 0.0
    %2215 = vmatprep.subr.mxu0 0.0
    %2216 = vmatpush1.xpose.msra.mxu0 0.0
    %2217 = vmatprep.subr.mxu0 0.0
    %2218 = vmatpush1.xpose.msra.mxu0 0.0
    %2219 = vmatprep.subr.mxu0 0.0
    %2220 = vmatpush1.xpose.msra.mxu0 0.0
    %2221 = vmatprep.subr.mxu0 0.0
    %2222 = vmatpush1.xpose.msra.mxu0 0.0
    %2223 = vmatprep.subr.mxu0 0.0
    %2224 = vmatpush1.xpose.msra.mxu0 0.0
    %2225 = vmatprep.subr.mxu0 0.0
    %2226 = vmatpush1.xpose.msra.mxu0 0.0
    %2227 = vmatprep.subr.mxu0 0.0
    %2228 = vmatpush1.xpose.msra.mxu0 0.0
    %2229 = vmatprep.subr.mxu0 0.0
    %2230 = vmatpush1.xpose.msra.mxu0 0.0
    %2231 = vmatprep.mubr.f32.mxu0 0.0
    %2232 = vmatmul.mubr.f32.gmra.mrb[0].mxu0 %v2162
    %v2233 = vpop.f32.mrb[0].mxu0
    %v2234 = vadd.f32 0.0, %v2233
    %v2235 = vpop.f32.mrb[0].mxu0
    %2236 = vdwg.mxu0
    %v2237 = vsel %vm566, %v2158, -inf
    %2238 = vmax.xlane.f32.xlu0 %v2237
    %v2239 = vpop.xlane.xlu0 %2238
    %v2240 = vsel %vm566, %v2234, -inf
    %2241 = vmax.xlane.f32.xlu0 %v2240
    %v2242 = vpop.xlane.xlu0 %2241
    %v2243 = vsub.f32 %v2158, %v2239
    %v2244 = vsub.f32 %v2234, %v2242
    %v2245 = vmul.f32 %v2243, 1.442695
    %v2246 = vpow.pop %v2245
    %v2247 = vmul.f32 %v2244, 1.442695
    %v2248 = vpow.pop %v2247
    %v2249 = vsel %vm566, %v2246, 0.0
    %2250 = vadd.xlane.f32.xlu0 %v2249
    %v2251 = vpop.xlane.xlu0 %2250
    %v2252 = vsel %vm566, %v2248, 0.0
    %2253 = vadd.xlane.f32.xlu0 %v2252
    %v2254 = vpop.xlane.xlu0 %2253
    %v2255 = vrcp.pop %v2251
    %v2256 = vrcp.pop %v2254
    %v2257 = vmul.f32 %v2246, %v2255
    %v2258 = vmul.f32 %v2248, %v2256
    %v2260 = vsel %vm566, %v2257, 0
    %2262 = vmatprep.subr.mxu0 0.0
    %2263 = vmatpush1.msra.mxu0 %v2077
    %2264 = vmatprep.subr.mxu0 0.0
    %2265 = vmatpush1.msra.mxu0 0.0
    %2266 = vmatprep.subr.mxu0 0.0
    %2267 = vmatpush1.msra.mxu0 0.0
    %2268 = vmatprep.subr.mxu0 0.0
    %2269 = vmatpush1.msra.mxu0 0.0
    %2270 = vmatprep.subr.mxu0 0.0
    %2271 = vmatpush1.msra.mxu0 0.0
    %2272 = vmatprep.subr.mxu0 0.0
    %2273 = vmatpush1.msra.mxu0 0.0
    %2274 = vmatprep.subr.mxu0 0.0
    %2275 = vmatpush1.msra.mxu0 0.0
    %2276 = vmatprep.subr.mxu0 0.0
    %2277 = vmatpush1.msra.mxu0 0.0
    %2278 = vmatprep.subr.mxu0 0.0
    %2279 = vmatpush1.msra.mxu0 0.0
    %2280 = vmatprep.subr.mxu0 0.0
    %2281 = vmatpush1.msra.mxu0 0.0
    %2282 = vmatprep.subr.mxu0 0.0
    %2283 = vmatpush1.msra.mxu0 0.0
    %2284 = vmatprep.subr.mxu0 0.0
    %2285 = vmatpush1.msra.mxu0 0.0
    %2286 = vmatprep.subr.mxu0 0.0
    %2287 = vmatpush1.msra.mxu0 0.0
    %2288 = vmatprep.subr.mxu0 0.0
    %2289 = vmatpush1.msra.mxu0 0.0
    %2290 = vmatprep.subr.mxu0 0.0
    %2291 = vmatpush1.msra.mxu0 0.0
    %2292 = vmatprep.subr.mxu0 0.0
    %2293 = vmatpush1.msra.mxu0 0.0
    %2294 = vmatprep.subr.mxu0 0.0
    %2295 = vmatpush1.msra.mxu0 0.0
    %2296 = vmatprep.subr.mxu0 0.0
    %2297 = vmatpush1.msra.mxu0 0.0
    %2298 = vmatprep.subr.mxu0 0.0
    %2299 = vmatpush1.msra.mxu0 0.0
    %2300 = vmatprep.subr.mxu0 0.0
    %2301 = vmatpush1.msra.mxu0 0.0
    %2302 = vmatprep.subr.mxu0 0.0
    %2303 = vmatpush1.msra.mxu0 0.0
    %2304 = vmatprep.subr.mxu0 0.0
    %2305 = vmatpush1.msra.mxu0 0.0
    %2306 = vmatprep.subr.mxu0 0.0
    %2307 = vmatpush1.msra.mxu0 0.0
    %2308 = vmatprep.subr.mxu0 0.0
    %2309 = vmatpush1.msra.mxu0 0.0
    %2310 = vmatprep.subr.mxu0 0.0
    %2311 = vmatpush1.msra.mxu0 0.0
    %2312 = vmatprep.subr.mxu0 0.0
    %2313 = vmatpush1.msra.mxu0 0.0
    %2314 = vmatprep.subr.mxu0 0.0
    %2315 = vmatpush1.msra.mxu0 0.0
    %2316 = vmatprep.subr.mxu0 0.0
    %2317 = vmatpush1.msra.mxu0 0.0
    %2318 = vmatprep.subr.mxu0 0.0
    %2319 = vmatpush1.msra.mxu0 0.0
    %2320 = vmatprep.subr.mxu0 0.0
    %2321 = vmatpush1.msra.mxu0 0.0
    %2322 = vmatprep.subr.mxu0 0.0
    %2323 = vmatpush1.msra.mxu0 0.0
    %2324 = vmatprep.subr.mxu0 0.0
    %2325 = vmatpush1.msra.mxu0 0.0
    %2326 = vmatprep.mubr.f32.mxu0 0.0
    %2327 = vmatmul.mubr.f32.gmra.mrb[0].mxu0 %v2260
    %v2328 = vpop.f32.mrb[0].mxu0
    %v2329 = vadd.f32 0.0, %v2328
    %v2330 = vpop.f32.mrb[0].mxu0
    %2331 = vdwg.mxu0
    %v2333 = vsel %vm566, %v2258, 0
    %2335 = vmatprep.subr.mxu0 0.0
    %2336 = vmatpush1.msra.mxu0 %v2082
    %2337 = vmatprep.subr.mxu0 0.0
    %2338 = vmatpush1.msra.mxu0 0.0
    %2339 = vmatprep.subr.mxu0 0.0
    %2340 = vmatpush1.msra.mxu0 0.0
    %2341 = vmatprep.subr.mxu0 0.0
    %2342 = vmatpush1.msra.mxu0 0.0
    %2343 = vmatprep.subr.mxu0 0.0
    %2344 = vmatpush1.msra.mxu0 0.0
    %2345 = vmatprep.subr.mxu0 0.0
    %2346 = vmatpush1.msra.mxu0 0.0
    %2347 = vmatprep.subr.mxu0 0.0
    %2348 = vmatpush1.msra.mxu0 0.0
    %2349 = vmatprep.subr.mxu0 0.0
    %2350 = vmatpush1.msra.mxu0 0.0
    %2351 = vmatprep.subr.mxu0 0.0
    %2352 = vmatpush1.msra.mxu0 0.0
    %2353 = vmatprep.subr.mxu0 0.0
    %2354 = vmatpush1.msra.mxu0 0.0
    %2355 = vmatprep.subr.mxu0 0.0
    %2356 = vmatpush1.msra.mxu0 0.0
    %2357 = vmatprep.subr.mxu0 0.0
    %2358 = vmatpush1.msra.mxu0 0.0
    %2359 = vmatprep.subr.mxu0 0.0
    %2360 = vmatpush1.msra.mxu0 0.0
    %2361 = vmatprep.subr.mxu0 0.0
    %2362 = vmatpush1.msra.mxu0 0.0
    %2363 = vmatprep.subr.mxu0 0.0
    %2364 = vmatpush1.msra.mxu0 0.0
    %2365 = vmatprep.subr.mxu0 0.0
    %2366 = vmatpush1.msra.mxu0 0.0
    %2367 = vmatprep.subr.mxu0 0.0
    %2368 = vmatpush1.msra.mxu0 0.0
    %2369 = vmatprep.subr.mxu0 0.0
    %2370 = vmatpush1.msra.mxu0 0.0
    %2371 = vmatprep.subr.mxu0 0.0
    %2372 = vmatpush1.msra.mxu0 0.0
    %2373 = vmatprep.subr.mxu0 0.0
    %2374 = vmatpush1.msra.mxu0 0.0
    %2375 = vmatprep.subr.mxu0 0.0
    %2376 = vmatpush1.msra.mxu0 0.0
    %2377 = vmatprep.subr.mxu0 0.0
    %2378 = vmatpush1.msra.mxu0 0.0
    %2379 = vmatprep.subr.mxu0 0.0
    %2380 = vmatpush1.msra.mxu0 0.0
    %2381 = vmatprep.subr.mxu0 0.0
    %2382 = vmatpush1.msra.mxu0 0.0
    %2383 = vmatprep.subr.mxu0 0.0
    %2384 = vmatpush1.msra.mxu0 0.0
    %2385 = vmatprep.subr.mxu0 0.0
    %2386 = vmatpush1.msra.mxu0 0.0
    %2387 = vmatprep.subr.mxu0 0.0
    %2388 = vmatpush1.msra.mxu0 0.0
    %2389 = vmatprep.subr.mxu0 0.0
    %2390 = vmatpush1.msra.mxu0 0.0
    %2391 = vmatprep.subr.mxu0 0.0
    %2392 = vmatpush1.msra.mxu0 0.0
    %2393 = vmatprep.subr.mxu0 0.0
    %2394 = vmatpush1.msra.mxu0 0.0
    %2395 = vmatprep.subr.mxu0 0.0
    %2396 = vmatpush1.msra.mxu0 0.0
    %2397 = vmatprep.subr.mxu0 0.0
    %2398 = vmatpush1.msra.mxu0 0.0
    %2399 = vmatprep.mubr.f32.mxu0 0.0
    %2400 = vmatmul.mubr.f32.gmra.mrb[0].mxu0 %v2333
    %v2401 = vpop.f32.mrb[0].mxu0
    %v2402 = vadd.f32 0.0, %v2401
    %v2403 = vpop.f32.mrb[0].mxu0
    %2404 = vdwg.mxu0
    %s2405 = scalar_lea.vmem %s4, 64
    %v2406 = vld [vmem:[%s2405] sm:$0xff]
    %v2407 = vld [vmem:[%s2405 + $0x8] sm:$0xff]
    %v2408 = vld [vmem:[%s2405 + $0x10] sm:$0xff]
    %v2409 = vld [vmem:[%s2405 + $0x18] sm:$0xff]
    %v2411 = vsel %vm413, %v2329, 0
    %v2414 = vsel %vm413, %v2402, 0
    %2416 = vmatprep.subr.mxu0 0.0
    %2417 = vmatpush1.msra.mxu0 %v2406
    %2418 = vmatprep.subr.mxu0 0.0
    %2419 = vmatpush1.msra.mxu0 %v2407
    %2420 = vmatprep.subr.mxu0 0.0
    %2421 = vmatpush1.msra.mxu0 %v2408
    %2422 = vmatprep.subr.mxu0 0.0
    %2423 = vmatpush1.msra.mxu0 %v2409
    %2424 = vmatprep.subr.mxu0 0.0
    %2425 = vmatpush1.msra.mxu0 0.0
    %2426 = vmatprep.subr.mxu0 0.0
    %2427 = vmatpush1.msra.mxu0 0.0
    %2428 = vmatprep.subr.mxu0 0.0
    %2429 = vmatpush1.msra.mxu0 0.0
    %2430 = vmatprep.subr.mxu0 0.0
    %2431 = vmatpush1.msra.mxu0 0.0
    %2432 = vmatprep.subr.mxu0 0.0
    %2433 = vmatpush1.msra.mxu0 0.0
    %2434 = vmatprep.subr.mxu0 0.0
    %2435 = vmatpush1.msra.mxu0 0.0
    %2436 = vmatprep.subr.mxu0 0.0
    %2437 = vmatpush1.msra.mxu0 0.0
    %2438 = vmatprep.subr.mxu0 0.0
    %2439 = vmatpush1.msra.mxu0 0.0
    %2440 = vmatprep.subr.mxu0 0.0
    %2441 = vmatpush1.msra.mxu0 0.0
    %2442 = vmatprep.subr.mxu0 0.0
    %2443 = vmatpush1.msra.mxu0 0.0
    %2444 = vmatprep.subr.mxu0 0.0
    %2445 = vmatpush1.msra.mxu0 0.0
    %2446 = vmatprep.subr.mxu0 0.0
    %2447 = vmatpush1.msra.mxu0 0.0
    %2448 = vmatprep.subr.mxu0 0.0
    %2449 = vmatpush1.msra.mxu0 0.0
    %2450 = vmatprep.subr.mxu0 0.0
    %2451 = vmatpush1.msra.mxu0 0.0
    %2452 = vmatprep.subr.mxu0 0.0
    %2453 = vmatpush1.msra.mxu0 0.0
    %2454 = vmatprep.subr.mxu0 0.0
    %2455 = vmatpush1.msra.mxu0 0.0
    %2456 = vmatprep.subr.mxu0 0.0
    %2457 = vmatpush1.msra.mxu0 0.0
    %2458 = vmatprep.subr.mxu0 0.0
    %2459 = vmatpush1.msra.mxu0 0.0
    %2460 = vmatprep.subr.mxu0 0.0
    %2461 = vmatpush1.msra.mxu0 0.0
    %2462 = vmatprep.subr.mxu0 0.0
    %2463 = vmatpush1.msra.mxu0 0.0
    %2464 = vmatprep.subr.mxu0 0.0
    %2465 = vmatpush1.msra.mxu0 0.0
    %2466 = vmatprep.subr.mxu0 0.0
    %2467 = vmatpush1.msra.mxu0 0.0
    %2468 = vmatprep.subr.mxu0 0.0
    %2469 = vmatpush1.msra.mxu0 0.0
    %2470 = vmatprep.subr.mxu0 0.0
    %2471 = vmatpush1.msra.mxu0 0.0
    %2472 = vmatprep.subr.mxu0 0.0
    %2473 = vmatpush1.msra.mxu0 0.0
    %2474 = vmatprep.subr.mxu0 0.0
    %2475 = vmatpush1.msra.mxu0 0.0
    %2476 = vmatprep.subr.mxu0 0.0
    %2477 = vmatpush1.msra.mxu0 0.0
    %2478 = vmatprep.subr.mxu0 0.0
    %2479 = vmatpush1.msra.mxu0 0.0
    %2480 = vmatprep.mubr.f32.mxu0 0.0
    %2481 = vmatmul.mubr.f32.gmra.mrb[0].mxu0 %v2411
    %v2482 = vpop.f32.mrb[0].mxu0
    %v2483 = vadd.f32 0.0, %v2482
    %v2484 = vpop.f32.mrb[0].mxu0
    %2485 = vmatprep.mubr.f32.mxu0 0.0
    %2486 = vmatmul.mubr.f32.gmra.mrb[0].mxu0 %v2414
    %v2487 = vpop.f32.mrb[0].mxu0
    %v2488 = vadd.f32 0.0, %v2487
    %v2489 = vpop.f32.mrb[0].mxu0
    %2490 = vdwg.mxu0
    %v2491 = vlaneseq
    %v2492 = vshrl.u32 %v2491, 7
    %v2493 = vsub.s32 0, %v2492
    %v2494 = vrot.slane %v1802, %v2493
    %v2495 = vadd.f32 %v2494, %v2483
    %v2496 = vadd.f32 %v2494, %v2488
    %s2497 = scalar_lea.vmem %s2, 192
    %v2498 = vld [vmem:[%s2497] sm:$0xff]
    %v2499 = vld [vmem:[%s2497 + $0x8] sm:$0xff]
    %v2500 = vld [vmem:[%s2497 + $0x10] sm:$0xff]
    %v2501 = vld [vmem:[%s2497 + $0x18] sm:$0xff]
    %v2502 = vld [vmem:[%s2497 + $0x20] sm:$0xff]
    %v2503 = vld [vmem:[%s2497 + $0x28] sm:$0xff]
    %v2504 = vld [vmem:[%s2497 + $0x30] sm:$0xff]
    %v2505 = vld [vmem:[%s2497 + $0x38] sm:$0xff]
    %s2506 = scalar_lea.vmem %s3, 3
    %v2507 = vld [vmem:[%s2506] sm:$0x1]
    %v2509 = vlaneseq
    %v2510 = vshrl.u32 %v2509, 7
    %v2511 = vsub.s32 0, %v2510
    %v2512 = vrot.slane %v2507, %v2511
    %2514 = vmatprep.subr.mxu0 0.0
    %2515 = vmatpush1.msra.mxu0 %v2498
    %2516 = vmatprep.subr.mxu0 0.0
    %2517 = vmatpush1.msra.mxu0 %v2499
    %2518 = vmatprep.subr.mxu0 0.0
    %2519 = vmatpush1.msra.mxu0 %v2500
    %2520 = vmatprep.subr.mxu0 0.0
    %2521 = vmatpush1.msra.mxu0 %v2501
    %2522 = vmatprep.subr.mxu0 0.0
    %2523 = vmatpush1.msra.mxu0 %v2502
    %2524 = vmatprep.subr.mxu0 0.0
    %2525 = vmatpush1.msra.mxu0 %v2503
    %2526 = vmatprep.subr.mxu0 0.0
    %2527 = vmatpush1.msra.mxu0 %v2504
    %2528 = vmatprep.subr.mxu0 0.0
    %2529 = vmatpush1.msra.mxu0 %v2505
    %2530 = vmatprep.subr.mxu0 0.0
    %2531 = vmatpush1.msra.mxu0 0.0
    %2532 = vmatprep.subr.mxu0 0.0
    %2533 = vmatpush1.msra.mxu0 0.0
    %2534 = vmatprep.subr.mxu0 0.0
    %2535 = vmatpush1.msra.mxu0 0.0
    %2536 = vmatprep.subr.mxu0 0.0
    %2537 = vmatpush1.msra.mxu0 0.0
    %2538 = vmatprep.subr.mxu0 0.0
    %2539 = vmatpush1.msra.mxu0 0.0
    %2540 = vmatprep.subr.mxu0 0.0
    %2541 = vmatpush1.msra.mxu0 0.0
    %2542 = vmatprep.subr.mxu0 0.0
    %2543 = vmatpush1.msra.mxu0 0.0
    %2544 = vmatprep.subr.mxu0 0.0
    %2545 = vmatpush1.msra.mxu0 0.0
    %2546 = vmatprep.subr.mxu0 0.0
    %2547 = vmatpush1.msra.mxu0 0.0
    %2548 = vmatprep.subr.mxu0 0.0
    %2549 = vmatpush1.msra.mxu0 0.0
    %2550 = vmatprep.subr.mxu0 0.0
    %2551 = vmatpush1.msra.mxu0 0.0
    %2552 = vmatprep.subr.mxu0 0.0
    %2553 = vmatpush1.msra.mxu0 0.0
    %2554 = vmatprep.subr.mxu0 0.0
    %2555 = vmatpush1.msra.mxu0 0.0
    %2556 = vmatprep.subr.mxu0 0.0
    %2557 = vmatpush1.msra.mxu0 0.0
    %2558 = vmatprep.subr.mxu0 0.0
    %2559 = vmatpush1.msra.mxu0 0.0
    %2560 = vmatprep.subr.mxu0 0.0
    %2561 = vmatpush1.msra.mxu0 0.0
    %2562 = vmatprep.subr.mxu0 0.0
    %2563 = vmatpush1.msra.mxu0 0.0
    %2564 = vmatprep.subr.mxu0 0.0
    %2565 = vmatpush1.msra.mxu0 0.0
    %2566 = vmatprep.subr.mxu0 0.0
    %2567 = vmatpush1.msra.mxu0 0.0
    %2568 = vmatprep.subr.mxu0 0.0
    %2569 = vmatpush1.msra.mxu0 0.0
    %2570 = vmatprep.subr.mxu0 0.0
    %2571 = vmatpush1.msra.mxu0 0.0
    %2572 = vmatprep.subr.mxu0 0.0
    %2573 = vmatpush1.msra.mxu0 0.0
    %2574 = vmatprep.subr.mxu0 0.0
    %2575 = vmatpush1.msra.mxu0 0.0
    %2576 = vmatprep.subr.mxu0 0.0
    %2577 = vmatpush1.msra.mxu0 0.0
    %2578 = vmatprep.mubr.f32.mxu0 0.0
    %2579 = vmatmul.mubr.f32.gmra.mrb[0].mxu0 %v1821
    %v2580 = vpop.f32.mrb[0].mxu0
    %v2581 = vadd.f32 %v2512, %v2580
    %v2582 = vpop.f32.mrb[0].mxu0
    %2583 = vmatprep.mubr.f32.mxu0 0.0
    %2584 = vmatmul.mubr.f32.gmra.mrb[0].mxu0 %v1824
    %v2585 = vpop.f32.mrb[0].mxu0
    %v2586 = vadd.f32 %v2512, %v2585
    %v2587 = vpop.f32.mrb[0].mxu0
    %2588 = vdwg.mxu0
    %s2589 = scalar_lea.vmem %s2, 448
    %v2590 = vld [vmem:[%s2589] sm:$0xff]
    %v2591 = vld [vmem:[%s2589 + $0x8] sm:$0xff]
    %v2592 = vld [vmem:[%s2589 + $0x10] sm:$0xff]
    %v2593 = vld [vmem:[%s2589 + $0x18] sm:$0xff]
    %v2594 = vld [vmem:[%s2589 + $0x20] sm:$0xff]
    %v2595 = vld [vmem:[%s2589 + $0x28] sm:$0xff]
    %v2596 = vld [vmem:[%s2589 + $0x30] sm:$0xff]
    %v2597 = vld [vmem:[%s2589 + $0x38] sm:$0xff]
    %s2598 = scalar_lea.vmem %s3, 7
    %v2599 = vld [vmem:[%s2598] sm:$0x1]
    %v2601 = vlaneseq
    %v2602 = vshrl.u32 %v2601, 7
    %v2603 = vsub.s32 0, %v2602
    %v2604 = vrot.slane %v2599, %v2603
    %2606 = vmatprep.subr.mxu0 0.0
    %2607 = vmatpush1.msra.mxu0 %v2590
    %2608 = vmatprep.subr.mxu0 0.0
    %2609 = vmatpush1.msra.mxu0 %v2591
    %2610 = vmatprep.subr.mxu0 0.0
    %2611 = vmatpush1.msra.mxu0 %v2592
    %2612 = vmatprep.subr.mxu0 0.0
    %2613 = vmatpush1.msra.mxu0 %v2593
    %2614 = vmatprep.subr.mxu0 0.0
    %2615 = vmatpush1.msra.mxu0 %v2594
    %2616 = vmatprep.subr.mxu0 0.0
    %2617 = vmatpush1.msra.mxu0 %v2595
    %2618 = vmatprep.subr.mxu0 0.0
    %2619 = vmatpush1.msra.mxu0 %v2596
    %2620 = vmatprep.subr.mxu0 0.0
    %2621 = vmatpush1.msra.mxu0 %v2597
    %2622 = vmatprep.subr.mxu0 0.0
    %2623 = vmatpush1.msra.mxu0 0.0
    %2624 = vmatprep.subr.mxu0 0.0
    %2625 = vmatpush1.msra.mxu0 0.0
    %2626 = vmatprep.subr.mxu0 0.0
    %2627 = vmatpush1.msra.mxu0 0.0
    %2628 = vmatprep.subr.mxu0 0.0
    %2629 = vmatpush1.msra.mxu0 0.0
    %2630 = vmatprep.subr.mxu0 0.0
    %2631 = vmatpush1.msra.mxu0 0.0
    %2632 = vmatprep.subr.mxu0 0.0
    %2633 = vmatpush1.msra.mxu0 0.0
    %2634 = vmatprep.subr.mxu0 0.0
    %2635 = vmatpush1.msra.mxu0 0.0
    %2636 = vmatprep.subr.mxu0 0.0
    %2637 = vmatpush1.msra.mxu0 0.0
    %2638 = vmatprep.subr.mxu0 0.0
    %2639 = vmatpush1.msra.mxu0 0.0
    %2640 = vmatprep.subr.mxu0 0.0
    %2641 = vmatpush1.msra.mxu0 0.0
    %2642 = vmatprep.subr.mxu0 0.0
    %2643 = vmatpush1.msra.mxu0 0.0
    %2644 = vmatprep.subr.mxu0 0.0
    %2645 = vmatpush1.msra.mxu0 0.0
    %2646 = vmatprep.subr.mxu0 0.0
    %2647 = vmatpush1.msra.mxu0 0.0
    %2648 = vmatprep.subr.mxu0 0.0
    %2649 = vmatpush1.msra.mxu0 0.0
    %2650 = vmatprep.subr.mxu0 0.0
    %2651 = vmatpush1.msra.mxu0 0.0
    %2652 = vmatprep.subr.mxu0 0.0
    %2653 = vmatpush1.msra.mxu0 0.0
    %2654 = vmatprep.subr.mxu0 0.0
    %2655 = vmatpush1.msra.mxu0 0.0
    %2656 = vmatprep.subr.mxu0 0.0
    %2657 = vmatpush1.msra.mxu0 0.0
    %2658 = vmatprep.subr.mxu0 0.0
    %2659 = vmatpush1.msra.mxu0 0.0
    %2660 = vmatprep.subr.mxu0 0.0
    %2661 = vmatpush1.msra.mxu0 0.0
    %2662 = vmatprep.subr.mxu0 0.0
    %2663 = vmatpush1.msra.mxu0 0.0
    %2664 = vmatprep.subr.mxu0 0.0
    %2665 = vmatpush1.msra.mxu0 0.0
    %2666 = vmatprep.subr.mxu0 0.0
    %2667 = vmatpush1.msra.mxu0 0.0
    %2668 = vmatprep.subr.mxu0 0.0
    %2669 = vmatpush1.msra.mxu0 0.0
    %2670 = vmatprep.mubr.f32.mxu0 0.0
    %2671 = vmatmul.mubr.f32.gmra.mrb[0].mxu0 %v1821
    %v2672 = vpop.f32.mrb[0].mxu0
    %v2673 = vadd.f32 %v2604, %v2672
    %v2674 = vpop.f32.mrb[0].mxu0
    %2675 = vmatprep.mubr.f32.mxu0 0.0
    %2676 = vmatmul.mubr.f32.gmra.mrb[0].mxu0 %v1824
    %v2677 = vpop.f32.mrb[0].mxu0
    %v2678 = vadd.f32 %v2604, %v2677
    %v2679 = vpop.f32.mrb[0].mxu0
    %2680 = vdwg.mxu0
    %s2681 = scalar_lea.vmem %s2, 704
    %v2682 = vld [vmem:[%s2681] sm:$0xff]
    %v2683 = vld [vmem:[%s2681 + $0x8] sm:$0xff]
    %v2684 = vld [vmem:[%s2681 + $0x10] sm:$0xff]
    %v2685 = vld [vmem:[%s2681 + $0x18] sm:$0xff]
    %v2686 = vld [vmem:[%s2681 + $0x20] sm:$0xff]
    %v2687 = vld [vmem:[%s2681 + $0x28] sm:$0xff]
    %v2688 = vld [vmem:[%s2681 + $0x30] sm:$0xff]
    %v2689 = vld [vmem:[%s2681 + $0x38] sm:$0xff]
    %s2690 = scalar_lea.vmem %s3, 11
    %v2691 = vld [vmem:[%s2690] sm:$0x1]
    %v2693 = vlaneseq
    %v2694 = vshrl.u32 %v2693, 7
    %v2695 = vsub.s32 0, %v2694
    %v2696 = vrot.slane %v2691, %v2695
    %2698 = vmatprep.subr.mxu0 0.0
    %2699 = vmatpush1.msra.mxu0 %v2682
    %2700 = vmatprep.subr.mxu0 0.0
    %2701 = vmatpush1.msra.mxu0 %v2683
    %2702 = vmatprep.subr.mxu0 0.0
    %2703 = vmatpush1.msra.mxu0 %v2684
    %2704 = vmatprep.subr.mxu0 0.0
    %2705 = vmatpush1.msra.mxu0 %v2685
    %2706 = vmatprep.subr.mxu0 0.0
    %2707 = vmatpush1.msra.mxu0 %v2686
    %2708 = vmatprep.subr.mxu0 0.0
    %2709 = vmatpush1.msra.mxu0 %v2687
    %2710 = vmatprep.subr.mxu0 0.0
    %2711 = vmatpush1.msra.mxu0 %v2688
    %2712 = vmatprep.subr.mxu0 0.0
    %2713 = vmatpush1.msra.mxu0 %v2689
    %2714 = vmatprep.subr.mxu0 0.0
    %2715 = vmatpush1.msra.mxu0 0.0
    %2716 = vmatprep.subr.mxu0 0.0
    %2717 = vmatpush1.msra.mxu0 0.0
    %2718 = vmatprep.subr.mxu0 0.0
    %2719 = vmatpush1.msra.mxu0 0.0
    %2720 = vmatprep.subr.mxu0 0.0
    %2721 = vmatpush1.msra.mxu0 0.0
    %2722 = vmatprep.subr.mxu0 0.0
    %2723 = vmatpush1.msra.mxu0 0.0
    %2724 = vmatprep.subr.mxu0 0.0
    %2725 = vmatpush1.msra.mxu0 0.0
    %2726 = vmatprep.subr.mxu0 0.0
    %2727 = vmatpush1.msra.mxu0 0.0
    %2728 = vmatprep.subr.mxu0 0.0
    %2729 = vmatpush1.msra.mxu0 0.0
    %2730 = vmatprep.subr.mxu0 0.0
    %2731 = vmatpush1.msra.mxu0 0.0
    %2732 = vmatprep.subr.mxu0 0.0
    %2733 = vmatpush1.msra.mxu0 0.0
    %2734 = vmatprep.subr.mxu0 0.0
    %2735 = vmatpush1.msra.mxu0 0.0
    %2736 = vmatprep.subr.mxu0 0.0
    %2737 = vmatpush1.msra.mxu0 0.0
    %2738 = vmatprep.subr.mxu0 0.0
    %2739 = vmatpush1.msra.mxu0 0.0
    %2740 = vmatprep.subr.mxu0 0.0
    %2741 = vmatpush1.msra.mxu0 0.0
    %2742 = vmatprep.subr.mxu0 0.0
    %2743 = vmatpush1.msra.mxu0 0.0
    %2744 = vmatprep.subr.mxu0 0.0
    %2745 = vmatpush1.msra.mxu0 0.0
    %2746 = vmatprep.subr.mxu0 0.0
    %2747 = vmatpush1.msra.mxu0 0.0
    %2748 = vmatprep.subr.mxu0 0.0
    %2749 = vmatpush1.msra.mxu0 0.0
    %2750 = vmatprep.subr.mxu0 0.0
    %2751 = vmatpush1.msra.mxu0 0.0
    %2752 = vmatprep.subr.mxu0 0.0
    %2753 = vmatpush1.msra.mxu0 0.0
    %2754 = vmatprep.subr.mxu0 0.0
    %2755 = vmatpush1.msra.mxu0 0.0
    %2756 = vmatprep.subr.mxu0 0.0
    %2757 = vmatpush1.msra.mxu0 0.0
    %2758 = vmatprep.subr.mxu0 0.0
    %2759 = vmatpush1.msra.mxu0 0.0
    %2760 = vmatprep.subr.mxu0 0.0
    %2761 = vmatpush1.msra.mxu0 0.0
    %2762 = vmatprep.mubr.f32.mxu0 0.0
    %2763 = vmatmul.mubr.f32.gmra.mrb[0].mxu0 %v1821
    %v2764 = vpop.f32.mrb[0].mxu0
    %v2765 = vadd.f32 %v2696, %v2764
    %v2766 = vpop.f32.mrb[0].mxu0
    %2767 = vmatprep.mubr.f32.mxu0 0.0
    %2768 = vmatmul.mubr.f32.gmra.mrb[0].mxu0 %v1824
    %v2769 = vpop.f32.mrb[0].mxu0
    %v2770 = vadd.f32 %v2696, %v2769
    %v2771 = vpop.f32.mrb[0].mxu0
    %2772 = vdwg.mxu0
    %v2774 = vsel %vm413, %v2581, 0
    %v2777 = vsel %vm413, %v2673, 0
    %2779 = vmatprep.subr.mxu0 0.0
    %2780 = vmatpush1.xpose.msra.mxu0 %v2777
    %2781 = vmatprep.subr.mxu0 0.0
    %2782 = vmatpush1.xpose.msra.mxu0 0.0
    %2783 = vmatprep.subr.mxu0 0.0
    %2784 = vmatpush1.xpose.msra.mxu0 0.0
    %2785 = vmatprep.subr.mxu0 0.0
    %2786 = vmatpush1.xpose.msra.mxu0 0.0
    %2787 = vmatprep.subr.mxu0 0.0
    %2788 = vmatpush1.xpose.msra.mxu0 0.0
    %2789 = vmatprep.subr.mxu0 0.0
    %2790 = vmatpush1.xpose.msra.mxu0 0.0
    %2791 = vmatprep.subr.mxu0 0.0
    %2792 = vmatpush1.xpose.msra.mxu0 0.0
    %2793 = vmatprep.subr.mxu0 0.0
    %2794 = vmatpush1.xpose.msra.mxu0 0.0
    %2795 = vmatprep.subr.mxu0 0.0
    %2796 = vmatpush1.xpose.msra.mxu0 0.0
    %2797 = vmatprep.subr.mxu0 0.0
    %2798 = vmatpush1.xpose.msra.mxu0 0.0
    %2799 = vmatprep.subr.mxu0 0.0
    %2800 = vmatpush1.xpose.msra.mxu0 0.0
    %2801 = vmatprep.subr.mxu0 0.0
    %2802 = vmatpush1.xpose.msra.mxu0 0.0
    %2803 = vmatprep.subr.mxu0 0.0
    %2804 = vmatpush1.xpose.msra.mxu0 0.0
    %2805 = vmatprep.subr.mxu0 0.0
    %2806 = vmatpush1.xpose.msra.mxu0 0.0
    %2807 = vmatprep.subr.mxu0 0.0
    %2808 = vmatpush1.xpose.msra.mxu0 0.0
    %2809 = vmatprep.subr.mxu0 0.0
    %2810 = vmatpush1.xpose.msra.mxu0 0.0
    %2811 = vmatprep.subr.mxu0 0.0
    %2812 = vmatpush1.xpose.msra.mxu0 0.0
    %2813 = vmatprep.subr.mxu0 0.0
    %2814 = vmatpush1.xpose.msra.mxu0 0.0
    %2815 = vmatprep.subr.mxu0 0.0
    %2816 = vmatpush1.xpose.msra.mxu0 0.0
    %2817 = vmatprep.subr.mxu0 0.0
    %2818 = vmatpush1.xpose.msra.mxu0 0.0
    %2819 = vmatprep.subr.mxu0 0.0
    %2820 = vmatpush1.xpose.msra.mxu0 0.0
    %2821 = vmatprep.subr.mxu0 0.0
    %2822 = vmatpush1.xpose.msra.mxu0 0.0
    %2823 = vmatprep.subr.mxu0 0.0
    %2824 = vmatpush1.xpose.msra.mxu0 0.0
    %2825 = vmatprep.subr.mxu0 0.0
    %2826 = vmatpush1.xpose.msra.mxu0 0.0
    %2827 = vmatprep.subr.mxu0 0.0
    %2828 = vmatpush1.xpose.msra.mxu0 0.0
    %2829 = vmatprep.subr.mxu0 0.0
    %2830 = vmatpush1.xpose.msra.mxu0 0.0
    %2831 = vmatprep.subr.mxu0 0.0
    %2832 = vmatpush1.xpose.msra.mxu0 0.0
    %2833 = vmatprep.subr.mxu0 0.0
    %2834 = vmatpush1.xpose.msra.mxu0 0.0
    %2835 = vmatprep.subr.mxu0 0.0
    %2836 = vmatpush1.xpose.msra.mxu0 0.0
    %2837 = vmatprep.subr.mxu0 0.0
    %2838 = vmatpush1.xpose.msra.mxu0 0.0
    %2839 = vmatprep.subr.mxu0 0.0
    %2840 = vmatpush1.xpose.msra.mxu0 0.0
    %2841 = vmatprep.subr.mxu0 0.0
    %2842 = vmatpush1.xpose.msra.mxu0 0.0
    %2843 = vmatprep.mubr.f32.mxu0 0.0
    %2844 = vmatmul.mubr.f32.gmra.mrb[0].mxu0 %v2774
    %v2845 = vpop.f32.mrb[0].mxu0
    %v2846 = vadd.f32 0.0, %v2845
    %v2847 = vpop.f32.mrb[0].mxu0
    %2848 = vdwg.mxu0
    %v2850 = vsel %vm413, %v2586, 0
    %v2853 = vsel %vm413, %v2678, 0
    %2855 = vmatprep.subr.mxu0 0.0
    %2856 = vmatpush1.xpose.msra.mxu0 %v2853
    %2857 = vmatprep.subr.mxu0 0.0
    %2858 = vmatpush1.xpose.msra.mxu0 0.0
    %2859 = vmatprep.subr.mxu0 0.0
    %2860 = vmatpush1.xpose.msra.mxu0 0.0
    %2861 = vmatprep.subr.mxu0 0.0
    %2862 = vmatpush1.xpose.msra.mxu0 0.0
    %2863 = vmatprep.subr.mxu0 0.0
    %2864 = vmatpush1.xpose.msra.mxu0 0.0
    %2865 = vmatprep.subr.mxu0 0.0
    %2866 = vmatpush1.xpose.msra.mxu0 0.0
    %2867 = vmatprep.subr.mxu0 0.0
    %2868 = vmatpush1.xpose.msra.mxu0 0.0
    %2869 = vmatprep.subr.mxu0 0.0
    %2870 = vmatpush1.xpose.msra.mxu0 0.0
    %2871 = vmatprep.subr.mxu0 0.0
    %2872 = vmatpush1.xpose.msra.mxu0 0.0
    %2873 = vmatprep.subr.mxu0 0.0
    %2874 = vmatpush1.xpose.msra.mxu0 0.0
    %2875 = vmatprep.subr.mxu0 0.0
    %2876 = vmatpush1.xpose.msra.mxu0 0.0
    %2877 = vmatprep.subr.mxu0 0.0
    %2878 = vmatpush1.xpose.msra.mxu0 0.0
    %2879 = vmatprep.subr.mxu0 0.0
    %2880 = vmatpush1.xpose.msra.mxu0 0.0
    %2881 = vmatprep.subr.mxu0 0.0
    %2882 = vmatpush1.xpose.msra.mxu0 0.0
    %2883 = vmatprep.subr.mxu0 0.0
    %2884 = vmatpush1.xpose.msra.mxu0 0.0
    %2885 = vmatprep.subr.mxu0 0.0
    %2886 = vmatpush1.xpose.msra.mxu0 0.0
    %2887 = vmatprep.subr.mxu0 0.0
    %2888 = vmatpush1.xpose.msra.mxu0 0.0
    %2889 = vmatprep.subr.mxu0 0.0
    %2890 = vmatpush1.xpose.msra.mxu0 0.0
    %2891 = vmatprep.subr.mxu0 0.0
    %2892 = vmatpush1.xpose.msra.mxu0 0.0
    %2893 = vmatprep.subr.mxu0 0.0
    %2894 = vmatpush1.xpose.msra.mxu0 0.0
    %2895 = vmatprep.subr.mxu0 0.0
    %2896 = vmatpush1.xpose.msra.mxu0 0.0
    %2897 = vmatprep.subr.mxu0 0.0
    %2898 = vmatpush1.xpose.msra.mxu0 0.0
    %2899 = vmatprep.subr.mxu0 0.0
    %2900 = vmatpush1.xpose.msra.mxu0 0.0
    %2901 = vmatprep.subr.mxu0 0.0
    %2902 = vmatpush1.xpose.msra.mxu0 0.0
    %2903 = vmatprep.subr.mxu0 0.0
    %2904 = vmatpush1.xpose.msra.mxu0 0.0
    %2905 = vmatprep.subr.mxu0 0.0
    %2906 = vmatpush1.xpose.msra.mxu0 0.0
    %2907 = vmatprep.subr.mxu0 0.0
    %2908 = vmatpush1.xpose.msra.mxu0 0.0
    %2909 = vmatprep.subr.mxu0 0.0
    %2910 = vmatpush1.xpose.msra.mxu0 0.0
    %2911 = vmatprep.subr.mxu0 0.0
    %2912 = vmatpush1.xpose.msra.mxu0 0.0
    %2913 = vmatprep.subr.mxu0 0.0
    %2914 = vmatpush1.xpose.msra.mxu0 0.0
    %2915 = vmatprep.subr.mxu0 0.0
    %2916 = vmatpush1.xpose.msra.mxu0 0.0
    %2917 = vmatprep.subr.mxu0 0.0
    %2918 = vmatpush1.xpose.msra.mxu0 0.0
    %2919 = vmatprep.mubr.f32.mxu0 0.0
    %2920 = vmatmul.mubr.f32.gmra.mrb[0].mxu0 %v2850
    %v2921 = vpop.f32.mrb[0].mxu0
    %v2922 = vadd.f32 0.0, %v2921
    %v2923 = vpop.f32.mrb[0].mxu0
    %2924 = vdwg.mxu0
    %v2925 = vsel %vm566, %v2846, -inf
    %2926 = vmax.xlane.f32.xlu0 %v2925
    %v2927 = vpop.xlane.xlu0 %2926
    %v2928 = vsel %vm566, %v2922, -inf
    %2929 = vmax.xlane.f32.xlu0 %v2928
    %v2930 = vpop.xlane.xlu0 %2929
    %v2931 = vsub.f32 %v2846, %v2927
    %v2932 = vsub.f32 %v2922, %v2930
    %v2933 = vmul.f32 %v2931, 1.442695
    %v2934 = vpow.pop %v2933
    %v2935 = vmul.f32 %v2932, 1.442695
    %v2936 = vpow.pop %v2935
    %v2937 = vsel %vm566, %v2934, 0.0
    %2938 = vadd.xlane.f32.xlu0 %v2937
    %v2939 = vpop.xlane.xlu0 %2938
    %v2940 = vsel %vm566, %v2936, 0.0
    %2941 = vadd.xlane.f32.xlu0 %v2940
    %v2942 = vpop.xlane.xlu0 %2941
    %v2943 = vrcp.pop %v2939
    %v2944 = vrcp.pop %v2942
    %v2945 = vmul.f32 %v2934, %v2943
    %v2946 = vmul.f32 %v2936, %v2944
    %v2948 = vsel %vm566, %v2945, 0
    %2950 = vmatprep.subr.mxu0 0.0
    %2951 = vmatpush1.msra.mxu0 %v2765
    %2952 = vmatprep.subr.mxu0 0.0
    %2953 = vmatpush1.msra.mxu0 0.0
    %2954 = vmatprep.subr.mxu0 0.0
    %2955 = vmatpush1.msra.mxu0 0.0
    %2956 = vmatprep.subr.mxu0 0.0
    %2957 = vmatpush1.msra.mxu0 0.0
    %2958 = vmatprep.subr.mxu0 0.0
    %2959 = vmatpush1.msra.mxu0 0.0
    %2960 = vmatprep.subr.mxu0 0.0
    %2961 = vmatpush1.msra.mxu0 0.0
    %2962 = vmatprep.subr.mxu0 0.0
    %2963 = vmatpush1.msra.mxu0 0.0
    %2964 = vmatprep.subr.mxu0 0.0
    %2965 = vmatpush1.msra.mxu0 0.0
    %2966 = vmatprep.subr.mxu0 0.0
    %2967 = vmatpush1.msra.mxu0 0.0
    %2968 = vmatprep.subr.mxu0 0.0
    %2969 = vmatpush1.msra.mxu0 0.0
    %2970 = vmatprep.subr.mxu0 0.0
    %2971 = vmatpush1.msra.mxu0 0.0
    %2972 = vmatprep.subr.mxu0 0.0
    %2973 = vmatpush1.msra.mxu0 0.0
    %2974 = vmatprep.subr.mxu0 0.0
    %2975 = vmatpush1.msra.mxu0 0.0
    %2976 = vmatprep.subr.mxu0 0.0
    %2977 = vmatpush1.msra.mxu0 0.0
    %2978 = vmatprep.subr.mxu0 0.0
    %2979 = vmatpush1.msra.mxu0 0.0
    %2980 = vmatprep.subr.mxu0 0.0
    %2981 = vmatpush1.msra.mxu0 0.0
    %2982 = vmatprep.subr.mxu0 0.0
    %2983 = vmatpush1.msra.mxu0 0.0
    %2984 = vmatprep.subr.mxu0 0.0
    %2985 = vmatpush1.msra.mxu0 0.0
    %2986 = vmatprep.subr.mxu0 0.0
    %2987 = vmatpush1.msra.mxu0 0.0
    %2988 = vmatprep.subr.mxu0 0.0
    %2989 = vmatpush1.msra.mxu0 0.0
    %2990 = vmatprep.subr.mxu0 0.0
    %2991 = vmatpush1.msra.mxu0 0.0
    %2992 = vmatprep.subr.mxu0 0.0
    %2993 = vmatpush1.msra.mxu0 0.0
    %2994 = vmatprep.subr.mxu0 0.0
    %2995 = vmatpush1.msra.mxu0 0.0
    %2996 = vmatprep.subr.mxu0 0.0
    %2997 = vmatpush1.msra.mxu0 0.0
    %2998 = vmatprep.subr.mxu0 0.0
    %2999 = vmatpush1.msra.mxu0 0.0
    %3000 = vmatprep.subr.mxu0 0.0
    %3001 = vmatpush1.msra.mxu0 0.0
    %3002 = vmatprep.subr.mxu0 0.0
    %3003 = vmatpush1.msra.mxu0 0.0
    %3004 = vmatprep.subr.mxu0 0.0
    %3005 = vmatpush1.msra.mxu0 0.0
    %3006 = vmatprep.subr.mxu0 0.0
    %3007 = vmatpush1.msra.mxu0 0.0
    %3008 = vmatprep.subr.mxu0 0.0
    %3009 = vmatpush1.msra.mxu0 0.0
    %3010 = vmatprep.subr.mxu0 0.0
    %3011 = vmatpush1.msra.mxu0 0.0
    %3012 = vmatprep.subr.mxu0 0.0
    %3013 = vmatpush1.msra.mxu0 0.0
    %3014 = vmatprep.mubr.f32.mxu0 0.0
    %3015 = vmatmul.mubr.f32.gmra.mrb[0].mxu0 %v2948
    %v3016 = vpop.f32.mrb[0].mxu0
    %v3017 = vadd.f32 0.0, %v3016
    %v3018 = vpop.f32.mrb[0].mxu0
    %3019 = vdwg.mxu0
    %v3021 = vsel %vm566, %v2946, 0
    %3023 = vmatprep.subr.mxu0 0.0
    %3024 = vmatpush1.msra.mxu0 %v2770
    %3025 = vmatprep.subr.mxu0 0.0
    %3026 = vmatpush1.msra.mxu0 0.0
    %3027 = vmatprep.subr.mxu0 0.0
    %3028 = vmatpush1.msra.mxu0 0.0
    %3029 = vmatprep.subr.mxu0 0.0
    %3030 = vmatpush1.msra.mxu0 0.0
    %3031 = vmatprep.subr.mxu0 0.0
    %3032 = vmatpush1.msra.mxu0 0.0
    %3033 = vmatprep.subr.mxu0 0.0
    %3034 = vmatpush1.msra.mxu0 0.0
    %3035 = vmatprep.subr.mxu0 0.0
    %3036 = vmatpush1.msra.mxu0 0.0
    %3037 = vmatprep.subr.mxu0 0.0
    %3038 = vmatpush1.msra.mxu0 0.0
    %3039 = vmatprep.subr.mxu0 0.0
    %3040 = vmatpush1.msra.mxu0 0.0
    %3041 = vmatprep.subr.mxu0 0.0
    %3042 = vmatpush1.msra.mxu0 0.0
    %3043 = vmatprep.subr.mxu0 0.0
    %3044 = vmatpush1.msra.mxu0 0.0
    %3045 = vmatprep.subr.mxu0 0.0
    %3046 = vmatpush1.msra.mxu0 0.0
    %3047 = vmatprep.subr.mxu0 0.0
    %3048 = vmatpush1.msra.mxu0 0.0
    %3049 = vmatprep.subr.mxu0 0.0
    %3050 = vmatpush1.msra.mxu0 0.0
    %3051 = vmatprep.subr.mxu0 0.0
    %3052 = vmatpush1.msra.mxu0 0.0
    %3053 = vmatprep.subr.mxu0 0.0
    %3054 = vmatpush1.msra.mxu0 0.0
    %3055 = vmatprep.subr.mxu0 0.0
    %3056 = vmatpush1.msra.mxu0 0.0
    %3057 = vmatprep.subr.mxu0 0.0
    %3058 = vmatpush1.msra.mxu0 0.0
    %3059 = vmatprep.subr.mxu0 0.0
    %3060 = vmatpush1.msra.mxu0 0.0
    %3061 = vmatprep.subr.mxu0 0.0
    %3062 = vmatpush1.msra.mxu0 0.0
    %3063 = vmatprep.subr.mxu0 0.0
    %3064 = vmatpush1.msra.mxu0 0.0
    %3065 = vmatprep.subr.mxu0 0.0
    %3066 = vmatpush1.msra.mxu0 0.0
    %3067 = vmatprep.subr.mxu0 0.0
    %3068 = vmatpush1.msra.mxu0 0.0
    %3069 = vmatprep.subr.mxu0 0.0
    %3070 = vmatpush1.msra.mxu0 0.0
    %3071 = vmatprep.subr.mxu0 0.0
    %3072 = vmatpush1.msra.mxu0 0.0
    %3073 = vmatprep.subr.mxu0 0.0
    %3074 = vmatpush1.msra.mxu0 0.0
    %3075 = vmatprep.subr.mxu0 0.0
    %3076 = vmatpush1.msra.mxu0 0.0
    %3077 = vmatprep.subr.mxu0 0.0
    %3078 = vmatpush1.msra.mxu0 0.0
    %3079 = vmatprep.subr.mxu0 0.0
    %3080 = vmatpush1.msra.mxu0 0.0
    %3081 = vmatprep.subr.mxu0 0.0
    %3082 = vmatpush1.msra.mxu0 0.0
    %3083 = vmatprep.subr.mxu0 0.0
    %3084 = vmatpush1.msra.mxu0 0.0
    %3085 = vmatprep.subr.mxu0 0.0
    %3086 = vmatpush1.msra.mxu0 0.0
    %3087 = vmatprep.mubr.f32.mxu0 0.0
    %3088 = vmatmul.mubr.f32.gmra.mrb[0].mxu0 %v3021
    %v3089 = vpop.f32.mrb[0].mxu0
    %v3090 = vadd.f32 0.0, %v3089
    %v3091 = vpop.f32.mrb[0].mxu0
    %3092 = vdwg.mxu0
    %s3093 = scalar_lea.vmem %s4, 96
    %v3094 = vld [vmem:[%s3093] sm:$0xff]
    %v3095 = vld [vmem:[%s3093 + $0x8] sm:$0xff]
    %v3096 = vld [vmem:[%s3093 + $0x10] sm:$0xff]
    %v3097 = vld [vmem:[%s3093 + $0x18] sm:$0xff]
    %v3099 = vsel %vm413, %v3017, 0
    %v3102 = vsel %vm413, %v3090, 0
    %3104 = vmatprep.subr.mxu0 0.0
    %3105 = vmatpush1.msra.mxu0 %v3094
    %3106 = vmatprep.subr.mxu0 0.0
    %3107 = vmatpush1.msra.mxu0 %v3095
    %3108 = vmatprep.subr.mxu0 0.0
    %3109 = vmatpush1.msra.mxu0 %v3096
    %3110 = vmatprep.subr.mxu0 0.0
    %3111 = vmatpush1.msra.mxu0 %v3097
    %3112 = vmatprep.subr.mxu0 0.0
    %3113 = vmatpush1.msra.mxu0 0.0
    %3114 = vmatprep.subr.mxu0 0.0
    %3115 = vmatpush1.msra.mxu0 0.0
    %3116 = vmatprep.subr.mxu0 0.0
    %3117 = vmatpush1.msra.mxu0 0.0
    %3118 = vmatprep.subr.mxu0 0.0
    %3119 = vmatpush1.msra.mxu0 0.0
    %3120 = vmatprep.subr.mxu0 0.0
    %3121 = vmatpush1.msra.mxu0 0.0
    %3122 = vmatprep.subr.mxu0 0.0
    %3123 = vmatpush1.msra.mxu0 0.0
    %3124 = vmatprep.subr.mxu0 0.0
    %3125 = vmatpush1.msra.mxu0 0.0
    %3126 = vmatprep.subr.mxu0 0.0
    %3127 = vmatpush1.msra.mxu0 0.0
    %3128 = vmatprep.subr.mxu0 0.0
    %3129 = vmatpush1.msra.mxu0 0.0
    %3130 = vmatprep.subr.mxu0 0.0
    %3131 = vmatpush1.msra.mxu0 0.0
    %3132 = vmatprep.subr.mxu0 0.0
    %3133 = vmatpush1.msra.mxu0 0.0
    %3134 = vmatprep.subr.mxu0 0.0
    %3135 = vmatpush1.msra.mxu0 0.0
    %3136 = vmatprep.subr.mxu0 0.0
    %3137 = vmatpush1.msra.mxu0 0.0
    %3138 = vmatprep.subr.mxu0 0.0
    %3139 = vmatpush1.msra.mxu0 0.0
    %3140 = vmatprep.subr.mxu0 0.0
    %3141 = vmatpush1.msra.mxu0 0.0
    %3142 = vmatprep.subr.mxu0 0.0
    %3143 = vmatpush1.msra.mxu0 0.0
    %3144 = vmatprep.subr.mxu0 0.0
    %3145 = vmatpush1.msra.mxu0 0.0
    %3146 = vmatprep.subr.mxu0 0.0
    %3147 = vmatpush1.msra.mxu0 0.0
    %3148 = vmatprep.subr.mxu0 0.0
    %3149 = vmatpush1.msra.mxu0 0.0
    %3150 = vmatprep.subr.mxu0 0.0
    %3151 = vmatpush1.msra.mxu0 0.0
    %3152 = vmatprep.subr.mxu0 0.0
    %3153 = vmatpush1.msra.mxu0 0.0
    %3154 = vmatprep.subr.mxu0 0.0
    %3155 = vmatpush1.msra.mxu0 0.0
    %3156 = vmatprep.subr.mxu0 0.0
    %3157 = vmatpush1.msra.mxu0 0.0
    %3158 = vmatprep.subr.mxu0 0.0
    %3159 = vmatpush1.msra.mxu0 0.0
    %3160 = vmatprep.subr.mxu0 0.0
    %3161 = vmatpush1.msra.mxu0 0.0
    %3162 = vmatprep.subr.mxu0 0.0
    %3163 = vmatpush1.msra.mxu0 0.0
    %3164 = vmatprep.subr.mxu0 0.0
    %3165 = vmatpush1.msra.mxu0 0.0
    %3166 = vmatprep.subr.mxu0 0.0
    %3167 = vmatpush1.msra.mxu0 0.0
    %3168 = vmatprep.mubr.f32.mxu0 0.0
    %3169 = vmatmul.mubr.f32.gmra.mrb[0].mxu0 %v3099
    %v3170 = vpop.f32.mrb[0].mxu0
    %v3171 = vadd.f32 0.0, %v3170
    %v3172 = vpop.f32.mrb[0].mxu0
    %3173 = vmatprep.mubr.f32.mxu0 0.0
    %3174 = vmatmul.mubr.f32.gmra.mrb[0].mxu0 %v3102
    %v3175 = vpop.f32.mrb[0].mxu0
    %v3176 = vadd.f32 0.0, %v3175
    %v3177 = vpop.f32.mrb[0].mxu0
    %3178 = vdwg.mxu0
    %v3179 = vadd.f32 %v2495, %v3171
    %v3180 = vadd.f32 %v2496, %v3176
    %v3181 = vadd.f32 %v3179, %v1800
    %v3182 = vadd.f32 %v3180, %v1801
    %v3183 = vld [vmem:[%s8 + $0xb] sm:$0x1]
    %v3184 = vld [vmem:[%s8 + $0xc] sm:$0x1]
    %v3185 = vsel %vm92, %v3181, 0.0
    %3186 = vadd.xlane.f32.xlu0 %v3185
    %v3187 = vpop.xlane.xlu0 %3186
    %v3188 = vsel %vm92, %v3182, 0.0
    %3189 = vadd.xlane.f32.xlu0 %v3188
    %v3190 = vpop.xlane.xlu0 %3189
    %v3191 = vmul.f32 %v3187, %v99
    %v3192 = vmul.f32 %v3190, %v99
    %v3193 = vsub.f32 %v3181, %v3191
    %v3194 = vsub.f32 %v3182, %v3192
    %v3195 = vmul.f32 %v3193, %v3193
    %v3196 = vmul.f32 %v3194, %v3194
    %v3197 = vsel %vm92, %v3195, 0.0
    %3198 = vadd.xlane.f32.xlu0 %v3197
    %v3199 = vpop.xlane.xlu0 %3198
    %v3200 = vsel %vm92, %v3196, 0.0
    %3201 = vadd.xlane.f32.xlu0 %v3200
    %v3202 = vpop.xlane.xlu0 %3201
    %v3203 = vmul.f32 %v3199, %v99
    %v3204 = vmul.f32 %v3202, %v99
    %v3205 = vadd.f32 %v3203, 1e-12
    %v3206 = vadd.f32 %v3204, 1e-12
    %v3207 = vrsqrt.pop %v3205
    %v3208 = vrsqrt.pop %v3206
    %v3209 = vmul.f32 %v3193, %v3207
    %v3210 = vmul.f32 %v3194, %v3208
    %v3211 = vlaneseq
    %v3212 = vshrl.u32 %v3211, 7
    %v3213 = vsub.s32 0, %v3212
    %v3214 = vrot.slane %v3183, %v3213
    %v3215 = vmul.f32 %v3209, %v3214
    %v3216 = vmul.f32 %v3210, %v3214
    %v3217 = vlaneseq
    %v3218 = vshrl.u32 %v3217, 7
    %v3219 = vsub.s32 0, %v3218
    %v3220 = vrot.slane %v3184, %v3219
    %v3221 = vadd.f32 %v3215, %v3220
    %v3222 = vadd.f32 %v3216, %v3220
    %s3223 = scalar_lea.vmem %s5, 64
    %v3224 = vld [vmem:[%s3223] sm:$0xff]
    %v3225 = vld [vmem:[%s3223 + $0x8] sm:$0xff]
    %v3226 = vld [vmem:[%s3223 + $0x10] sm:$0xff]
    %v3227 = vld [vmem:[%s3223 + $0x18] sm:$0xff]
    %v3228 = vld [vmem:[%s3223 + $0x20] sm:$0xff]
    %v3229 = vld [vmem:[%s3223 + $0x28] sm:$0xff]
    %v3230 = vld [vmem:[%s3223 + $0x30] sm:$0xff]
    %v3231 = vld [vmem:[%s3223 + $0x38] sm:$0xff]
    %v3232 = vld [vmem:[%s9 + $0x1] sm:$0x1]
    %v3233 = vlaneseq
    %v3234 = vshrl.u32 %v3233, 7
    %v3235 = vsub.s32 0, %v3234
    %v3236 = vrot.slane %v3232, %v3235
    %v3238 = vsel %vm92, %v3221, 0
    %v3241 = vsel %vm92, %v3222, 0
    %3243 = vmatprep.subr.mxu0 0.0
    %3244 = vmatpush1.msra.mxu0 %v3224
    %3245 = vmatprep.subr.mxu0 0.0
    %3246 = vmatpush1.msra.mxu0 %v3225
    %3247 = vmatprep.subr.mxu0 0.0
    %3248 = vmatpush1.msra.mxu0 %v3226
    %3249 = vmatprep.subr.mxu0 0.0
    %3250 = vmatpush1.msra.mxu0 %v3227
    %3251 = vmatprep.subr.mxu0 0.0
    %3252 = vmatpush1.msra.mxu0 %v3228
    %3253 = vmatprep.subr.mxu0 0.0
    %3254 = vmatpush1.msra.mxu0 %v3229
    %3255 = vmatprep.subr.mxu0 0.0
    %3256 = vmatpush1.msra.mxu0 %v3230
    %3257 = vmatprep.subr.mxu0 0.0
    %3258 = vmatpush1.msra.mxu0 %v3231
    %3259 = vmatprep.subr.mxu0 0.0
    %3260 = vmatpush1.msra.mxu0 0.0
    %3261 = vmatprep.subr.mxu0 0.0
    %3262 = vmatpush1.msra.mxu0 0.0
    %3263 = vmatprep.subr.mxu0 0.0
    %3264 = vmatpush1.msra.mxu0 0.0
    %3265 = vmatprep.subr.mxu0 0.0
    %3266 = vmatpush1.msra.mxu0 0.0
    %3267 = vmatprep.subr.mxu0 0.0
    %3268 = vmatpush1.msra.mxu0 0.0
    %3269 = vmatprep.subr.mxu0 0.0
    %3270 = vmatpush1.msra.mxu0 0.0
    %3271 = vmatprep.subr.mxu0 0.0
    %3272 = vmatpush1.msra.mxu0 0.0
    %3273 = vmatprep.subr.mxu0 0.0
    %3274 = vmatpush1.msra.mxu0 0.0
    %3275 = vmatprep.subr.mxu0 0.0
    %3276 = vmatpush1.msra.mxu0 0.0
    %3277 = vmatprep.subr.mxu0 0.0
    %3278 = vmatpush1.msra.mxu0 0.0
    %3279 = vmatprep.subr.mxu0 0.0
    %3280 = vmatpush1.msra.mxu0 0.0
    %3281 = vmatprep.subr.mxu0 0.0
    %3282 = vmatpush1.msra.mxu0 0.0
    %3283 = vmatprep.subr.mxu0 0.0
    %3284 = vmatpush1.msra.mxu0 0.0
    %3285 = vmatprep.subr.mxu0 0.0
    %3286 = vmatpush1.msra.mxu0 0.0
    %3287 = vmatprep.subr.mxu0 0.0
    %3288 = vmatpush1.msra.mxu0 0.0
    %3289 = vmatprep.subr.mxu0 0.0
    %3290 = vmatpush1.msra.mxu0 0.0
    %3291 = vmatprep.subr.mxu0 0.0
    %3292 = vmatpush1.msra.mxu0 0.0
    %3293 = vmatprep.subr.mxu0 0.0
    %3294 = vmatpush1.msra.mxu0 0.0
    %3295 = vmatprep.subr.mxu0 0.0
    %3296 = vmatpush1.msra.mxu0 0.0
    %3297 = vmatprep.subr.mxu0 0.0
    %3298 = vmatpush1.msra.mxu0 0.0
    %3299 = vmatprep.subr.mxu0 0.0
    %3300 = vmatpush1.msra.mxu0 0.0
    %3301 = vmatprep.subr.mxu0 0.0
    %3302 = vmatpush1.msra.mxu0 0.0
    %3303 = vmatprep.subr.mxu0 0.0
    %3304 = vmatpush1.msra.mxu0 0.0
    %3305 = vmatprep.subr.mxu0 0.0
    %3306 = vmatpush1.msra.mxu0 0.0
    %3307 = vmatprep.mubr.f32.mxu0 0.0
    %3308 = vmatmul.mubr.f32.gmra.mrb[0].mxu0 %v3238
    %v3309 = vpop.f32.mrb[0].mxu0
    %v3310 = vadd.f32 %v3236, %v3309
    %v3311 = vpop.f32.mrb[0].mxu0
    %3312 = vmatprep.mubr.f32.mxu0 0.0
    %3313 = vmatmul.mubr.f32.gmra.mrb[0].mxu0 %v3241
    %v3314 = vpop.f32.mrb[0].mxu0
    %v3315 = vadd.f32 %v3236, %v3314
    %v3316 = vpop.f32.mrb[0].mxu0
    %3317 = vdwg.mxu0
    %v3318 = vmul.f32 %v3310, 0.5
    %v3319 = vmul.f32 %v3315, 0.5
    %v3320 = vmul.f32 %v3310, 0.044715
    %v3321 = vmul.f32 %v3315, 0.044715
    %v3322 = vmul.f32 %v3320, %v3310
    %v3323 = vmul.f32 %v3321, %v3315
    %v3324 = vmul.f32 %v3322, %v3310
    %v3325 = vmul.f32 %v3323, %v3315
    %v3326 = vadd.f32 %v3310, %v3324
    %v3327 = vadd.f32 %v3315, %v3325
    %v3328 = vmul.f32 %v3326, 0.7978846
    %v3329 = vmul.f32 %v3327, 0.7978846
    %v3330 = vtanh.pop %v3328
    %v3331 = vtanh.pop %v3329
    %v3332 = vadd.f32 %v3330, 1.0
    %v3333 = vadd.f32 %v3331, 1.0
    %v3334 = vmul.f32 %v3318, %v3332
    %v3335 = vmul.f32 %v3319, %v3333
    %s3336 = scalar_lea.vmem %s6, 128
    %v3337 = vld [vmem:[%s3336] sm:$0xff]
    %v3338 = vld [vmem:[%s3336 + $0x8] sm:$0xff]
    %v3339 = vld [vmem:[%s3336 + $0x10] sm:$0xff]
    %v3340 = vld [vmem:[%s3336 + $0x18] sm:$0xff]
    %v3341 = vld [vmem:[%s3336 + $0x20] sm:$0xff]
    %v3342 = vld [vmem:[%s3336 + $0x28] sm:$0xff]
    %v3343 = vld [vmem:[%s3336 + $0x30] sm:$0xff]
    %v3344 = vld [vmem:[%s3336 + $0x38] sm:$0xff]
    %v3345 = vld [vmem:[%s3336 + $0x40] sm:$0xff]
    %v3346 = vld [vmem:[%s3336 + $0x48] sm:$0xff]
    %v3347 = vld [vmem:[%s3336 + $0x50] sm:$0xff]
    %v3348 = vld [vmem:[%s3336 + $0x58] sm:$0xff]
    %v3349 = vld [vmem:[%s3336 + $0x60] sm:$0xff]
    %v3350 = vld [vmem:[%s3336 + $0x68] sm:$0xff]
    %v3351 = vld [vmem:[%s3336 + $0x70] sm:$0xff]
    %v3352 = vld [vmem:[%s3336 + $0x78] sm:$0xff]
    %v3353 = vld [vmem:[%s8 + $0xd] sm:$0x1]
    %v3354 = vlaneseq
    %v3355 = vshrl.u32 %v3354, 7
    %v3356 = vsub.s32 0, %v3355
    %v3357 = vrot.slane %v3353, %v3356
    %3358 = vmatprep.subr.mxu0 0.0
    %3359 = vmatpush1.msra.mxu0 %v3337
    %3360 = vmatprep.subr.mxu0 0.0
    %3361 = vmatpush1.msra.mxu0 %v3338
    %3362 = vmatprep.subr.mxu0 0.0
    %3363 = vmatpush1.msra.mxu0 %v3339
    %3364 = vmatprep.subr.mxu0 0.0
    %3365 = vmatpush1.msra.mxu0 %v3340
    %3366 = vmatprep.subr.mxu0 0.0
    %3367 = vmatpush1.msra.mxu0 %v3341
    %3368 = vmatprep.subr.mxu0 0.0
    %3369 = vmatpush1.msra.mxu0 %v3342
    %3370 = vmatprep.subr.mxu0 0.0
    %3371 = vmatpush1.msra.mxu0 %v3343
    %3372 = vmatprep.subr.mxu0 0.0
    %3373 = vmatpush1.msra.mxu0 %v3344
    %3374 = vmatprep.subr.mxu0 0.0
    %3375 = vmatpush1.msra.mxu0 %v3345
    %3376 = vmatprep.subr.mxu0 0.0
    %3377 = vmatpush1.msra.mxu0 %v3346
    %3378 = vmatprep.subr.mxu0 0.0
    %3379 = vmatpush1.msra.mxu0 %v3347
    %3380 = vmatprep.subr.mxu0 0.0
    %3381 = vmatpush1.msra.mxu0 %v3348
    %3382 = vmatprep.subr.mxu0 0.0
    %3383 = vmatpush1.msra.mxu0 %v3349
    %3384 = vmatprep.subr.mxu0 0.0
    %3385 = vmatpush1.msra.mxu0 %v3350
    %3386 = vmatprep.subr.mxu0 0.0
    %3387 = vmatpush1.msra.mxu0 %v3351
    %3388 = vmatprep.subr.mxu0 0.0
    %3389 = vmatpush1.msra.mxu0 %v3352
    %3390 = vmatprep.subr.mxu0 0.0
    %3391 = vmatpush1.msra.mxu0 0.0
    %3392 = vmatprep.subr.mxu0 0.0
    %3393 = vmatpush1.msra.mxu0 0.0
    %3394 = vmatprep.subr.mxu0 0.0
    %3395 = vmatpush1.msra.mxu0 0.0
    %3396 = vmatprep.subr.mxu0 0.0
    %3397 = vmatpush1.msra.mxu0 0.0
    %3398 = vmatprep.subr.mxu0 0.0
    %3399 = vmatpush1.msra.mxu0 0.0
    %3400 = vmatprep.subr.mxu0 0.0
    %3401 = vmatpush1.msra.mxu0 0.0
    %3402 = vmatprep.subr.mxu0 0.0
    %3403 = vmatpush1.msra.mxu0 0.0
    %3404 = vmatprep.subr.mxu0 0.0
    %3405 = vmatpush1.msra.mxu0 0.0
    %3406 = vmatprep.subr.mxu0 0.0
    %3407 = vmatpush1.msra.mxu0 0.0
    %3408 = vmatprep.subr.mxu0 0.0
    %3409 = vmatpush1.msra.mxu0 0.0
    %3410 = vmatprep.subr.mxu0 0.0
    %3411 = vmatpush1.msra.mxu0 0.0
    %3412 = vmatprep.subr.mxu0 0.0
    %3413 = vmatpush1.msra.mxu0 0.0
    %3414 = vmatprep.subr.mxu0 0.0
    %3415 = vmatpush1.msra.mxu0 0.0
    %3416 = vmatprep.subr.mxu0 0.0
    %3417 = vmatpush1.msra.mxu0 0.0
    %3418 = vmatprep.subr.mxu0 0.0
    %3419 = vmatpush1.msra.mxu0 0.0
    %3420 = vmatprep.subr.mxu0 0.0
    %3421 = vmatpush1.msra.mxu0 0.0
    %3422 = vmatprep.mubr.f32.mxu0 0.0
    %3423 = vmatmul.mubr.f32.gmra.mrb[0].mxu0 %v3334
    %v3424 = vpop.f32.mrb[0].mxu0
    %v3425 = vadd.f32 %v3357, %v3424
    %v3426 = vpop.f32.mrb[0].mxu0
    %3427 = vmatprep.mubr.f32.mxu0 0.0
    %3428 = vmatmul.mubr.f32.gmra.mrb[0].mxu0 %v3335
    %v3429 = vpop.f32.mrb[0].mxu0
    %v3430 = vadd.f32 %v3357, %v3429
    %v3431 = vpop.f32.mrb[0].mxu0
    %3432 = vdwg.mxu0
    %v3433 = vadd.f32 %v3425, %v3221
    %v3434 = vadd.f32 %v3430, %v3222
    %v3435 = vld [vmem:[%s8 + $0xe] sm:$0x1]
    %v3436 = vld [vmem:[%s8 + $0xf] sm:$0x1]
    %v3437 = vsel %vm92, %v3433, 0.0
    %3438 = vadd.xlane.f32.xlu0 %v3437
    %v3439 = vpop.xlane.xlu0 %3438
    %v3440 = vsel %vm92, %v3434, 0.0
    %3441 = vadd.xlane.f32.xlu0 %v3440
    %v3442 = vpop.xlane.xlu0 %3441
    %v3443 = vmul.f32 %v3439, %v99
    %v3444 = vmul.f32 %v3442, %v99
    %v3445 = vsub.f32 %v3433, %v3443
    %v3446 = vsub.f32 %v3434, %v3444
    %v3447 = vmul.f32 %v3445, %v3445
    %v3448 = vmul.f32 %v3446, %v3446
    %v3449 = vsel %vm92, %v3447, 0.0
    %3450 = vadd.xlane.f32.xlu0 %v3449
    %v3451 = vpop.xlane.xlu0 %3450
    %v3452 = vsel %vm92, %v3448, 0.0
    %3453 = vadd.xlane.f32.xlu0 %v3452
    %v3454 = vpop.xlane.xlu0 %3453
    %v3455 = vmul.f32 %v3451, %v99
    %v3456 = vmul.f32 %v3454, %v99
    %v3457 = vadd.f32 %v3455, 1e-12
    %v3458 = vadd.f32 %v3456, 1e-12
    %v3459 = vrsqrt.pop %v3457
    %v3460 = vrsqrt.pop %v3458
    %v3461 = vmul.f32 %v3445, %v3459
    %v3462 = vmul.f32 %v3446, %v3460
    %v3463 = vlaneseq
    %v3464 = vshrl.u32 %v3463, 7
    %v3465 = vsub.s32 0, %v3464
    %v3466 = vrot.slane %v3435, %v3465
    %v3467 = vmul.f32 %v3461, %v3466
    %v3468 = vmul.f32 %v3462, %v3466
    %v3469 = vlaneseq
    %v3470 = vshrl.u32 %v3469, 7
    %v3471 = vsub.s32 0, %v3470
    %v3472 = vrot.slane %v3436, %v3471
    %v3473 = vadd.f32 %v3467, %v3472
    %v3474 = vadd.f32 %v3468, %v3472
    %v3475 = vld [vmem:[%s8 + $0x10] sm:$0x1]
    %v3476 = vlaneseq
    %v3477 = vshrl.u32 %v3476, 7
    %v3478 = vsub.s32 0, %v3477
    %v3479 = vrot.slane %v3475, %v3478
    %v3481 = vsel %vm92, %v3473, 0
    %v3484 = vsel %vm92, %v3474, 0
    %3486 = vmatprep.subr.mxu0 0.0
    %3487 = vmatpush1.msra.mxu0 %v47
    %3488 = vmatprep.subr.mxu0 0.0
    %3489 = vmatpush1.msra.mxu0 %v48
    %3490 = vmatprep.subr.mxu0 0.0
    %3491 = vmatpush1.msra.mxu0 %v49
    %3492 = vmatprep.subr.mxu0 0.0
    %3493 = vmatpush1.msra.mxu0 %v50
    %3494 = vmatprep.subr.mxu0 0.0
    %3495 = vmatpush1.msra.mxu0 %v51
    %3496 = vmatprep.subr.mxu0 0.0
    %3497 = vmatpush1.msra.mxu0 %v52
    %3498 = vmatprep.subr.mxu0 0.0
    %3499 = vmatpush1.msra.mxu0 %v53
    %3500 = vmatprep.subr.mxu0 0.0
    %3501 = vmatpush1.msra.mxu0 %v54
    %3502 = vmatprep.subr.mxu0 0.0
    %3503 = vmatpush1.msra.mxu0 0.0
    %3504 = vmatprep.subr.mxu0 0.0
    %3505 = vmatpush1.msra.mxu0 0.0
    %3506 = vmatprep.subr.mxu0 0.0
    %3507 = vmatpush1.msra.mxu0 0.0
    %3508 = vmatprep.subr.mxu0 0.0
    %3509 = vmatpush1.msra.mxu0 0.0
    %3510 = vmatprep.subr.mxu0 0.0
    %3511 = vmatpush1.msra.mxu0 0.0
    %3512 = vmatprep.subr.mxu0 0.0
    %3513 = vmatpush1.msra.mxu0 0.0
    %3514 = vmatprep.subr.mxu0 0.0
    %3515 = vmatpush1.msra.mxu0 0.0
    %3516 = vmatprep.subr.mxu0 0.0
    %3517 = vmatpush1.msra.mxu0 0.0
    %3518 = vmatprep.subr.mxu0 0.0
    %3519 = vmatpush1.msra.mxu0 0.0
    %3520 = vmatprep.subr.mxu0 0.0
    %3521 = vmatpush1.msra.mxu0 0.0
    %3522 = vmatprep.subr.mxu0 0.0
    %3523 = vmatpush1.msra.mxu0 0.0
    %3524 = vmatprep.subr.mxu0 0.0
    %3525 = vmatpush1.msra.mxu0 0.0
    %3526 = vmatprep.subr.mxu0 0.0
    %3527 = vmatpush1.msra.mxu0 0.0
    %3528 = vmatprep.subr.mxu0 0.0
    %3529 = vmatpush1.msra.mxu0 0.0
    %3530 = vmatprep.subr.mxu0 0.0
    %3531 = vmatpush1.msra.mxu0 0.0
    %3532 = vmatprep.subr.mxu0 0.0
    %3533 = vmatpush1.msra.mxu0 0.0
    %3534 = vmatprep.subr.mxu0 0.0
    %3535 = vmatpush1.msra.mxu0 0.0
    %3536 = vmatprep.subr.mxu0 0.0
    %3537 = vmatpush1.msra.mxu0 0.0
    %3538 = vmatprep.subr.mxu0 0.0
    %3539 = vmatpush1.msra.mxu0 0.0
    %3540 = vmatprep.subr.mxu0 0.0
    %3541 = vmatpush1.msra.mxu0 0.0
    %3542 = vmatprep.subr.mxu0 0.0
    %3543 = vmatpush1.msra.mxu0 0.0
    %3544 = vmatprep.subr.mxu0 0.0
    %3545 = vmatpush1.msra.mxu0 0.0
    %3546 = vmatprep.subr.mxu0 0.0
    %3547 = vmatpush1.msra.mxu0 0.0
    %3548 = vmatprep.subr.mxu0 0.0
    %3549 = vmatpush1.msra.mxu0 0.0
    %3550 = vmatprep.mubr.f32.mxu0 0.0
    %3551 = vmatmul.mubr.f32.gmra.mrb[0].mxu0 %v3481
    %v3552 = vpop.f32.mrb[0].mxu0
    %v3553 = vadd.f32 %v3479, %v3552
    %v3554 = vpop.f32.mrb[0].mxu0
    %3555 = vmatprep.mubr.f32.mxu0 0.0
    %3556 = vmatmul.mubr.f32.gmra.mrb[0].mxu0 %v3484
    %v3557 = vpop.f32.mrb[0].mxu0
    %v3558 = vadd.f32 %v3479, %v3557
    %v3559 = vpop.f32.mrb[0].mxu0
    %3560 = vdwg.mxu0
    %v3561 = vmul.f32 %v3553, 0.5
    %v3562 = vmul.f32 %v3558, 0.5
    %v3563 = vmul.f32 %v3553, 0.044715
    %v3564 = vmul.f32 %v3558, 0.044715
    %v3565 = vmul.f32 %v3563, %v3553
    %v3566 = vmul.f32 %v3564, %v3558
    %v3567 = vmul.f32 %v3565, %v3553
    %v3568 = vmul.f32 %v3566, %v3558
    %v3569 = vadd.f32 %v3553, %v3567
    %v3570 = vadd.f32 %v3558, %v3568
    %v3571 = vmul.f32 %v3569, 0.7978846
    %v3572 = vmul.f32 %v3570, 0.7978846
    %v3573 = vtanh.pop %v3571
    %v3574 = vtanh.pop %v3572
    %v3575 = vadd.f32 %v3573, 1.0
    %v3576 = vadd.f32 %v3574, 1.0
    %v3577 = vmul.f32 %v3561, %v3575
    %v3578 = vmul.f32 %v3562, %v3576
    %v3579 = vld [vmem:[%s8 + $0x11] sm:$0x1]
    %v3580 = vld [vmem:[%s8 + $0x12] sm:$0x1]
    %v3581 = vsel %vm92, %v3577, 0.0
    %3582 = vadd.xlane.f32.xlu0 %v3581
    %v3583 = vpop.xlane.xlu0 %3582
    %v3584 = vsel %vm92, %v3578, 0.0
    %3585 = vadd.xlane.f32.xlu0 %v3584
    %v3586 = vpop.xlane.xlu0 %3585
    %v3587 = vmul.f32 %v3583, %v99
    %v3588 = vmul.f32 %v3586, %v99
    %v3589 = vsub.f32 %v3577, %v3587
    %v3590 = vsub.f32 %v3578, %v3588
    %v3591 = vmul.f32 %v3589, %v3589
    %v3592 = vmul.f32 %v3590, %v3590
    %v3593 = vsel %vm92, %v3591, 0.0
    %3594 = vadd.xlane.f32.xlu0 %v3593
    %v3595 = vpop.xlane.xlu0 %3594
    %v3596 = vsel %vm92, %v3592, 0.0
    %3597 = vadd.xlane.f32.xlu0 %v3596
    %v3598 = vpop.xlane.xlu0 %3597
    %v3599 = vmul.f32 %v3595, %v99
    %v3600 = vmul.f32 %v3598, %v99
    %v3601 = vadd.f32 %v3599, 1e-12
    %v3602 = vadd.f32 %v3600, 1e-12
    %v3603 = vrsqrt.pop %v3601
    %v3604 = vrsqrt.pop %v3602
    %v3605 = vmul.f32 %v3589, %v3603
    %v3606 = vmul.f32 %v3590, %v3604
    %v3607 = vlaneseq
    %v3608 = vshrl.u32 %v3607, 7
    %v3609 = vsub.s32 0, %v3608
    %v3610 = vrot.slane %v3579, %v3609
    %v3611 = vmul.f32 %v3605, %v3610
    %v3612 = vmul.f32 %v3606, %v3610
    %v3613 = vlaneseq
    %v3614 = vshrl.u32 %v3613, 7
    %v3615 = vsub.s32 0, %v3614
    %v3616 = vrot.slane %v3580, %v3615
    %v3617 = vadd.f32 %v3611, %v3616
    %v3618 = vadd.f32 %v3612, %v3616
    %v3619 = vld [vmem:[%s9 + $0x2] sm:$0x1]
    %v3620 = vlaneseq
    %v3621 = vshrl.u32 %v3620, 7
    %v3622 = vsub.s32 0, %v3621
    %v3623 = vrot.slane %v3619, %v3622
    %v3625 = vsel %vm92, %v3617, 0
    %v3628 = vsel %vm92, %v3618, 0
    %3630 = vmatprep.subr.mxu0 0.0
    %3631 = vmatpush1.msra.mxu0 %v56
    %3632 = vmatprep.subr.mxu0 0.0
    %3633 = vmatpush1.msra.mxu0 %v57
    %3634 = vmatprep.subr.mxu0 0.0
    %3635 = vmatpush1.msra.mxu0 %v58
    %3636 = vmatprep.subr.mxu0 0.0
    %3637 = vmatpush1.msra.mxu0 %v59
    %3638 = vmatprep.subr.mxu0 0.0
    %3639 = vmatpush1.msra.mxu0 %v60
    %3640 = vmatprep.subr.mxu0 0.0
    %3641 = vmatpush1.msra.mxu0 %v61
    %3642 = vmatprep.subr.mxu0 0.0
    %3643 = vmatpush1.msra.mxu0 %v62
    %3644 = vmatprep.subr.mxu0 0.0
    %3645 = vmatpush1.msra.mxu0 %v63
    %3646 = vmatprep.subr.mxu0 0.0
    %3647 = vmatpush1.msra.mxu0 0.0
    %3648 = vmatprep.subr.mxu0 0.0
    %3649 = vmatpush1.msra.mxu0 0.0
    %3650 = vmatprep.subr.mxu0 0.0
    %3651 = vmatpush1.msra.mxu0 0.0
    %3652 = vmatprep.subr.mxu0 0.0
    %3653 = vmatpush1.msra.mxu0 0.0
    %3654 = vmatprep.subr.mxu0 0.0
    %3655 = vmatpush1.msra.mxu0 0.0
    %3656 = vmatprep.subr.mxu0 0.0
    %3657 = vmatpush1.msra.mxu0 0.0
    %3658 = vmatprep.subr.mxu0 0.0
    %3659 = vmatpush1.msra.mxu0 0.0
    %3660 = vmatprep.subr.mxu0 0.0
    %3661 = vmatpush1.msra.mxu0 0.0
    %3662 = vmatprep.subr.mxu0 0.0
    %3663 = vmatpush1.msra.mxu0 0.0
    %3664 = vmatprep.subr.mxu0 0.0
    %3665 = vmatpush1.msra.mxu0 0.0
    %3666 = vmatprep.subr.mxu0 0.0
    %3667 = vmatpush1.msra.mxu0 0.0
    %3668 = vmatprep.subr.mxu0 0.0
    %3669 = vmatpush1.msra.mxu0 0.0
    %3670 = vmatprep.subr.mxu0 0.0
    %3671 = vmatpush1.msra.mxu0 0.0
    %3672 = vmatprep.subr.mxu0 0.0
    %3673 = vmatpush1.msra.mxu0 0.0
    %3674 = vmatprep.subr.mxu0 0.0
    %3675 = vmatpush1.msra.mxu0 0.0
    %3676 = vmatprep.subr.mxu0 0.0
    %3677 = vmatpush1.msra.mxu0 0.0
    %3678 = vmatprep.subr.mxu0 0.0
    %3679 = vmatpush1.msra.mxu0 0.0
    %3680 = vmatprep.subr.mxu0 0.0
    %3681 = vmatpush1.msra.mxu0 0.0
    %3682 = vmatprep.subr.mxu0 0.0
    %3683 = vmatpush1.msra.mxu0 0.0
    %3684 = vmatprep.subr.mxu0 0.0
    %3685 = vmatpush1.msra.mxu0 0.0
    %3686 = vmatprep.subr.mxu0 0.0
    %3687 = vmatpush1.msra.mxu0 0.0
    %3688 = vmatprep.subr.mxu0 0.0
    %3689 = vmatpush1.msra.mxu0 0.0
    %3690 = vmatprep.subr.mxu0 0.0
    %3691 = vmatpush1.msra.mxu0 0.0
    %3692 = vmatprep.subr.mxu0 0.0
    %3693 = vmatpush1.msra.mxu0 0.0
    %3694 = vmatprep.mubr.f32.mxu0 0.0
    %3695 = vmatmul.mubr.f32.gmra.mrb[0].mxu0 %v3625
    %v3696 = vpop.f32.mrb[0].mxu0
    %v3697 = vadd.f32 %v3623, %v3696
    %v3698 = vpop.f32.mrb[0].mxu0
    %3699 = vmatprep.mubr.f32.mxu0 0.0
    %3700 = vmatmul.mubr.f32.gmra.mrb[0].mxu0 %v3628
    %v3701 = vpop.f32.mrb[0].mxu0
    %v3702 = vadd.f32 %v3623, %v3701
    %v3703 = vpop.f32.mrb[0].mxu0
    %3704 = vdwg.mxu0
    %3705 = vmax.xlane.f32.xlu0 %v3697
    %v3706 = vpop.xlane.xlu0 %3705
    %3707 = vmax.xlane.f32.xlu0 %v3702
    %v3708 = vpop.xlane.xlu0 %3707
    %v3709 = vsub.f32 %v3697, %v3706
    %v3710 = vsub.f32 %v3702, %v3708
    %v3711 = vmul.f32 %v3709, 1.442695
    %v3712 = vpow.pop %v3711
    %v3713 = vmul.f32 %v3710, 1.442695
    %v3714 = vpow.pop %v3713
    %3715 = vadd.xlane.f32.xlu0 %v3712
    %v3716 = vpop.xlane.xlu0 %3715
    %3717 = vadd.xlane.f32.xlu0 %v3714
    %v3718 = vpop.xlane.xlu0 %3717
    %v3719 = vrcp.pop %v3716
    %v3720 = vmul.f32 %v3712, %v3719
    %v3721 = vrcp.pop %v3718
    %v3722 = vmul.f32 %v3714, %v3721
    %3723 = vmatprep.subr.mxu0 0.0
    %3724 = vmatpush1.msra.mxu0 %v65
    %3725 = vmatprep.subr.mxu0 0.0
    %3726 = vmatpush1.msra.mxu0 %v66
    %3727 = vmatprep.subr.mxu0 0.0
    %3728 = vmatpush1.msra.mxu0 %v67
    %3729 = vmatprep.subr.mxu0 0.0
    %3730 = vmatpush1.msra.mxu0 %v68
    %3731 = vmatprep.subr.mxu0 0.0
    %3732 = vmatpush1.msra.mxu0 %v69
    %3733 = vmatprep.subr.mxu0 0.0
    %3734 = vmatpush1.msra.mxu0 %v70
    %3735 = vmatprep.subr.mxu0 0.0
    %3736 = vmatpush1.msra.mxu0 %v71
    %3737 = vmatprep.subr.mxu0 0.0
    %3738 = vmatpush1.msra.mxu0 %v72
    %3739 = vmatprep.subr.mxu0 0.0
    %3740 = vmatpush1.msra.mxu0 %v73
    %3741 = vmatprep.subr.mxu0 0.0
    %3742 = vmatpush1.msra.mxu0 %v74
    %3743 = vmatprep.subr.mxu0 0.0
    %3744 = vmatpush1.msra.mxu0 %v75
    %3745 = vmatprep.subr.mxu0 0.0
    %3746 = vmatpush1.msra.mxu0 %v76
    %3747 = vmatprep.subr.mxu0 0.0
    %3748 = vmatpush1.msra.mxu0 %v77
    %3749 = vmatprep.subr.mxu0 0.0
    %3750 = vmatpush1.msra.mxu0 %v78
    %3751 = vmatprep.subr.mxu0 0.0
    %3752 = vmatpush1.msra.mxu0 %v79
    %3753 = vmatprep.subr.mxu0 0.0
    %3754 = vmatpush1.msra.mxu0 %v80
    %3755 = vmatprep.subr.mxu0 0.0
    %3756 = vmatpush1.msra.mxu0 0.0
    %3757 = vmatprep.subr.mxu0 0.0
    %3758 = vmatpush1.msra.mxu0 0.0
    %3759 = vmatprep.subr.mxu0 0.0
    %3760 = vmatpush1.msra.mxu0 0.0
    %3761 = vmatprep.subr.mxu0 0.0
    %3762 = vmatpush1.msra.mxu0 0.0
    %3763 = vmatprep.subr.mxu0 0.0
    %3764 = vmatpush1.msra.mxu0 0.0
    %3765 = vmatprep.subr.mxu0 0.0
    %3766 = vmatpush1.msra.mxu0 0.0
    %3767 = vmatprep.subr.mxu0 0.0
    %3768 = vmatpush1.msra.mxu0 0.0
    %3769 = vmatprep.subr.mxu0 0.0
    %3770 = vmatpush1.msra.mxu0 0.0
    %3771 = vmatprep.subr.mxu0 0.0
    %3772 = vmatpush1.msra.mxu0 0.0
    %3773 = vmatprep.subr.mxu0 0.0
    %3774 = vmatpush1.msra.mxu0 0.0
    %3775 = vmatprep.subr.mxu0 0.0
    %3776 = vmatpush1.msra.mxu0 0.0
    %3777 = vmatprep.subr.mxu0 0.0
    %3778 = vmatpush1.msra.mxu0 0.0
    %3779 = vmatprep.subr.mxu0 0.0
    %3780 = vmatpush1.msra.mxu0 0.0
    %3781 = vmatprep.subr.mxu0 0.0
    %3782 = vmatpush1.msra.mxu0 0.0
    %3783 = vmatprep.subr.mxu0 0.0
    %3784 = vmatpush1.msra.mxu0 0.0
    %3785 = vmatprep.subr.mxu0 0.0
    %3786 = vmatpush1.msra.mxu0 0.0
    %3787 = vmatprep.mubr.f32.mxu0 0.0
    %3788 = vmatmul.mubr.f32.gmra.mrb[0].mxu0 %v3720
    %v3789 = vpop.f32.mrb[0].mxu0
    %v3790 = vadd.f32 0.0, %v3789
    %v3791 = vpop.f32.mrb[0].mxu0
    %3792 = vmatprep.mubr.f32.mxu0 0.0
    %3793 = vmatmul.mubr.f32.gmra.mrb[0].mxu0 %v3722
    %v3794 = vpop.f32.mrb[0].mxu0
    %v3795 = vadd.f32 0.0, %v3794
    %v3796 = vpop.f32.mrb[0].mxu0
    %3797 = vdwg.mxu0
    %v3798 = vsub.f32 %v3790, %v45
    %v3799 = vsub.f32 %v3795, %v46
    %v3800 = vmul.f32 %v3798, %v3798
    %v3801 = vmul.f32 %v3799, %v3799
    %v3802 = vsel %vm92, %v3800, 0.0
    %v3803 = vsel %vm92, %v3801, 0.0
    %v3804 = vadd.f32 %v3802, %v3803
    %3805 = vadd.xlane.f32.xlu0 %v3804
    %v3806 = vpop.xlane.xlu0 %3805
    %v3807 = vrot.slane %v3806, 4
    %v3808 = vadd.f32 %v3806, %v3807
    %v3809 = vrot.slane %v3808, 2
    %v3810 = vadd.f32 %v3808, %v3809
    %v3811 = vrot.slane %v3810, 1
    %v3812 = vadd.f32 %v3810, %v3811
    %s3813 = vtos %v3812
    %v3814 = vstv %s3813
    %v3815 = vadd.f32 %v3814, 0.0
    %v3816 = vmul.f32 %v3790, 0.0031622776
    %v3817 = vmul.f32 %v3795, 0.0031622776
    %v3818 = vsub.f32 %v42, %v3816
    %v3819 = vsub.f32 %v43, %v3817
    %v3820 = vrcp.pop 0.999995
    %v3821 = vmul.f32 %v3818, %v3820
    %v3822 = vmul.f32 %v3819, %v3820
    %v3823 = vrcp.pop 0.0031622776
    %v3824 = vmul.f32 %v42, %v3823
    %v3825 = vmul.f32 %v43, %v3823
    %v3826 = vmul.f32 %v3821, -314.67242
    %v3827 = vmul.f32 %v3822, -314.67242
    %v3828 = vadd.f32 %v3824, %v3826
    %v3829 = vadd.f32 %v3825, %v3827
    %v3830 = vmul.f32 %v3828, 0.5411961
    %v3831 = vmul.f32 %v3829, 0.5411961
    %v3833 = vsel %vm92, %v3830, 0
    %v3836 = vsel %vm92, %v3831, 0
    %3838 = vmatprep.subr.mxu0 0.0
    %3839 = vmatpush1.msra.mxu0 %v47
    %3840 = vmatprep.subr.mxu0 0.0
    %3841 = vmatpush1.msra.mxu0 %v48
    %3842 = vmatprep.subr.mxu0 0.0
    %3843 = vmatpush1.msra.mxu0 %v49
    %3844 = vmatprep.subr.mxu0 0.0
    %3845 = vmatpush1.msra.mxu0 %v50
    %3846 = vmatprep.subr.mxu0 0.0
    %3847 = vmatpush1.msra.mxu0 %v51
    %3848 = vmatprep.subr.mxu0 0.0
    %3849 = vmatpush1.msra.mxu0 %v52
    %3850 = vmatprep.subr.mxu0 0.0
    %3851 = vmatpush1.msra.mxu0 %v53
    %3852 = vmatprep.subr.mxu0 0.0
    %3853 = vmatpush1.msra.mxu0 %v54
    %3854 = vmatprep.subr.mxu0 0.0
    %3855 = vmatpush1.msra.mxu0 0.0
    %3856 = vmatprep.subr.mxu0 0.0
    %3857 = vmatpush1.msra.mxu0 0.0
    %3858 = vmatprep.subr.mxu0 0.0
    %3859 = vmatpush1.msra.mxu0 0.0
    %3860 = vmatprep.subr.mxu0 0.0
    %3861 = vmatpush1.msra.mxu0 0.0
    %3862 = vmatprep.subr.mxu0 0.0
    %3863 = vmatpush1.msra.mxu0 0.0
    %3864 = vmatprep.subr.mxu0 0.0
    %3865 = vmatpush1.msra.mxu0 0.0
    %3866 = vmatprep.subr.mxu0 0.0
    %3867 = vmatpush1.msra.mxu0 0.0
    %3868 = vmatprep.subr.mxu0 0.0
    %3869 = vmatpush1.msra.mxu0 0.0
    %3870 = vmatprep.subr.mxu0 0.0
    %3871 = vmatpush1.msra.mxu0 0.0
    %3872 = vmatprep.subr.mxu0 0.0
    %3873 = vmatpush1.msra.mxu0 0.0
    %3874 = vmatprep.subr.mxu0 0.0
    %3875 = vmatpush1.msra.mxu0 0.0
    %3876 = vmatprep.subr.mxu0 0.0
    %3877 = vmatpush1.msra.mxu0 0.0
    %3878 = vmatprep.subr.mxu0 0.0
    %3879 = vmatpush1.msra.mxu0 0.0
    %3880 = vmatprep.subr.mxu0 0.0
    %3881 = vmatpush1.msra.mxu0 0.0
    %3882 = vmatprep.subr.mxu0 0.0
    %3883 = vmatpush1.msra.mxu0 0.0
    %3884 = vmatprep.subr.mxu0 0.0
    %3885 = vmatpush1.msra.mxu0 0.0
    %3886 = vmatprep.subr.mxu0 0.0
    %3887 = vmatpush1.msra.mxu0 0.0
    %3888 = vmatprep.subr.mxu0 0.0
    %3889 = vmatpush1.msra.mxu0 0.0
    %3890 = vmatprep.subr.mxu0 0.0
    %3891 = vmatpush1.msra.mxu0 0.0
    %3892 = vmatprep.subr.mxu0 0.0
    %3893 = vmatpush1.msra.mxu0 0.0
    %3894 = vmatprep.subr.mxu0 0.0
    %3895 = vmatpush1.msra.mxu0 0.0
    %3896 = vmatprep.subr.mxu0 0.0
    %3897 = vmatpush1.msra.mxu0 0.0
    %3898 = vmatprep.subr.mxu0 0.0
    %3899 = vmatpush1.msra.mxu0 0.0
    %3900 = vmatprep.subr.mxu0 0.0
    %3901 = vmatpush1.msra.mxu0 0.0
    %3902 = vmatprep.mubr.f32.mxu0 0.0
    %3903 = vmatmul.mubr.f32.gmra.mrb[0].mxu0 %v3833
    %v3904 = vpop.f32.mrb[0].mxu0
    %v3905 = vadd.f32 %v3479, %v3904
    %v3906 = vpop.f32.mrb[0].mxu0
    %3907 = vmatprep.mubr.f32.mxu0 0.0
    %3908 = vmatmul.mubr.f32.gmra.mrb[0].mxu0 %v3836
    %v3909 = vpop.f32.mrb[0].mxu0
    %v3910 = vadd.f32 %v3479, %v3909
    %v3911 = vpop.f32.mrb[0].mxu0
    %3912 = vdwg.mxu0
    %v3913 = vmul.f32 %v3905, 0.5
    %v3914 = vmul.f32 %v3910, 0.5
    %v3915 = vmul.f32 %v3905, 0.044715
    %v3916 = vmul.f32 %v3910, 0.044715
    %v3917 = vmul.f32 %v3915, %v3905
    %v3918 = vmul.f32 %v3916, %v3910
    %v3919 = vmul.f32 %v3917, %v3905
    %v3920 = vmul.f32 %v3918, %v3910
    %v3921 = vadd.f32 %v3905, %v3919
    %v3922 = vadd.f32 %v3910, %v3920
    %v3923 = vmul.f32 %v3921, 0.7978846
    %v3924 = vmul.f32 %v3922, 0.7978846
    %v3925 = vtanh.pop %v3923
    %v3926 = vtanh.pop %v3924
    %v3927 = vadd.f32 %v3925, 1.0
    %v3928 = vadd.f32 %v3926, 1.0
    %v3929 = vmul.f32 %v3913, %v3927
    %v3930 = vmul.f32 %v3914, %v3928
    %v3931 = vsel %vm92, %v3929, 0.0
    %3932 = vadd.xlane.f32.xlu0 %v3931
    %v3933 = vpop.xlane.xlu0 %3932
    %v3934 = vsel %vm92, %v3930, 0.0
    %3935 = vadd.xlane.f32.xlu0 %v3934
    %v3936 = vpop.xlane.xlu0 %3935
    %v3937 = vmul.f32 %v3933, %v99
    %v3938 = vmul.f32 %v3936, %v99
    %v3939 = vsub.f32 %v3929, %v3937
    %v3940 = vsub.f32 %v3930, %v3938
    %v3941 = vmul.f32 %v3939, %v3939
    %v3942 = vmul.f32 %v3940, %v3940
    %v3943 = vsel %vm92, %v3941, 0.0
    %3944 = vadd.xlane.f32.xlu0 %v3943
    %v3945 = vpop.xlane.xlu0 %3944
    %v3946 = vsel %vm92, %v3942, 0.0
    %3947 = vadd.xlane.f32.xlu0 %v3946
    %v3948 = vpop.xlane.xlu0 %3947
    %v3949 = vmul.f32 %v3945, %v99
    %v3950 = vmul.f32 %v3948, %v99
    %v3951 = vadd.f32 %v3949, 1e-12
    %v3952 = vadd.f32 %v3950, 1e-12
    %v3953 = vrsqrt.pop %v3951
    %v3954 = vrsqrt.pop %v3952
    %v3955 = vmul.f32 %v3939, %v3953
    %v3956 = vmul.f32 %v3940, %v3954
    %v3957 = vmul.f32 %v3955, %v3610
    %v3958 = vmul.f32 %v3956, %v3610
    %v3959 = vadd.f32 %v3957, %v3616
    %v3960 = vadd.f32 %v3958, %v3616
    %v3962 = vsel %vm92, %v3959, 0
    %v3965 = vsel %vm92, %v3960, 0
    %3967 = vmatprep.subr.mxu0 0.0
    %3968 = vmatpush1.msra.mxu0 %v56
    %3969 = vmatprep.subr.mxu0 0.0
    %3970 = vmatpush1.msra.mxu0 %v57
    %3971 = vmatprep.subr.mxu0 0.0
    %3972 = vmatpush1.msra.mxu0 %v58
    %3973 = vmatprep.subr.mxu0 0.0
    %3974 = vmatpush1.msra.mxu0 %v59
    %3975 = vmatprep.subr.mxu0 0.0
    %3976 = vmatpush1.msra.mxu0 %v60
    %3977 = vmatprep.subr.mxu0 0.0
    %3978 = vmatpush1.msra.mxu0 %v61
    %3979 = vmatprep.subr.mxu0 0.0
    %3980 = vmatpush1.msra.mxu0 %v62
    %3981 = vmatprep.subr.mxu0 0.0
    %3982 = vmatpush1.msra.mxu0 %v63
    %3983 = vmatprep.subr.mxu0 0.0
    %3984 = vmatpush1.msra.mxu0 0.0
    %3985 = vmatprep.subr.mxu0 0.0
    %3986 = vmatpush1.msra.mxu0 0.0
    %3987 = vmatprep.subr.mxu0 0.0
    %3988 = vmatpush1.msra.mxu0 0.0
    %3989 = vmatprep.subr.mxu0 0.0
    %3990 = vmatpush1.msra.mxu0 0.0
    %3991 = vmatprep.subr.mxu0 0.0
    %3992 = vmatpush1.msra.mxu0 0.0
    %3993 = vmatprep.subr.mxu0 0.0
    %3994 = vmatpush1.msra.mxu0 0.0
    %3995 = vmatprep.subr.mxu0 0.0
    %3996 = vmatpush1.msra.mxu0 0.0
    %3997 = vmatprep.subr.mxu0 0.0
    %3998 = vmatpush1.msra.mxu0 0.0
    %3999 = vmatprep.subr.mxu0 0.0
    %4000 = vmatpush1.msra.mxu0 0.0
    %4001 = vmatprep.subr.mxu0 0.0
    %4002 = vmatpush1.msra.mxu0 0.0
    %4003 = vmatprep.subr.mxu0 0.0
    %4004 = vmatpush1.msra.mxu0 0.0
    %4005 = vmatprep.subr.mxu0 0.0
    %4006 = vmatpush1.msra.mxu0 0.0
    %4007 = vmatprep.subr.mxu0 0.0
    %4008 = vmatpush1.msra.mxu0 0.0
    %4009 = vmatprep.subr.mxu0 0.0
    %4010 = vmatpush1.msra.mxu0 0.0
    %4011 = vmatprep.subr.mxu0 0.0
    %4012 = vmatpush1.msra.mxu0 0.0
    %4013 = vmatprep.subr.mxu0 0.0
    %4014 = vmatpush1.msra.mxu0 0.0
    %4015 = vmatprep.subr.mxu0 0.0
    %4016 = vmatpush1.msra.mxu0 0.0
    %4017 = vmatprep.subr.mxu0 0.0
    %4018 = vmatpush1.msra.mxu0 0.0
    %4019 = vmatprep.subr.mxu0 0.0
    %4020 = vmatpush1.msra.mxu0 0.0
    %4021 = vmatprep.subr.mxu0 0.0
    %4022 = vmatpush1.msra.mxu0 0.0
    %4023 = vmatprep.subr.mxu0 0.0
    %4024 = vmatpush1.msra.mxu0 0.0
    %4025 = vmatprep.subr.mxu0 0.0
    %4026 = vmatpush1.msra.mxu0 0.0
    %4027 = vmatprep.subr.mxu0 0.0
    %4028 = vmatpush1.msra.mxu0 0.0
    %4029 = vmatprep.subr.mxu0 0.0
    %4030 = vmatpush1.msra.mxu0 0.0
    %4031 = vmatprep.mubr.f32.mxu0 0.0
    %4032 = vmatmul.mubr.f32.gmra.mrb[0].mxu0 %v3962
    %v4033 = vpop.f32.mrb[0].mxu0
    %v4034 = vadd.f32 %v3623, %v4033
    %v4035 = vpop.f32.mrb[0].mxu0
    %4036 = vmatprep.mubr.f32.mxu0 0.0
    %4037 = vmatmul.mubr.f32.gmra.mrb[0].mxu0 %v3965
    %v4038 = vpop.f32.mrb[0].mxu0
    %v4039 = vadd.f32 %v3623, %v4038
    %v4040 = vpop.f32.mrb[0].mxu0
    %4041 = vdwg.mxu0
    %4042 = vst [vmem:[#allocation2] sm:$0xff] %v4034
    %4043 = vst [vmem:[#allocation2 + $0x8] sm:$0xff] %v4039
    %v4044 = vsub.f32 %v3830, %v45
    %v4045 = vsub.f32 %v3831, %v46
    %v4046 = vmul.f32 %v4044, %v4044
    %v4047 = vmul.f32 %v4045, %v4045
    %v4048 = vsel %vm92, %v4046, 0.0
    %v4049 = vsel %vm92, %v4047, 0.0
    %v4050 = vadd.f32 %v4048, %v4049
    %4051 = vadd.xlane.f32.xlu0 %v4050
    %v4052 = vpop.xlane.xlu0 %4051
    %v4053 = vrot.slane %v4052, 4
    %v4054 = vadd.f32 %v4052, %v4053
    %v4055 = vrot.slane %v4054, 2
    %v4056 = vadd.f32 %v4054, %v4055
    %v4057 = vrot.slane %v4056, 1
    %v4058 = vadd.f32 %v4056, %v4057
    %s4059 = vtos %v4058
    %v4060 = vstv %s4059
    %v4061 = vld [vmem:[%s1] sm:$0xff]
    %v4062 = vld [vmem:[%s1 + $0x8] sm:$0xff]
    %4063 = vmax.xlane.f32.xlu0 %v4034
    %v4064 = vpop.xlane.xlu0 %4063
    %4065 = vmax.xlane.f32.xlu0 %v4039
    %v4066 = vpop.xlane.xlu0 %4065
    %v4067 = vsub.f32 %v4034, %v4064
    %v4068 = vsub.f32 %v4039, %v4066
    %v4069 = vmul.f32 %v4067, 1.442695
    %v4070 = vpow.pop %v4069
    %v4071 = vmul.f32 %v4068, 1.442695
    %v4072 = vpow.pop %v4071
    %4073 = vadd.xlane.f32.xlu0 %v4070
    %v4074 = vpop.xlane.xlu0 %4073
    %4075 = vadd.xlane.f32.xlu0 %v4072
    %v4076 = vpop.xlane.xlu0 %4075
    %v4077 = vlog2.pop %v4074
    %v4078 = vmul.f32 %v4077, 0.6931472
    %v4079 = vlog2.pop %v4076
    %v4080 = vmul.f32 %v4079, 0.6931472
    %v4081 = vadd.f32 %v4078, %v4064
    %v4082 = vadd.f32 %v4080, %v4066
    %v4083 = vlaneseq
    %v4084 = vand.u32 %v4083, 127
    %4085 = vset.pattern.permute.xlu0 0
    %4086 = vperm.xlu0 %4085, %v4061
    %v4087 = vpop.permute.xlu0 %4086
    %4088 = vset.pattern.permute.xlu0 0
    %4089 = vperm.xlu0 %4088, %v4062
    %v4090 = vpop.permute.xlu0 %4089
    %vm4091 = vcmp.eq.s32.totalorder %v4084, %v4087
    %vm4092 = vcmp.eq.s32.totalorder %v4084, %v4090
    %v4093 = vsel %vm4091, 1, 0
    %v4094 = vsel %vm4092, 1, 0
    %v4095 = vcvt.s32.f32 %v4093
    %v4096 = vcvt.s32.f32 %v4094
    %v4097 = vmul.f32 %v4034, %v4095
    %v4098 = vmul.f32 %v4039, %v4096
    %4099 = vadd.xlane.f32.xlu0 %v4097
    %v4100 = vpop.xlane.xlu0 %4099
    %4101 = vadd.xlane.f32.xlu0 %v4098
    %v4102 = vpop.xlane.xlu0 %4101
    %v4103 = vsub.f32 %v4081, %v4100
    %v4104 = vsub.f32 %v4082, %v4102
    %vm4105 = vcmp.ne.s32.totalorder %v4061, 0
    %vm4106 = vcmp.ne.s32.totalorder %v4062, 0
    %v4107 = vsel %vm4105, 1, 0
    %v4108 = vsel %vm4106, 1, 0
    %v4109 = vcvt.s32.f32 %v4107
    %v4110 = vcvt.s32.f32 %v4108
    %v4111 = vmul.f32 %v4103, %v4109
    %v4112 = vmul.f32 %v4104, %v4110
    %vm4113 = vcmask 7168
    %v4114 = vsel %vm4113, %v4111, 0.0
    %v4115 = vsel %vm4113, %v4112, 0.0
    %v4116 = vadd.f32 %v4114, %v4115
    %4117 = vadd.xlane.f32.xlu0 %v4116
    %v4118 = vpop.xlane.xlu0 %4117
    %v4119 = vrot.slane %v4118, 4
    %v4120 = vadd.f32 %v4118, %v4119
    %v4121 = vrot.slane %v4120, 2
    %v4122 = vadd.f32 %v4120, %v4121
    %v4123 = vrot.slane %v4122, 1
    %v4124 = vadd.f32 %v4122, %v4123
    %s4125 = vtos %v4124
    %v4126 = vstv %s4125
    %v4127 = vsel %vm4113, %v4109, 0.0
    %v4128 = vsel %vm4113, %v4110, 0.0
    %v4129 = vadd.f32 %v4127, %v4128
    %4130 = vadd.xlane.f32.xlu0 %v4129
    %v4131 = vpop.xlane.xlu0 %4130
    %v4132 = vrot.slane %v4131, 4
    %v4133 = vadd.f32 %v4131, %v4132
    %v4134 = vrot.slane %v4133, 2
    %v4135 = vadd.f32 %v4133, %v4134
    %v4136 = vrot.slane %v4135, 1
    %v4137 = vadd.f32 %v4135, %v4136
    %s4138 = vtos %v4137
    %v4139 = vstv %s4138
    %v4140 = vrcp.pop 1024.0
    %v4141 = vmul.f32 %v3815, %v4140
    %v4142 = vmul.f32 %v4060, %v4140
    %v4143 = vadd.f32 %v4141, %v4142
    %v4144 = vmax.f32 %v4139, 1.0
    %v4145 = vrcp.pop %v4144
    %v4146 = vmul.f32 %v4126, %v4145
    %v4147 = vadd.f32 %v4143, %v4146
    %vm4148 = vcmask 0
    %4149 = vst.msk [vmem:[#allocation4] sm:$0x1] %vm4148, %v4147
    // Predicated region
    $region42: #{sdpe_forward.1} parent=1 // pred_check
      _
    $region43: #{sdpe_forward.1} parent=1 // pred_check_branch
      %4151 = sbr.rel (0) target = $region45
    $region44: #{sdpe_forward.1} parent=1 // pred_region
      %s4153 = ssub.s32 256, 256
      %4154 = vsyncadd [#allocation3], %s4153
      %s4155 = sshll.u32 [#allocation2], 4
      %s4156 = int_to_ptr.vmem [resolvable:$true] %s4155
      %4161 = dma.vmem_to_hbm [thread:$0]  %s4156, 256, %s10, [#allocation3], 128, 128, 8
    $region45: #{sdpe_forward.1} parent=1 // pred_fallthru
      _
    // Predicated region
    $region46: #{sdpe_forward.1} parent=1 // pred_check
      _
    $region47: #{sdpe_forward.1} parent=1 // pred_check_branch
      %4163 = sbr.rel (0) target = $region49
    $region48: #{sdpe_forward.1} parent=1 // pred_region
      %s4165 = ssub.s32 16, 16
      %4166 = vsyncadd [#allocation5], %s4165
      %s4168 = sshll.u32 [#allocation4], 4
      %s4169 = int_to_ptr.vmem [resolvable:$true] %s4168
      %4171 = dma.vmem_to_hbm [thread:$0]  %s4169, 16, %s11, [#allocation5]
    $region49: #{sdpe_forward.1} parent=1 // pred_fallthru
      _
    // Predicated region
    $region50: #{sdpe_forward.1} parent=1 // pred_check
      _
    $region51: #{sdpe_forward.1} parent=1 // pred_check_branch
      %4173 = sbr.rel (0) target = $region53
    $region52: #{sdpe_forward.1} parent=1 // pred_region
      %4174 = dma.done [#allocation3], 256
    $region53: #{sdpe_forward.1} parent=1 // pred_fallthru
      _
    // Predicated region
    $region54: #{sdpe_forward.1} parent=1 // pred_check
      _
    $region55: #{sdpe_forward.1} parent=1 // pred_check_branch
      %4176 = sbr.rel (0) target = $region57
    $region56: #{sdpe_forward.1} parent=1 // pred_region
      %4177 = dma.done [#allocation5], 16
    $region57: #{sdpe_forward.1} parent=1 // pred_fallthru
      _
    %4178 = vsyncpa [#allocation3], 1
    %4179 = vsyncpa [#allocation5], 1

</llo_original>
